<compile_context>
chip_gen: v7x
topology: tpu7x:2x2x1
jax: 0.10.0
libtpu: 0.0.40
codegen_flags: <defaults>
</compile_context>

<pallas_src>
import functools

import jax
import jax.numpy as jnp
import numpy as np
from jax.experimental import pallas as pl
from jax.experimental.pallas import tpu as pltpu


# ----------------------------------------------------------------------------
# Kernel 1: fused conv (9 shifted matmuls) + bias + ReLU + per-block stats
# ----------------------------------------------------------------------------
def _conv_relu_stats_kernel(kh, kw, wp, x0_ref, x1_ref, m_ref, w_ref, b_ref,
                            y_ref, s_ref):
    """x0/x1: (TM, Cin) bf16 current and next row tile (halo).
    m_ref: (TM, 1) f32 {0,1} validity mask for the batch statistics.
    w_ref: (KH*KW, Cin, Cout) bf16   b_ref: (1, Cout) f32
    y_ref: (TM, Cout) bf16 activation   s_ref: (1, 2, Cout) f32 [sum, sumsq].
    """
    tm, c_out = y_ref.shape

    # f32 copy of the 2*TM input rows: row slices at arbitrary (non sublane
    # aligned) offsets are cheapest / most robust on an unpacked layout.
    xcat = jnp.concatenate([x0_ref[...], x1_ref[...]], axis=0).astype(jnp.float32)

    acc = jnp.zeros((tm, c_out), jnp.float32)
    for dh in range(kh):
        for dw in range(kw):
            off = dh * wp + dw                                   # flat tap shift
            slab = xcat[off:off + tm, :].astype(jnp.bfloat16)    # (TM, Cin)
            acc = acc + jnp.dot(slab, w_ref[dh * kw + dw],
                                preferred_element_type=jnp.float32)

    y = jnp.maximum(acc + b_ref[...], 0.0)
    y_ref[...] = y.astype(y_ref.dtype)

    # Channel stats over valid rows, taken from the values actually stored
    # (bf16-rounded) so kernel 2's normalization is self-consistent.
    ym = y_ref[...].astype(jnp.float32) * m_ref[...]
    s_ref[0:1, 0:1, :] = jnp.sum(ym, axis=0, keepdims=True)[None]
    s_ref[0:1, 1:2, :] = jnp.sum(ym * ym, axis=0, keepdims=True)[None]


# ----------------------------------------------------------------------------
# Kernel 2: BatchNorm apply — pure load-FMA-store on a lane-dense view
# ----------------------------------------------------------------------------
def _bn_apply_kernel(y_ref, scale_ref, shift_ref, o_ref):
    o_ref[...] = y_ref[...].astype(jnp.float32) * scale_ref[...] + shift_ref[...]


# ----------------------------------------------------------------------------
# Full forward: Conv2d -> ReLU -> BatchNorm2d   (NCHW in, NCHW out)
# ----------------------------------------------------------------------------
def cnn_relu_batchnorm_pallas(x, w, b, gamma, beta, *, stride=(1, 1),
                              padding=1, eps=1e-3, tm=512):
    """x: (B, C_in, H, W); w: (C_out, C_in, KH, KW); b/gamma/beta: (C_out,)."""
    B, C_in, H, W = x.shape
    C_out, C_in_w, KH, KW = w.shape
    assert C_in_w == C_in
    sh, sw = stride
    Hp, Wp = H + 2 * padding, W + 2 * padding
    Ho = (H + 2 * padding - KH) // sh + 1
    Wo = (W + 2 * padding - KW) // sw + 1

    assert tm % 8 == 0
    halo = (KH - 1) * Wp + (KW - 1)
    assert halo <= tm, f"row tile tm={tm} must cover the conv halo ({halo} rows)"

    # Pad C_in up to a sublane multiple (zero channels contribute nothing);
    # avoids degenerate K=1 contractions and keeps the input slab tiny.
    c_in_p = ((C_in + 7) // 8) * 8

    # ---- host-side prep (only the small original input + per-channel vectors) --
    x_nhwc = jnp.transpose(x, (0, 2, 3, 1))
    xp = jnp.pad(x_nhwc, ((0, 0), (padding, padding), (padding, padding), (0, 0)))
    R = B * Hp * Wp                                  # padded-grid rows
    r_pad = pl.cdiv(R, tm) * tm
    num_blocks = r_pad // tm
    xf = jnp.pad(xp.reshape(R, C_in),                # +tm rows => halo tile exists
                 ((0, r_pad + tm - R), (0, c_in_p - C_in))).astype(jnp.bfloat16)

    # {0,1} mask of padded-grid rows that are kept (strided) output positions.
    hv = jnp.zeros((Hp,), jnp.float32).at[0:(Ho - 1) * sh + 1:sh].set(1.0)
    wv = jnp.zeros((Wp,), jnp.float32).at[0:(Wo - 1) * sw + 1:sw].set(1.0)
    mask = jnp.broadcast_to(hv[:, None] * wv[None, :], (B, Hp, Wp)).reshape(R, 1)
    mask = jnp.pad(mask, ((0, r_pad - R), (0, 0)))

    # Per-tap weight slabs (KH*KW, C_in_p, C_out), bf16.
    w_k = jnp.transpose(w, (2, 3, 1, 0)).reshape(KH * KW, C_in, C_out)
    w_k = jnp.pad(w_k, ((0, 0), (0, c_in_p - C_in), (0, 0))).astype(jnp.bfloat16)

    cparams = pltpu.CompilerParams(dimension_semantics=("parallel",),
                                   vmem_limit_bytes=32 * 1024 * 1024)

    # ---- kernel 1: conv + bias + ReLU + per-block channel partial stats --------
    y_flat, partial = pl.pallas_call(
        functools.partial(_conv_relu_stats_kernel, KH, KW, Wp),
        out_shape=(
            jax.ShapeDtypeStruct((r_pad, C_out), jnp.bfloat16),
            jax.ShapeDtypeStruct((num_blocks, 2, C_out), jnp.float32),
        ),
        grid=(num_blocks,),
        in_specs=[
            pl.BlockSpec((tm, c_in_p), lambda i: (i, 0)),        # current tile
            pl.BlockSpec((tm, c_in_p), lambda i: (i + 1, 0)),    # next tile (halo)
            pl.BlockSpec((tm, 1), lambda i: (i, 0)),             # validity mask
            pl.BlockSpec((KH * KW, c_in_p, C_out), lambda i: (0, 0, 0)),
            pl.BlockSpec((1, C_out), lambda i: (0, 0)),
        ],
        out_specs=(
            pl.BlockSpec((tm, C_out), lambda i: (i, 0)),
            pl.BlockSpec((1, 2, C_out), lambda i: (i, 0, 0)),
        ),
        compiler_params=cparams,
    )(xf, xf, mask, w_k, b.reshape(1, C_out).astype(jnp.float32))

    # ---- tiny reductions + BN scale/shift precompute (O(C_out), in XLA) --------
    stats = jnp.sum(partial, axis=0)                             # (2, C_out)
    count = float(B * Ho * Wo)
    mean = stats[0] / count
    var = jnp.maximum(stats[1] / count - mean * mean, 0.0)       # biased (ddof=0)
    scale = gamma * jax.lax.rsqrt(var + eps)
    shift = beta - mean * scale

    # ---- kernel 2: BN apply on a lane-dense 128-wide view when possible --------
    fold = 1
    if (C_out < 128 and 128 % C_out == 0 and tm % (128 // C_out) == 0
            and tm // (128 // C_out) >= 8):
        fold = 128 // C_out
    width = C_out * fold
    tm2 = tm // fold
    n2 = r_pad // fold
    y2 = y_flat.reshape(n2, width)                   # row-major reinterpretation
    scale2 = jnp.tile(scale, fold).reshape(1, width).astype(jnp.float32)
    shift2 = jnp.tile(shift, fold).reshape(1, width).astype(jnp.float32)

    y_norm = pl.pallas_call(
        _bn_apply_kernel,
        out_shape=jax.ShapeDtypeStruct((n2, width), jnp.float32),
        grid=(n2 // tm2,),
        in_specs=[
            pl.BlockSpec((tm2, width), lambda i: (i, 0)),
            pl.BlockSpec((1, width), lambda i: (0, 0)),
            pl.BlockSpec((1, width), lambda i: (0, 0)),
        ],
        out_specs=pl.BlockSpec((tm2, width), lambda i: (i, 0)),
        compiler_params=cparams,
    )(y2, scale2, shift2)

    # ---- strip padded-grid rows, subsample stride, back to NCHW ----------------
    grid_out = y_norm.reshape(r_pad, C_out)[:R].reshape(B, Hp, Wp, C_out)
    out = grid_out[:, 0:(Ho - 1) * sh + 1:sh, 0:(Wo - 1) * sw + 1:sw, :]
    return jnp.transpose(out, (0, 3, 1, 2))


# ----------------------------------------------------------------------------
# Pure-JAX f32 reference (for correctness check)
# ----------------------------------------------------------------------------
def cnn_relu_batchnorm_ref(x, w, b, gamma, beta, *, stride=(1, 1),
                           padding=1, eps=1e-3):
    y = jax.lax.conv_general_dilated(
        x, w, window_strides=stride,
        padding=((padding, padding), (padding, padding)),
        dimension_numbers=("NCHW", "OIHW", "NCHW"))
    y = jnp.maximum(y + b[None, :, None, None], 0.0)
    mean = jnp.mean(y, axis=(0, 2, 3))
    var = jnp.var(y, axis=(0, 2, 3))                 # biased, like PyTorch BN
    inv = jax.lax.rsqrt(var + eps)
    return ((y - mean[None, :, None, None]) * inv[None, :, None, None]
            * gamma[None, :, None, None] + beta[None, :, None, None])


# ----------------------------------------------------------------------------
if __name__ == "__main__":
    key = jax.random.PRNGKey(0)

    def run_case(k, B, C_in, C_out, H, W, stride):
        k1, k2, k3, k4, k5 = jax.random.split(k, 5)
        x = jax.random.normal(k1, (B, C_in, H, W), jnp.float32)
        bound = 1.0 / np.sqrt(C_in * 3 * 3)
        w = jax.random.uniform(k2, (C_out, C_in, 3, 3), jnp.float32, -bound, bound)
        b = jax.random.uniform(k3, (C_out,), jnp.float32, -bound, bound)
        gamma = 1.0 + 0.1 * jax.random.normal(k4, (C_out,), jnp.float32)
        beta = 0.1 * jax.random.normal(k5, (C_out,), jnp.float32)

        out = jax.block_until_ready(
            cnn_relu_batchnorm_pallas(x, w, b, gamma, beta, stride=stride))
        ref = jax.block_until_ready(
            cnn_relu_batchnorm_ref(x, w, b, gamma, beta, stride=stride))
        # bf16 input + bf16 intermediate activation => relaxed tolerance vs f32 ref.
        np.testing.assert_allclose(np.asarray(out), np.asarray(ref),
                                   rtol=2e-2, atol=8e-2)
        return out

    k_a, k_b = jax.random.split(key)

    # Module defaults: in_channels=1, out_channels=64, kernel=3, stride=(1,1), pad=1.
    out1 = run_case(k_a, B=2, C_in=1, C_out=64, H=16, W=16, stride=(1, 1))
    assert out1.shape == (2, 64, 16, 16), out1.shape

    # Extra coverage: more input channels + stride 2.
    out2 = run_case(k_b, B=2, C_in=4, C_out=32, H=16, W=16, stride=(2, 2))
    assert out2.shape == (2, 32, 8, 8), out2.shape

    print("KERNEL_OK")
</pallas_src>

<mosaic_0001>
module attributes {stable_mosaic.version = 11 : i64} {
  func.func @_conv_relu_stats_kernel(%arg0: i32, %arg1: memref<512x8xbf16, #tpu.memory_space<vmem>>, %arg2: memref<512x8xbf16, #tpu.memory_space<vmem>>, %arg3: memref<512x1xf32, #tpu.memory_space<vmem>>, %arg4: memref<9x8x64xbf16, #tpu.memory_space<vmem>>, %arg5: memref<1x64xf32, #tpu.memory_space<vmem>>, %arg6: memref<512x64xbf16, #tpu.memory_space<vmem>>, %arg7: memref<1x2x64xf32, #tpu.memory_space<vmem>>) attributes {dimension_semantics = [#tpu.dimension_semantics<parallel>], iteration_bounds = array<i64: 2>, scalar_prefetch = 0 : i64, scratch_operands = 0 : i64, tpu.core_type = #tpu.core_type<tc>, window_params = [{transform_indices = @transform_0, window_bounds = array<i64: 512, 8>}, {transform_indices = @transform_1, window_bounds = array<i64: 512, 8>}, {transform_indices = @transform_2, window_bounds = array<i64: 512, 1>}, {pipeline_mode = #tpu.pipeline_mode<synchronous>, transform_indices = @transform_3, window_bounds = array<i64: 9, 8, 64>}, {pipeline_mode = #tpu.pipeline_mode<synchronous>, transform_indices = @transform_4, window_bounds = array<i64: 1, 64>}, {transform_indices = @transform_5, window_bounds = array<i64: 512, 64>}, {transform_indices = @transform_6, window_bounds = array<i64: 1, 2, 64>}]} {
    %c0 = arith.constant 0 : index
    %c0_0 = arith.constant 0 : index
    %0 = vector.load %arg1[%c0, %c0_0] : memref<512x8xbf16, #tpu.memory_space<vmem>>, vector<512x8xbf16>
    %c0_1 = arith.constant 0 : index
    %c0_2 = arith.constant 0 : index
    %1 = vector.load %arg2[%c0_1, %c0_2] : memref<512x8xbf16, #tpu.memory_space<vmem>>, vector<512x8xbf16>
    %2 = tpu.concatenate %0, %1 in 0 : vector<512x8xbf16>, vector<512x8xbf16> -> vector<1024x8xbf16>
    %3 = arith.extf %2 : vector<1024x8xbf16> to vector<1024x8xf32>
    %cst = arith.constant 0.000000e+00 : f32
    %4 = vector.broadcast %cst : f32 to vector<512x64xf32>
    %5 = vector.extract_strided_slice %3 {offsets = [0, 0], sizes = [512, 8], strides = [1, 1]} : vector<1024x8xf32> to vector<512x8xf32>
    %6 = arith.truncf %5 : vector<512x8xf32> to vector<512x8xbf16>
    %c0_3 = arith.constant 0 : index
    %c0_4 = arith.constant 0 : index
    %c0_5 = arith.constant 0 : index
    %7 = vector.load %arg4[%c0_3, %c0_4, %c0_5] : memref<9x8x64xbf16, #tpu.memory_space<vmem>>, vector<1x8x64xbf16>
    %8 = vector.shape_cast %7 : vector<1x8x64xbf16> to vector<8x64xbf16>
    %cst_6 = arith.constant dense<0.000000e+00> : vector<512x64xf32>
    %9 = tpu.matmul %6, %8, %cst_6 {dimension_numbers = #tpu.dot_dimension_numbers<[1], [0], [0], [1], [0, 0, 1, 1], [], []>} : vector<512x8xbf16>, vector<8x64xbf16>, vector<512x64xf32> -> vector<512x64xf32>
    %10 = arith.addf %4, %9 : vector<512x64xf32>
    %11 = vector.extract_strided_slice %3 {offsets = [1, 0], sizes = [512, 8], strides = [1, 1]} : vector<1024x8xf32> to vector<512x8xf32>
    %12 = arith.truncf %11 : vector<512x8xf32> to vector<512x8xbf16>
    %c1 = arith.constant 1 : index
    %c0_7 = arith.constant 0 : index
    %c0_8 = arith.constant 0 : index
    %13 = vector.load %arg4[%c1, %c0_7, %c0_8] : memref<9x8x64xbf16, #tpu.memory_space<vmem>>, vector<1x8x64xbf16>
    %14 = vector.shape_cast %13 : vector<1x8x64xbf16> to vector<8x64xbf16>
    %cst_9 = arith.constant dense<0.000000e+00> : vector<512x64xf32>
    %15 = tpu.matmul %12, %14, %cst_9 {dimension_numbers = #tpu.dot_dimension_numbers<[1], [0], [0], [1], [0, 0, 1, 1], [], []>} : vector<512x8xbf16>, vector<8x64xbf16>, vector<512x64xf32> -> vector<512x64xf32>
    %16 = arith.addf %10, %15 : vector<512x64xf32>
    %17 = vector.extract_strided_slice %3 {offsets = [2, 0], sizes = [512, 8], strides = [1, 1]} : vector<1024x8xf32> to vector<512x8xf32>
    %18 = arith.truncf %17 : vector<512x8xf32> to vector<512x8xbf16>
    %c2 = arith.constant 2 : index
    %c0_10 = arith.constant 0 : index
    %c0_11 = arith.constant 0 : index
    %19 = vector.load %arg4[%c2, %c0_10, %c0_11] : memref<9x8x64xbf16, #tpu.memory_space<vmem>>, vector<1x8x64xbf16>
    %20 = vector.shape_cast %19 : vector<1x8x64xbf16> to vector<8x64xbf16>
    %cst_12 = arith.constant dense<0.000000e+00> : vector<512x64xf32>
    %21 = tpu.matmul %18, %20, %cst_12 {dimension_numbers = #tpu.dot_dimension_numbers<[1], [0], [0], [1], [0, 0, 1, 1], [], []>} : vector<512x8xbf16>, vector<8x64xbf16>, vector<512x64xf32> -> vector<512x64xf32>
    %22 = arith.addf %16, %21 : vector<512x64xf32>
    %23 = vector.extract_strided_slice %3 {offsets = [18, 0], sizes = [512, 8], strides = [1, 1]} : vector<1024x8xf32> to vector<512x8xf32>
    %24 = arith.truncf %23 : vector<512x8xf32> to vector<512x8xbf16>
    %c3 = arith.constant 3 : index
    %c0_13 = arith.constant 0 : index
    %c0_14 = arith.constant 0 : index
    %25 = vector.load %arg4[%c3, %c0_13, %c0_14] : memref<9x8x64xbf16, #tpu.memory_space<vmem>>, vector<1x8x64xbf16>
    %26 = vector.shape_cast %25 : vector<1x8x64xbf16> to vector<8x64xbf16>
    %cst_15 = arith.constant dense<0.000000e+00> : vector<512x64xf32>
    %27 = tpu.matmul %24, %26, %cst_15 {dimension_numbers = #tpu.dot_dimension_numbers<[1], [0], [0], [1], [0, 0, 1, 1], [], []>} : vector<512x8xbf16>, vector<8x64xbf16>, vector<512x64xf32> -> vector<512x64xf32>
    %28 = arith.addf %22, %27 : vector<512x64xf32>
    %29 = vector.extract_strided_slice %3 {offsets = [19, 0], sizes = [512, 8], strides = [1, 1]} : vector<1024x8xf32> to vector<512x8xf32>
    %30 = arith.truncf %29 : vector<512x8xf32> to vector<512x8xbf16>
    %c4 = arith.constant 4 : index
    %c0_16 = arith.constant 0 : index
    %c0_17 = arith.constant 0 : index
    %31 = vector.load %arg4[%c4, %c0_16, %c0_17] : memref<9x8x64xbf16, #tpu.memory_space<vmem>>, vector<1x8x64xbf16>
    %32 = vector.shape_cast %31 : vector<1x8x64xbf16> to vector<8x64xbf16>
    %cst_18 = arith.constant dense<0.000000e+00> : vector<512x64xf32>
    %33 = tpu.matmul %30, %32, %cst_18 {dimension_numbers = #tpu.dot_dimension_numbers<[1], [0], [0], [1], [0, 0, 1, 1], [], []>} : vector<512x8xbf16>, vector<8x64xbf16>, vector<512x64xf32> -> vector<512x64xf32>
    %34 = arith.addf %28, %33 : vector<512x64xf32>
    %35 = vector.extract_strided_slice %3 {offsets = [20, 0], sizes = [512, 8], strides = [1, 1]} : vector<1024x8xf32> to vector<512x8xf32>
    %36 = arith.truncf %35 : vector<512x8xf32> to vector<512x8xbf16>
    %c5 = arith.constant 5 : index
    %c0_19 = arith.constant 0 : index
    %c0_20 = arith.constant 0 : index
    %37 = vector.load %arg4[%c5, %c0_19, %c0_20] : memref<9x8x64xbf16, #tpu.memory_space<vmem>>, vector<1x8x64xbf16>
    %38 = vector.shape_cast %37 : vector<1x8x64xbf16> to vector<8x64xbf16>
    %cst_21 = arith.constant dense<0.000000e+00> : vector<512x64xf32>
    %39 = tpu.matmul %36, %38, %cst_21 {dimension_numbers = #tpu.dot_dimension_numbers<[1], [0], [0], [1], [0, 0, 1, 1], [], []>} : vector<512x8xbf16>, vector<8x64xbf16>, vector<512x64xf32> -> vector<512x64xf32>
    %40 = arith.addf %34, %39 : vector<512x64xf32>
    %41 = vector.extract_strided_slice %3 {offsets = [36, 0], sizes = [512, 8], strides = [1, 1]} : vector<1024x8xf32> to vector<512x8xf32>
    %42 = arith.truncf %41 : vector<512x8xf32> to vector<512x8xbf16>
    %c6 = arith.constant 6 : index
    %c0_22 = arith.constant 0 : index
    %c0_23 = arith.constant 0 : index
    %43 = vector.load %arg4[%c6, %c0_22, %c0_23] : memref<9x8x64xbf16, #tpu.memory_space<vmem>>, vector<1x8x64xbf16>
    %44 = vector.shape_cast %43 : vector<1x8x64xbf16> to vector<8x64xbf16>
    %cst_24 = arith.constant dense<0.000000e+00> : vector<512x64xf32>
    %45 = tpu.matmul %42, %44, %cst_24 {dimension_numbers = #tpu.dot_dimension_numbers<[1], [0], [0], [1], [0, 0, 1, 1], [], []>} : vector<512x8xbf16>, vector<8x64xbf16>, vector<512x64xf32> -> vector<512x64xf32>
    %46 = arith.addf %40, %45 : vector<512x64xf32>
    %47 = vector.extract_strided_slice %3 {offsets = [37, 0], sizes = [512, 8], strides = [1, 1]} : vector<1024x8xf32> to vector<512x8xf32>
    %48 = arith.truncf %47 : vector<512x8xf32> to vector<512x8xbf16>
    %c7 = arith.constant 7 : index
    %c0_25 = arith.constant 0 : index
    %c0_26 = arith.constant 0 : index
    %49 = vector.load %arg4[%c7, %c0_25, %c0_26] : memref<9x8x64xbf16, #tpu.memory_space<vmem>>, vector<1x8x64xbf16>
    %50 = vector.shape_cast %49 : vector<1x8x64xbf16> to vector<8x64xbf16>
    %cst_27 = arith.constant dense<0.000000e+00> : vector<512x64xf32>
    %51 = tpu.matmul %48, %50, %cst_27 {dimension_numbers = #tpu.dot_dimension_numbers<[1], [0], [0], [1], [0, 0, 1, 1], [], []>} : vector<512x8xbf16>, vector<8x64xbf16>, vector<512x64xf32> -> vector<512x64xf32>
    %52 = arith.addf %46, %51 : vector<512x64xf32>
    %53 = vector.extract_strided_slice %3 {offsets = [38, 0], sizes = [512, 8], strides = [1, 1]} : vector<1024x8xf32> to vector<512x8xf32>
    %54 = arith.truncf %53 : vector<512x8xf32> to vector<512x8xbf16>
    %c8 = arith.constant 8 : index
    %c0_28 = arith.constant 0 : index
    %c0_29 = arith.constant 0 : index
    %55 = vector.load %arg4[%c8, %c0_28, %c0_29] : memref<9x8x64xbf16, #tpu.memory_space<vmem>>, vector<1x8x64xbf16>
    %56 = vector.shape_cast %55 : vector<1x8x64xbf16> to vector<8x64xbf16>
    %cst_30 = arith.constant dense<0.000000e+00> : vector<512x64xf32>
    %57 = tpu.matmul %54, %56, %cst_30 {dimension_numbers = #tpu.dot_dimension_numbers<[1], [0], [0], [1], [0, 0, 1, 1], [], []>} : vector<512x8xbf16>, vector<8x64xbf16>, vector<512x64xf32> -> vector<512x64xf32>
    %58 = arith.addf %52, %57 : vector<512x64xf32>
    %c0_31 = arith.constant 0 : index
    %c0_32 = arith.constant 0 : index
    %59 = vector.load %arg5[%c0_31, %c0_32] : memref<1x64xf32, #tpu.memory_space<vmem>>, vector<1x64xf32>
    %60 = vector.broadcast %59 : vector<1x64xf32> to vector<512x64xf32>
    %61 = arith.addf %58, %60 : vector<512x64xf32>
    %cst_33 = arith.constant 0.000000e+00 : f32
    %62 = vector.broadcast %cst_33 : f32 to vector<512x64xf32>
    %63 = arith.maximumf %61, %62 : vector<512x64xf32>
    %64 = arith.truncf %63 : vector<512x64xf32> to vector<512x64xbf16>
    %c0_34 = arith.constant 0 : index
    %c0_35 = arith.constant 0 : index
    %65 = vector.load %arg6[%c0_34, %c0_35] : memref<512x64xbf16, #tpu.memory_space<vmem>>, vector<512x64xbf16>
    tpu.vector_store %arg6[%c0_34, %c0_35], %64 {strides = array<i32>} : memref<512x64xbf16, #tpu.memory_space<vmem>>, vector<512x64xbf16>,
    %c0_36 = arith.constant 0 : index
    %c0_37 = arith.constant 0 : index
    %66 = vector.load %arg6[%c0_36, %c0_37] : memref<512x64xbf16, #tpu.memory_space<vmem>>, vector<512x64xbf16>
    %67 = arith.extf %66 : vector<512x64xbf16> to vector<512x64xf32>
    %c0_38 = arith.constant 0 : index
    %c0_39 = arith.constant 0 : index
    %68 = vector.load %arg3[%c0_38, %c0_39] : memref<512x1xf32, #tpu.memory_space<vmem>>, vector<512x1xf32>
    %69 = vector.broadcast %68 : vector<512x1xf32> to vector<512x64xf32>
    %70 = arith.mulf %67, %69 : vector<512x64xf32>
    %cst_40 = arith.constant dense<0.000000e+00> : vector<64xf32>
    %71 = vector.multi_reduction <add>, %70, %cst_40 [0] : vector<512x64xf32> to vector<64xf32>
    %72 = vector.shape_cast %71 : vector<64xf32> to vector<1x64xf32>
    %73 = vector.shape_cast %72 : vector<1x64xf32> to vector<1x1x64xf32>
    %c0_41 = arith.constant 0 : index
    %c0_42 = arith.constant 0 : index
    %c0_43 = arith.constant 0 : index
    %74 = vector.load %arg7[%c0_41, %c0_42, %c0_43] : memref<1x2x64xf32, #tpu.memory_space<vmem>>, vector<1x1x64xf32>
    tpu.vector_store %arg7[%c0_41, %c0_42, %c0_43], %73 {strides = array<i32>} : memref<1x2x64xf32, #tpu.memory_space<vmem>>, vector<1x1x64xf32>,
    %75 = arith.mulf %70, %70 : vector<512x64xf32>
    %cst_44 = arith.constant dense<0.000000e+00> : vector<64xf32>
    %76 = vector.multi_reduction <add>, %75, %cst_44 [0] : vector<512x64xf32> to vector<64xf32>
    %77 = vector.shape_cast %76 : vector<64xf32> to vector<1x64xf32>
    %78 = vector.shape_cast %77 : vector<1x64xf32> to vector<1x1x64xf32>
    %c0_45 = arith.constant 0 : index
    %c1_46 = arith.constant 1 : index
    %c0_47 = arith.constant 0 : index
    %79 = vector.load %arg7[%c0_45, %c1_46, %c0_47] : memref<1x2x64xf32, #tpu.memory_space<vmem>>, vector<1x1x64xf32>
    tpu.vector_store %arg7[%c0_45, %c1_46, %c0_47], %78 {strides = array<i32>} : memref<1x2x64xf32, #tpu.memory_space<vmem>>, vector<1x1x64xf32>,
    return
  }
  func.func @transform_0(%arg0: i32) -> (i32, i32) {
    %c0_i32 = arith.constant 0 : i32
    %c0_i32_0 = arith.constant 0 : i32
    return %arg0, %c0_i32 : i32, i32
  }
  func.func @transform_1(%arg0: i32) -> (i32, i32) {
    %c1_i32 = arith.constant 1 : i32
    %0 = arith.addi %arg0, %c1_i32 : i32
    %c0_i32 = arith.constant 0 : i32
    %c0_i32_0 = arith.constant 0 : i32
    return %0, %c0_i32 : i32, i32
  }
  func.func @transform_2(%arg0: i32) -> (i32, i32) {
    %c0_i32 = arith.constant 0 : i32
    %c0_i32_0 = arith.constant 0 : i32
    return %arg0, %c0_i32 : i32, i32
  }
  func.func @transform_3(%arg0: i32) -> (i32, i32, i32) {
    %c0_i32 = arith.constant 0 : i32
    %c0_i32_0 = arith.constant 0 : i32
    %c0_i32_1 = arith.constant 0 : i32
    %c0_i32_2 = arith.constant 0 : i32
    return %c0_i32, %c0_i32_0, %c0_i32_1 : i32, i32, i32
  }
  func.func @transform_4(%arg0: i32) -> (i32, i32) {
    %c0_i32 = arith.constant 0 : i32
    %c0_i32_0 = arith.constant 0 : i32
    %c0_i32_1 = arith.constant 0 : i32
    return %c0_i32, %c0_i32_0 : i32, i32
  }
  func.func @transform_5(%arg0: i32) -> (i32, i32) {
    %c0_i32 = arith.constant 0 : i32
    %c0_i32_0 = arith.constant 0 : i32
    return %arg0, %c0_i32 : i32, i32
  }
  func.func @transform_6(%arg0: i32) -> (i32, i32, i32) {
    %c0_i32 = arith.constant 0 : i32
    %c0_i32_0 = arith.constant 0 : i32
    %c0_i32_1 = arith.constant 0 : i32
    return %arg0, %c0_i32, %c0_i32_0 : i32, i32, i32
  }
}

</mosaic_0001>

<llo_original>
// kernel: tpu_custom_call.1
$region0: #{tpu_custom_call.1}
  #allocation0 [shape = 'u32[]', space=smem, size = 0x4, offset = 0x4, fixed_abs, tag = 'smem constant byte address 0x4 - core index']
  #allocation1 [shape = 'u32[144,128]{1,0:T(1,128)}', space=vmem, size = 0x12000, scoped, tag = 'internal scratch']
  %s0 = inlined_call_operand.vmem [shape: bf16[1536,8], index: 0, kind: input, shape index: {}]
  %s1 = inlined_call_operand.vmem [shape: bf16[1536,8], index: 1, kind: input, shape index: {}]
  %s2 = inlined_call_operand.vmem [shape: f32[1024,1], index: 2, kind: input, shape index: {}]
  %s3 = inlined_call_operand.vmem [shape: bf16[9,8,64], index: 3, kind: input, shape index: {}]
  %s4 = inlined_call_operand.vmem [shape: f32[1,64], index: 4, kind: input, shape index: {}]
  %s5 = inlined_call_operand.vmem [shape: bf16[1024,64], index: 5, kind: output, shape index: {0}]
  %s6 = inlined_call_operand.hbm [shape: f32[2,2,64], index: 6, kind: output, shape index: {1}]
  %7 = xla_tuple %s5, %s6
  %s8 = sld [smem:[#allocation0]]
  $region61: #{tpu_custom_call.1} parent=0
    _
  %s10 = ssub.s32 1, %s8
  %s11 = scalar_select 0, %s10, %s8
  $region1: #{tpu_custom_call.1} parent=0
    #allocation2 [shape = 'u8[2048]{0}', space=vmem, size = 0x800, scoped, tag = 'output window, operand 1']
    #allocation3 [shape = 's32[2]{0}', space=sflag, size = 0x8, scoped, tag = 'scoped memory for tpu_custom_call.1']
    %12 = vsyncpa [#allocation3], 0
    %s13 = scalar_lea.sflag [#allocation3], 1
    %14 = vsyncpa %s13, 0
    loop: start=0, step=1, limit=4
    $region2: #{tpu_custom_call.1} parent=1 // loop_pre_header
      _
    $region3: #{tpu_custom_call.1} parent=1 // loop_header
      %s16 = sphi 0, %s20
      %p17 = scmp.ge.s32.totalorder %s16, 4
      %s26 = sphi 0, %s28
      %s29 = sphi 0, %s26
      %s30 = sphi 0, %s29
      %s46 = sphi 0, %s30
      %s54 = sphi 0, %s56
      %s57 = sphi 0, %s54
      %s58 = sphi 0, %s57
      %s74 = sphi 0, %s58
      %s80 = sphi 0, %s82
      %s83 = sphi 0, %s80
      %s84 = sphi 0, %s83
      %s100 = sphi 0, %s84
      %s104 = sphi 0, %s104
      %s106 = sphi 0, %s104
      %s107 = sphi 0, %s106
      %s121 = sphi 0, %s107
      %s125 = sphi 0, %s125
      %s127 = sphi 0, %s125
      %s128 = sphi 0, %s127
      %s142 = sphi 0, %s128
      %s148 = sphi 0, %s150
      %s151 = sphi 0, %s148
      %s152 = sphi 0, %s151
      %s168 = sphi 0, %s152
      %s174 = sphi 0, %s176
      %s177 = sphi 0, %s174
      %s178 = sphi 0, %s177
      %s194 = sphi 0, %s178
    $region4: #{tpu_custom_call.1} parent=1 // loop_header_branch
      %19 = sbr.rel (%p17) target = $region8
    $region5: #{tpu_custom_call.1} parent=1 // loop_body
      %s21 = ssub.s32 %s16, 1
      %s22 = ssub.s32 %s16, 2
      %s23 = sadd.s32 %s16, 1
      %s24 = ssub.s32 %s16, %s23
      %p25 = scmp.eq.s32.totalorder %s24, 0
      %s27 = sadd.s32 %s26, 1
      %s28 = scalar_select %p25, %s26, %s27
      %p31 = pneg %p25
      %p32 = scmp.eq.s32.totalorder %s16, 1
      %p33 = por %p31, %p32
      %p34 = scmp.ne.s32.totalorder %s26, %s29
      %p35 = scmp.eq.s32.totalorder %s16, 0
      %p36 = por %p34, %p35
      %p37 = scmp.ne.s32.totalorder %s26, %s29
      %p38 = scmp.eq.s32.totalorder %s21, 1
      %p39 = por %p37, %p38
      %p40 = scmp.ne.s32.totalorder %s29, %s30
      %p41 = scmp.eq.s32.totalorder %s21, 0
      %p42 = por %p40, %p41
      %p43 = scmp.ne.s32.totalorder %s29, %s30
      %p44 = scmp.eq.s32.totalorder %s22, 1
      %p45 = por %p43, %p44
      %p47 = scmp.ne.s32.totalorder %s30, %s46
      %p48 = scmp.eq.s32.totalorder %s22, 0
      %p49 = por %p47, %p48
      %s50 = sadd.s32 %s16, 1
      %s51 = sadd.s32 %s23, 1
      %s52 = ssub.s32 %s50, %s51
      %p53 = scmp.eq.s32.totalorder %s52, 0
      %s55 = sadd.s32 %s54, 1
      %s56 = scalar_select %p53, %s54, %s55
      %p59 = pneg %p53
      %p60 = scmp.eq.s32.totalorder %s16, 1
      %p61 = por %p59, %p60
      %p62 = scmp.ne.s32.totalorder %s54, %s57
      %p63 = scmp.eq.s32.totalorder %s16, 0
      %p64 = por %p62, %p63
      %p65 = scmp.ne.s32.totalorder %s54, %s57
      %p66 = scmp.eq.s32.totalorder %s21, 1
      %p67 = por %p65, %p66
      %p68 = scmp.ne.s32.totalorder %s57, %s58
      %p69 = scmp.eq.s32.totalorder %s21, 0
      %p70 = por %p68, %p69
      %p71 = scmp.ne.s32.totalorder %s57, %s58
      %p72 = scmp.eq.s32.totalorder %s22, 1
      %p73 = por %p71, %p72
      %p75 = scmp.ne.s32.totalorder %s58, %s74
      %p76 = scmp.eq.s32.totalorder %s22, 0
      %p77 = por %p75, %p76
      %s78 = ssub.s32 %s16, %s23
      %p79 = scmp.eq.s32.totalorder %s78, 0
      %s81 = sadd.s32 %s80, 1
      %s82 = scalar_select %p79, %s80, %s81
      %p85 = pneg %p79
      %p86 = scmp.eq.s32.totalorder %s16, 1
      %p87 = por %p85, %p86
      %p88 = scmp.ne.s32.totalorder %s80, %s83
      %p89 = scmp.eq.s32.totalorder %s16, 0
      %p90 = por %p88, %p89
      %p91 = scmp.ne.s32.totalorder %s80, %s83
      %p92 = scmp.eq.s32.totalorder %s21, 1
      %p93 = por %p91, %p92
      %p94 = scmp.ne.s32.totalorder %s83, %s84
      %p95 = scmp.eq.s32.totalorder %s21, 0
      %p96 = por %p94, %p95
      %p97 = scmp.ne.s32.totalorder %s83, %s84
      %p98 = scmp.eq.s32.totalorder %s22, 1
      %p99 = por %p97, %p98
      %p101 = scmp.ne.s32.totalorder %s84, %s100
      %p102 = scmp.eq.s32.totalorder %s22, 0
      %p103 = por %p101, %p102
      %s105 = sadd.s32 %s104, 1
      %p108 = scmp.eq.s32.totalorder %s16, 1
      %p109 = scmp.ne.s32.totalorder %s104, %s106
      %p110 = scmp.eq.s32.totalorder %s16, 0
      %p111 = por %p109, %p110
      %p112 = scmp.ne.s32.totalorder %s104, %s106
      %p113 = scmp.eq.s32.totalorder %s21, 1
      %p114 = por %p112, %p113
      %p115 = scmp.ne.s32.totalorder %s106, %s107
      %p116 = scmp.eq.s32.totalorder %s21, 0
      %p117 = por %p115, %p116
      %p118 = scmp.ne.s32.totalorder %s106, %s107
      %p119 = scmp.eq.s32.totalorder %s22, 1
      %p120 = por %p118, %p119
      %p122 = scmp.ne.s32.totalorder %s107, %s121
      %p123 = scmp.eq.s32.totalorder %s22, 0
      %p124 = por %p122, %p123
      %s126 = sadd.s32 %s125, 1
      %p129 = scmp.eq.s32.totalorder %s16, 1
      %p130 = scmp.ne.s32.totalorder %s125, %s127
      %p131 = scmp.eq.s32.totalorder %s16, 0
      %p132 = por %p130, %p131
      %p133 = scmp.ne.s32.totalorder %s125, %s127
      %p134 = scmp.eq.s32.totalorder %s21, 1
      %p135 = por %p133, %p134
      %p136 = scmp.ne.s32.totalorder %s127, %s128
      %p137 = scmp.eq.s32.totalorder %s21, 0
      %p138 = por %p136, %p137
      %p139 = scmp.ne.s32.totalorder %s127, %s128
      %p140 = scmp.eq.s32.totalorder %s22, 1
      %p141 = por %p139, %p140
      %p143 = scmp.ne.s32.totalorder %s128, %s142
      %p144 = scmp.eq.s32.totalorder %s22, 0
      %p145 = por %p143, %p144
      %s146 = ssub.s32 %s16, %s23
      %p147 = scmp.eq.s32.totalorder %s146, 0
      %s149 = sadd.s32 %s148, 1
      %s150 = scalar_select %p147, %s148, %s149
      %p153 = pneg %p147
      %p154 = scmp.eq.s32.totalorder %s16, 1
      %p155 = por %p153, %p154
      %p156 = scmp.ne.s32.totalorder %s148, %s151
      %p157 = scmp.eq.s32.totalorder %s16, 0
      %p158 = por %p156, %p157
      %p159 = scmp.ne.s32.totalorder %s148, %s151
      %p160 = scmp.eq.s32.totalorder %s21, 1
      %p161 = por %p159, %p160
      %p162 = scmp.ne.s32.totalorder %s151, %s152
      %p163 = scmp.eq.s32.totalorder %s21, 0
      %p164 = por %p162, %p163
      %p165 = scmp.ne.s32.totalorder %s151, %s152
      %p166 = scmp.eq.s32.totalorder %s22, 1
      %p167 = por %p165, %p166
      %p169 = scmp.ne.s32.totalorder %s152, %s168
      %p170 = scmp.eq.s32.totalorder %s22, 0
      %p171 = por %p169, %p170
      %s172 = ssub.s32 %s16, %s23
      %p173 = scmp.eq.s32.totalorder %s172, 0
      %s175 = sadd.s32 %s174, 1
      %s176 = scalar_select %p173, %s174, %s175
      %p179 = pneg %p173
      %p180 = scmp.eq.s32.totalorder %s16, 1
      %p181 = por %p179, %p180
      %p182 = scmp.ne.s32.totalorder %s174, %s177
      %p183 = scmp.eq.s32.totalorder %s16, 0
      %p184 = por %p182, %p183
      %p185 = scmp.ne.s32.totalorder %s174, %s177
      %p186 = scmp.eq.s32.totalorder %s21, 1
      %p187 = por %p185, %p186
      %p188 = scmp.ne.s32.totalorder %s177, %s178
      %p189 = scmp.eq.s32.totalorder %s21, 0
      %p190 = por %p188, %p189
      %p191 = scmp.ne.s32.totalorder %s177, %s178
      %p192 = scmp.eq.s32.totalorder %s22, 1
      %p193 = por %p191, %p192
      %p195 = scmp.ne.s32.totalorder %s178, %s194
      %p196 = scmp.eq.s32.totalorder %s22, 0
      %p197 = por %p195, %p196
      %p198 = scmp.le.s32.totalorder 1, %s16
      %p199 = scmp.lt.s32.totalorder %s16, 3
      %p200 = pnand %p198, %p199
      %p201 = pneg %p200
      // Predicated region
      $region9: #{tpu_custom_call.1} parent=5 // pred_check
        _
      $region10: #{tpu_custom_call.1} parent=5 // pred_check_branch
        %203 = sbr.rel (%p200) target = $region12
      $region11: #{tpu_custom_call.1} parent=5 // pred_region
        %s204 = ssub.s32 %s16, 1
        // Predicated region
        $region13: #{tpu_custom_call.1} parent=11 // pred_check
          %p205 = pneg %p117
        $region14: #{tpu_custom_call.1} parent=11 // pred_check_branch
          %207 = sbr.rel (%p205) target = $region16
        $region15: #{tpu_custom_call.1} parent=11 // pred_region
          _
        $region16: #{tpu_custom_call.1} parent=11 // pred_fallthru
          _
        // Predicated region
        $region17: #{tpu_custom_call.1} parent=11 // pred_check
          %p208 = pneg %p138
        $region18: #{tpu_custom_call.1} parent=11 // pred_check_branch
          %210 = sbr.rel (%p208) target = $region20
        $region19: #{tpu_custom_call.1} parent=11 // pred_region
          _
        $region20: #{tpu_custom_call.1} parent=11 // pred_fallthru
          _
      $region12: #{tpu_custom_call.1} parent=5 // pred_fallthru
        _
      %p211 = scmp.lt.s32.totalorder %s16, 2
      // Predicated region
      $region21: #{tpu_custom_call.1} parent=5 // pred_check
        %p212 = pneg %p211
      $region22: #{tpu_custom_call.1} parent=5 // pred_check_branch
        %214 = sbr.rel (%p212) target = $region24
      $region23: #{tpu_custom_call.1} parent=5 // pred_region
        // Predicated region
        $region25: #{tpu_custom_call.1} parent=23 // pred_check
          %p215 = pneg %p36
        $region26: #{tpu_custom_call.1} parent=23 // pred_check_branch
          %217 = sbr.rel (%p215) target = $region28
        $region27: #{tpu_custom_call.1} parent=23 // pred_region
          %s218 = smul.u32 64, %s16
          %p219 = scmp.lt.s32.totalorder %s218, 191
          %s220 = scalar_select %p219, %s218, 191
          %s221 = smul.addr %s220, 4
          %s222 = scalar_lea.vmem %s0, %s221
          %s223 = smul.u32 64, %s16
        $region28: #{tpu_custom_call.1} parent=23 // pred_fallthru
          _
        // Predicated region
        $region29: #{tpu_custom_call.1} parent=23 // pred_check
          %p224 = pneg %p64
        $region30: #{tpu_custom_call.1} parent=23 // pred_check_branch
          %226 = sbr.rel (%p224) target = $region32
        $region31: #{tpu_custom_call.1} parent=23 // pred_region
          %s227 = sadd.s32 %s16, 1
          %s228 = smul.u32 64, %s227
          %p229 = scmp.lt.s32.totalorder %s228, 191
          %s230 = scalar_select %p229, %s228, 191
          %s231 = smul.addr %s230, 4
          %s232 = scalar_lea.vmem %s1, %s231
          %s233 = sadd.s32 %s16, 1
          %s234 = smul.u32 64, %s233
        $region32: #{tpu_custom_call.1} parent=23 // pred_fallthru
          _
        // Predicated region
        $region33: #{tpu_custom_call.1} parent=23 // pred_check
          %p235 = pneg %p90
        $region34: #{tpu_custom_call.1} parent=23 // pred_check_branch
          %237 = sbr.rel (%p235) target = $region36
        $region35: #{tpu_custom_call.1} parent=23 // pred_region
          %s238 = smul.u32 64, %s16
          %p239 = scmp.lt.s32.totalorder %s238, 127
          %s240 = scalar_select %p239, %s238, 127
          %s241 = smul.addr %s240, 8
          %s242 = scalar_lea.vmem %s2, %s241
          %s243 = smul.u32 64, %s16
        $region36: #{tpu_custom_call.1} parent=23 // pred_fallthru
          _
      $region24: #{tpu_custom_call.1} parent=5 // pred_fallthru
        _
      %p244 = scmp.le.s32.totalorder 1, %s16
      %p245 = scmp.lt.s32.totalorder %s16, 3
      %p246 = pnand %p244, %p245
      %p247 = pneg %p246
      // Predicated region
      $region37: #{tpu_custom_call.1} parent=5 // pred_check
        _
      $region38: #{tpu_custom_call.1} parent=5 // pred_check_branch
        %249 = sbr.rel (%p246) target = $region40
      $region39: #{tpu_custom_call.1} parent=5 // pred_region
        %s250 = ssub.s32 %s16, 1
        %s251 = smul.u32 64, %s21
        %p252 = scmp.lt.s32.totalorder %s251, 191
        %s253 = scalar_select %p252, %s251, 191
        %s254 = smul.addr %s253, 4
        %s255 = scalar_lea.vmem %s0, %s254
        %p256 = pneg %p42
        %p257 = pneg %p39
        %s258 = sadd.s32 %s21, 1
        %s259 = smul.u32 64, %s258
        %p260 = scmp.lt.s32.totalorder %s259, 191
        %s261 = scalar_select %p260, %s259, 191
        %s262 = smul.addr %s261, 4
        %s263 = scalar_lea.vmem %s1, %s262
        %p264 = pneg %p70
        %p265 = pneg %p67
        %s266 = smul.u32 64, %s21
        %p267 = scmp.lt.s32.totalorder %s266, 127
        %s268 = scalar_select %p267, %s266, 127
        %s269 = smul.addr %s268, 8
        %s270 = scalar_lea.vmem %s2, %s269
        %p271 = pneg %p96
        %p272 = pneg %p93
        %p273 = pneg %p117
        %p274 = pneg %p114
        %p275 = pneg %p138
        %p276 = pneg %p135
        %p277 = pneg %p164
        %p278 = pneg %p161
        %s279 = smul.u32 64, %s21
        %p280 = scmp.lt.s32.totalorder %s279, 127
        %s281 = scalar_select %p280, %s279, 127
        %s282 = smul.addr %s281, 4
        %s283 = scalar_lea.vmem %s5, %s282
        %p284 = pneg %p190
        %p285 = pneg %p187
        %s286 = sand.u32 %s177, 1
        %s287 = scalar_lea.sflag [#allocation3], %s286
        %s288 = sand.u32 %s177, 1
        %s289 = smul.addr %s288, 2
        %s290 = scalar_lea.vmem [#allocation2], %s289
        %s291 = smul.u32 64, %s21
        %p292 = scmp.lt.s32.totalorder %s291, 191
        %s293 = scalar_select %p292, %s291, 191
        %s294 = smul.addr %s293, 4
        %s295 = scalar_lea.vmem %s0, %s294
        %s296 = smul.u32 64, %s21
        %s297 = sadd.s32 %s21, 1
        %s298 = smul.u32 64, %s297
        %p299 = scmp.lt.s32.totalorder %s298, 191
        %s300 = scalar_select %p299, %s298, 191
        %s301 = smul.addr %s300, 4
        %s302 = scalar_lea.vmem %s1, %s301
        %s303 = sadd.s32 %s21, 1
        %s304 = smul.u32 64, %s303
        %s305 = smul.u32 64, %s21
        %p306 = scmp.lt.s32.totalorder %s305, 127
        %s307 = scalar_select %p306, %s305, 127
        %s308 = smul.addr %s307, 8
        %s309 = scalar_lea.vmem %s2, %s308
        %s310 = smul.u32 64, %s21
        %s311 = smul.u32 64, %s21
        %p312 = scmp.lt.s32.totalorder %s311, 127
        %s313 = scalar_select %p312, %s311, 127
        %s314 = smul.addr %s313, 4
        %s315 = scalar_lea.vmem %s5, %s314
        %s316 = smul.u32 64, %s21
        %v318 = vld [vmem:[%s295] sm:$0xf]
        %v319 = vld [vmem:[%s295 + $0x4] sm:$0xf]
        %v320 = vld [vmem:[%s295 + $0x8] sm:$0xf]
        %v321 = vld [vmem:[%s295 + $0xc] sm:$0xf]
        %v322 = vld [vmem:[%s295 + $0x10] sm:$0xf]
        %v323 = vld [vmem:[%s295 + $0x14] sm:$0xf]
        %v324 = vld [vmem:[%s295 + $0x18] sm:$0xf]
        %v325 = vld [vmem:[%s295 + $0x1c] sm:$0xf]
        %v326 = vld [vmem:[%s295 + $0x20] sm:$0xf]
        %v327 = vld [vmem:[%s295 + $0x24] sm:$0xf]
        %v328 = vld [vmem:[%s295 + $0x28] sm:$0xf]
        %v329 = vld [vmem:[%s295 + $0x2c] sm:$0xf]
        %v330 = vld [vmem:[%s295 + $0x30] sm:$0xf]
        %v331 = vld [vmem:[%s295 + $0x34] sm:$0xf]
        %v332 = vld [vmem:[%s295 + $0x38] sm:$0xf]
        %v333 = vld [vmem:[%s295 + $0x3c] sm:$0xf]
        %v334 = vld [vmem:[%s295 + $0x40] sm:$0xf]
        %v335 = vld [vmem:[%s295 + $0x44] sm:$0xf]
        %v336 = vld [vmem:[%s295 + $0x48] sm:$0xf]
        %v337 = vld [vmem:[%s295 + $0x4c] sm:$0xf]
        %v338 = vld [vmem:[%s295 + $0x50] sm:$0xf]
        %v339 = vld [vmem:[%s295 + $0x54] sm:$0xf]
        %v340 = vld [vmem:[%s295 + $0x58] sm:$0xf]
        %v341 = vld [vmem:[%s295 + $0x5c] sm:$0xf]
        %v342 = vld [vmem:[%s295 + $0x60] sm:$0xf]
        %v343 = vld [vmem:[%s295 + $0x64] sm:$0xf]
        %v344 = vld [vmem:[%s295 + $0x68] sm:$0xf]
        %v345 = vld [vmem:[%s295 + $0x6c] sm:$0xf]
        %v346 = vld [vmem:[%s295 + $0x70] sm:$0xf]
        %v347 = vld [vmem:[%s295 + $0x74] sm:$0xf]
        %v348 = vld [vmem:[%s295 + $0x78] sm:$0xf]
        %v349 = vld [vmem:[%s295 + $0x7c] sm:$0xf]
        %v350 = vld [vmem:[%s295 + $0x80] sm:$0xf]
        %v351 = vld [vmem:[%s295 + $0x84] sm:$0xf]
        %v352 = vld [vmem:[%s295 + $0x88] sm:$0xf]
        %v353 = vld [vmem:[%s295 + $0x8c] sm:$0xf]
        %v354 = vld [vmem:[%s295 + $0x90] sm:$0xf]
        %v355 = vld [vmem:[%s295 + $0x94] sm:$0xf]
        %v356 = vld [vmem:[%s295 + $0x98] sm:$0xf]
        %v357 = vld [vmem:[%s295 + $0x9c] sm:$0xf]
        %v358 = vld [vmem:[%s295 + $0xa0] sm:$0xf]
        %v359 = vld [vmem:[%s295 + $0xa4] sm:$0xf]
        %v360 = vld [vmem:[%s295 + $0xa8] sm:$0xf]
        %v361 = vld [vmem:[%s295 + $0xac] sm:$0xf]
        %v362 = vld [vmem:[%s295 + $0xb0] sm:$0xf]
        %v363 = vld [vmem:[%s295 + $0xb4] sm:$0xf]
        %v364 = vld [vmem:[%s295 + $0xb8] sm:$0xf]
        %v365 = vld [vmem:[%s295 + $0xbc] sm:$0xf]
        %v366 = vld [vmem:[%s295 + $0xc0] sm:$0xf]
        %v367 = vld [vmem:[%s295 + $0xc4] sm:$0xf]
        %v368 = vld [vmem:[%s295 + $0xc8] sm:$0xf]
        %v369 = vld [vmem:[%s295 + $0xcc] sm:$0xf]
        %v370 = vld [vmem:[%s295 + $0xd0] sm:$0xf]
        %v371 = vld [vmem:[%s295 + $0xd4] sm:$0xf]
        %v372 = vld [vmem:[%s295 + $0xd8] sm:$0xf]
        %v373 = vld [vmem:[%s295 + $0xdc] sm:$0xf]
        %v374 = vld [vmem:[%s295 + $0xe0] sm:$0xf]
        %v375 = vld [vmem:[%s295 + $0xe4] sm:$0xf]
        %v376 = vld [vmem:[%s295 + $0xe8] sm:$0xf]
        %v377 = vld [vmem:[%s295 + $0xec] sm:$0xf]
        %v378 = vld [vmem:[%s295 + $0xf0] sm:$0xf]
        %v379 = vld [vmem:[%s295 + $0xf4] sm:$0xf]
        %v380 = vld [vmem:[%s295 + $0xf8] sm:$0xf]
        %v381 = vld [vmem:[%s295 + $0xfc] sm:$0xf]
        %v382 = vld [vmem:[%s302] sm:$0xf]
        %v383 = vld [vmem:[%s302 + $0x4] sm:$0xf]
        %v384 = vld [vmem:[%s302 + $0x8] sm:$0xf]
        %v385 = vld [vmem:[%s302 + $0xc] sm:$0xf]
        %v386 = vld [vmem:[%s302 + $0x10] sm:$0xf]
        %v387 = vld [vmem:[%s302 + $0x14] sm:$0xf]
        %v452 = vunpack.c.l.b16 %v318
        %v453 = vunpack.c.l.b16 %v319
        %v454 = vunpack.c.l.b16 %v320
        %v455 = vunpack.c.l.b16 %v321
        %v456 = vunpack.c.l.b16 %v322
        %v457 = vunpack.c.l.b16 %v323
        %v458 = vunpack.c.l.b16 %v324
        %v459 = vunpack.c.l.b16 %v325
        %v460 = vunpack.c.l.b16 %v326
        %v461 = vunpack.c.l.b16 %v327
        %v462 = vunpack.c.l.b16 %v328
        %v463 = vunpack.c.l.b16 %v329
        %v464 = vunpack.c.l.b16 %v330
        %v465 = vunpack.c.l.b16 %v331
        %v466 = vunpack.c.l.b16 %v332
        %v467 = vunpack.c.l.b16 %v333
        %v468 = vunpack.c.l.b16 %v334
        %v469 = vunpack.c.l.b16 %v335
        %v470 = vunpack.c.l.b16 %v336
        %v471 = vunpack.c.l.b16 %v337
        %v472 = vunpack.c.l.b16 %v338
        %v473 = vunpack.c.l.b16 %v339
        %v474 = vunpack.c.l.b16 %v340
        %v475 = vunpack.c.l.b16 %v341
        %v476 = vunpack.c.l.b16 %v342
        %v477 = vunpack.c.l.b16 %v343
        %v478 = vunpack.c.l.b16 %v344
        %v479 = vunpack.c.l.b16 %v345
        %v480 = vunpack.c.l.b16 %v346
        %v481 = vunpack.c.l.b16 %v347
        %v482 = vunpack.c.l.b16 %v348
        %v483 = vunpack.c.l.b16 %v349
        %v484 = vunpack.c.l.b16 %v350
        %v485 = vunpack.c.l.b16 %v351
        %v486 = vunpack.c.l.b16 %v352
        %v487 = vunpack.c.l.b16 %v353
        %v488 = vunpack.c.l.b16 %v354
        %v489 = vunpack.c.l.b16 %v355
        %v490 = vunpack.c.l.b16 %v356
        %v491 = vunpack.c.l.b16 %v357
        %v492 = vunpack.c.l.b16 %v358
        %v493 = vunpack.c.l.b16 %v359
        %v494 = vunpack.c.l.b16 %v360
        %v495 = vunpack.c.l.b16 %v361
        %v496 = vunpack.c.l.b16 %v362
        %v497 = vunpack.c.l.b16 %v363
        %v498 = vunpack.c.l.b16 %v364
        %v499 = vunpack.c.l.b16 %v365
        %v500 = vunpack.c.l.b16 %v366
        %v501 = vunpack.c.l.b16 %v367
        %v502 = vunpack.c.l.b16 %v368
        %v503 = vunpack.c.l.b16 %v369
        %v504 = vunpack.c.l.b16 %v370
        %v505 = vunpack.c.l.b16 %v371
        %v506 = vunpack.c.l.b16 %v372
        %v507 = vunpack.c.l.b16 %v373
        %v508 = vunpack.c.l.b16 %v374
        %v509 = vunpack.c.l.b16 %v375
        %v510 = vunpack.c.l.b16 %v376
        %v511 = vunpack.c.l.b16 %v377
        %v512 = vunpack.c.l.b16 %v378
        %v513 = vunpack.c.l.b16 %v379
        %v514 = vunpack.c.l.b16 %v380
        %v515 = vunpack.c.l.b16 %v381
        %v516 = vpack.c.b16 %v453, %v452
        %v517 = vpack.c.b16 %v455, %v454
        %v518 = vpack.c.b16 %v457, %v456
        %v519 = vpack.c.b16 %v459, %v458
        %v520 = vpack.c.b16 %v461, %v460
        %v521 = vpack.c.b16 %v463, %v462
        %v522 = vpack.c.b16 %v465, %v464
        %v523 = vpack.c.b16 %v467, %v466
        %v524 = vpack.c.b16 %v469, %v468
        %v525 = vpack.c.b16 %v471, %v470
        %v526 = vpack.c.b16 %v473, %v472
        %v527 = vpack.c.b16 %v475, %v474
        %v528 = vpack.c.b16 %v477, %v476
        %v529 = vpack.c.b16 %v479, %v478
        %v530 = vpack.c.b16 %v481, %v480
        %v531 = vpack.c.b16 %v483, %v482
        %v532 = vpack.c.b16 %v485, %v484
        %v533 = vpack.c.b16 %v487, %v486
        %v534 = vpack.c.b16 %v489, %v488
        %v535 = vpack.c.b16 %v491, %v490
        %v536 = vpack.c.b16 %v493, %v492
        %v537 = vpack.c.b16 %v495, %v494
        %v538 = vpack.c.b16 %v497, %v496
        %v539 = vpack.c.b16 %v499, %v498
        %v540 = vpack.c.b16 %v501, %v500
        %v541 = vpack.c.b16 %v503, %v502
        %v542 = vpack.c.b16 %v505, %v504
        %v543 = vpack.c.b16 %v507, %v506
        %v544 = vpack.c.b16 %v509, %v508
        %v545 = vpack.c.b16 %v511, %v510
        %v546 = vpack.c.b16 %v513, %v512
        %v547 = vpack.c.b16 %v515, %v514
        %v586 = vunpack.c.l.b16 %v382
        %v587 = vunpack.c.l.b16 %v383
        %v588 = vunpack.c.l.b16 %v384
        %v589 = vunpack.c.l.b16 %v385
        %v590 = vunpack.c.l.b16 %v386
        %v591 = vunpack.c.l.b16 %v387
        %v592 = vpack.c.b16 %v587, %v586
        %v593 = vpack.c.b16 %v589, %v588
        %v594 = vpack.c.b16 %v591, %v590
        %v598 = vunpack.c.l.bf16 %v516
        %v599 = vunpack.c.h.bf16 %v516
        %v600 = vunpack.c.l.bf16 %v517
        %v601 = vunpack.c.h.bf16 %v517
        %v602 = vunpack.c.l.bf16 %v518
        %v603 = vunpack.c.h.bf16 %v518
        %v604 = vunpack.c.l.bf16 %v519
        %v605 = vunpack.c.h.bf16 %v519
        %v606 = vunpack.c.l.bf16 %v520
        %v607 = vunpack.c.h.bf16 %v520
        %v608 = vunpack.c.l.bf16 %v521
        %v609 = vunpack.c.h.bf16 %v521
        %v610 = vunpack.c.l.bf16 %v522
        %v611 = vunpack.c.h.bf16 %v522
        %v612 = vunpack.c.l.bf16 %v523
        %v613 = vunpack.c.h.bf16 %v523
        %v614 = vunpack.c.l.bf16 %v524
        %v615 = vunpack.c.h.bf16 %v524
        %v616 = vunpack.c.l.bf16 %v525
        %v617 = vunpack.c.h.bf16 %v525
        %v618 = vunpack.c.l.bf16 %v526
        %v619 = vunpack.c.h.bf16 %v526
        %v620 = vunpack.c.l.bf16 %v527
        %v621 = vunpack.c.h.bf16 %v527
        %v622 = vunpack.c.l.bf16 %v528
        %v623 = vunpack.c.h.bf16 %v528
        %v624 = vunpack.c.l.bf16 %v529
        %v625 = vunpack.c.h.bf16 %v529
        %v626 = vunpack.c.l.bf16 %v530
        %v627 = vunpack.c.h.bf16 %v530
        %v628 = vunpack.c.l.bf16 %v531
        %v629 = vunpack.c.h.bf16 %v531
        %v630 = vunpack.c.l.bf16 %v532
        %v631 = vunpack.c.h.bf16 %v532
        %v632 = vunpack.c.l.bf16 %v533
        %v633 = vunpack.c.h.bf16 %v533
        %v634 = vunpack.c.l.bf16 %v534
        %v635 = vunpack.c.h.bf16 %v534
        %v636 = vunpack.c.l.bf16 %v535
        %v637 = vunpack.c.h.bf16 %v535
        %v638 = vunpack.c.l.bf16 %v536
        %v639 = vunpack.c.h.bf16 %v536
        %v640 = vunpack.c.l.bf16 %v537
        %v641 = vunpack.c.h.bf16 %v537
        %v642 = vunpack.c.l.bf16 %v538
        %v643 = vunpack.c.h.bf16 %v538
        %v644 = vunpack.c.l.bf16 %v539
        %v645 = vunpack.c.h.bf16 %v539
        %v646 = vunpack.c.l.bf16 %v540
        %v647 = vunpack.c.h.bf16 %v540
        %v648 = vunpack.c.l.bf16 %v541
        %v649 = vunpack.c.h.bf16 %v541
        %v650 = vunpack.c.l.bf16 %v542
        %v651 = vunpack.c.h.bf16 %v542
        %v652 = vunpack.c.l.bf16 %v543
        %v653 = vunpack.c.h.bf16 %v543
        %v654 = vunpack.c.l.bf16 %v544
        %v655 = vunpack.c.h.bf16 %v544
        %v656 = vunpack.c.l.bf16 %v545
        %v657 = vunpack.c.h.bf16 %v545
        %v658 = vunpack.c.l.bf16 %v546
        %v659 = vunpack.c.h.bf16 %v546
        %v660 = vunpack.c.l.bf16 %v547
        %v661 = vunpack.c.h.bf16 %v547
        %v662 = vunpack.c.l.bf16 %v592
        %v663 = vunpack.c.h.bf16 %v592
        %v664 = vunpack.c.l.bf16 %v593
        %v665 = vunpack.c.h.bf16 %v593
        %v666 = vunpack.c.l.bf16 %v594
        %v667 = vpack.c.bf16 %v599, %v598
        %v668 = vpack.c.bf16 %v601, %v600
        %v669 = vpack.c.bf16 %v603, %v602
        %v670 = vpack.c.bf16 %v605, %v604
        %v671 = vpack.c.bf16 %v607, %v606
        %v672 = vpack.c.bf16 %v609, %v608
        %v673 = vpack.c.bf16 %v611, %v610
        %v674 = vpack.c.bf16 %v613, %v612
        %v675 = vpack.c.bf16 %v615, %v614
        %v676 = vpack.c.bf16 %v617, %v616
        %v677 = vpack.c.bf16 %v619, %v618
        %v678 = vpack.c.bf16 %v621, %v620
        %v679 = vpack.c.bf16 %v623, %v622
        %v680 = vpack.c.bf16 %v625, %v624
        %v681 = vpack.c.bf16 %v627, %v626
        %v682 = vpack.c.bf16 %v629, %v628
        %v683 = vpack.c.bf16 %v631, %v630
        %v684 = vpack.c.bf16 %v633, %v632
        %v685 = vpack.c.bf16 %v635, %v634
        %v686 = vpack.c.bf16 %v637, %v636
        %v687 = vpack.c.bf16 %v639, %v638
        %v688 = vpack.c.bf16 %v641, %v640
        %v689 = vpack.c.bf16 %v643, %v642
        %v690 = vpack.c.bf16 %v645, %v644
        %v691 = vpack.c.bf16 %v647, %v646
        %v692 = vpack.c.bf16 %v649, %v648
        %v693 = vpack.c.bf16 %v651, %v650
        %v694 = vpack.c.bf16 %v653, %v652
        %v695 = vpack.c.bf16 %v655, %v654
        %v696 = vpack.c.bf16 %v657, %v656
        %v697 = vpack.c.bf16 %v659, %v658
        %v698 = vpack.c.bf16 %v661, %v660
        %v699 = vld [vmem:[%s3] sm:$0xf]
        %v700 = vpack.c.bf16 %v662, %v662
        %s701 = scalar_lea.vmem %s3, 4
        %v702 = vld [vmem:[%s701] sm:$0xf]
        %vm703 = vsmask.f32 7424
        %v705 = vshrl.u32 %v667, 16
        %v707 = vshll.u32 %v667, 16
        %v709 = vrot.slane %v707, 1
        %v710 = vor.u32 %v705, %v709
        %v712 = vshll.u32 %v668, 16
        %v714 = vrot.slane %v712, 1
        %v715 = vsel %vm703, %v710, %v714
        %v716 = vshrl.u32 %v668, 16
        %v718 = vor.u32 %v716, %v714
        %v720 = vshll.u32 %v669, 16
        %v722 = vrot.slane %v720, 1
        %v723 = vsel %vm703, %v718, %v722
        %v724 = vshrl.u32 %v669, 16
        %v726 = vor.u32 %v724, %v722
        %v728 = vshll.u32 %v670, 16
        %v730 = vrot.slane %v728, 1
        %v731 = vsel %vm703, %v726, %v730
        %v732 = vshrl.u32 %v670, 16
        %v734 = vor.u32 %v732, %v730
        %v736 = vshll.u32 %v671, 16
        %v738 = vrot.slane %v736, 1
        %v739 = vsel %vm703, %v734, %v738
        %v740 = vshrl.u32 %v671, 16
        %v742 = vor.u32 %v740, %v738
        %v744 = vshll.u32 %v672, 16
        %v746 = vrot.slane %v744, 1
        %v747 = vsel %vm703, %v742, %v746
        %v748 = vshrl.u32 %v672, 16
        %v750 = vor.u32 %v748, %v746
        %v752 = vshll.u32 %v673, 16
        %v754 = vrot.slane %v752, 1
        %v755 = vsel %vm703, %v750, %v754
        %v756 = vshrl.u32 %v673, 16
        %v758 = vor.u32 %v756, %v754
        %v760 = vshll.u32 %v674, 16
        %v762 = vrot.slane %v760, 1
        %v763 = vsel %vm703, %v758, %v762
        %v764 = vshrl.u32 %v674, 16
        %v766 = vor.u32 %v764, %v762
        %v768 = vshll.u32 %v675, 16
        %v770 = vrot.slane %v768, 1
        %v771 = vsel %vm703, %v766, %v770
        %v772 = vshrl.u32 %v675, 16
        %v774 = vor.u32 %v772, %v770
        %v776 = vshll.u32 %v676, 16
        %v778 = vrot.slane %v776, 1
        %v779 = vsel %vm703, %v774, %v778
        %v780 = vshrl.u32 %v676, 16
        %v782 = vor.u32 %v780, %v778
        %v784 = vshll.u32 %v677, 16
        %v786 = vrot.slane %v784, 1
        %v787 = vsel %vm703, %v782, %v786
        %v788 = vshrl.u32 %v677, 16
        %v790 = vor.u32 %v788, %v786
        %v792 = vshll.u32 %v678, 16
        %v794 = vrot.slane %v792, 1
        %v795 = vsel %vm703, %v790, %v794
        %v796 = vshrl.u32 %v678, 16
        %v798 = vor.u32 %v796, %v794
        %v800 = vshll.u32 %v679, 16
        %v802 = vrot.slane %v800, 1
        %v803 = vsel %vm703, %v798, %v802
        %v804 = vshrl.u32 %v679, 16
        %v806 = vor.u32 %v804, %v802
        %v808 = vshll.u32 %v680, 16
        %v810 = vrot.slane %v808, 1
        %v811 = vsel %vm703, %v806, %v810
        %v812 = vshrl.u32 %v680, 16
        %v814 = vor.u32 %v812, %v810
        %v816 = vshll.u32 %v681, 16
        %v818 = vrot.slane %v816, 1
        %v819 = vsel %vm703, %v814, %v818
        %v820 = vshrl.u32 %v681, 16
        %v822 = vor.u32 %v820, %v818
        %v824 = vshll.u32 %v682, 16
        %v826 = vrot.slane %v824, 1
        %v827 = vsel %vm703, %v822, %v826
        %v828 = vshrl.u32 %v682, 16
        %v830 = vor.u32 %v828, %v826
        %v832 = vshll.u32 %v683, 16
        %v834 = vrot.slane %v832, 1
        %v835 = vsel %vm703, %v830, %v834
        %v836 = vshrl.u32 %v683, 16
        %v838 = vor.u32 %v836, %v834
        %v840 = vshll.u32 %v684, 16
        %v842 = vrot.slane %v840, 1
        %v843 = vsel %vm703, %v838, %v842
        %v844 = vshrl.u32 %v684, 16
        %v846 = vor.u32 %v844, %v842
        %v848 = vshll.u32 %v685, 16
        %v850 = vrot.slane %v848, 1
        %v851 = vsel %vm703, %v846, %v850
        %v852 = vshrl.u32 %v685, 16
        %v854 = vor.u32 %v852, %v850
        %v856 = vshll.u32 %v686, 16
        %v858 = vrot.slane %v856, 1
        %v859 = vsel %vm703, %v854, %v858
        %v860 = vshrl.u32 %v686, 16
        %v862 = vor.u32 %v860, %v858
        %v864 = vshll.u32 %v687, 16
        %v866 = vrot.slane %v864, 1
        %v867 = vsel %vm703, %v862, %v866
        %v868 = vshrl.u32 %v687, 16
        %v870 = vor.u32 %v868, %v866
        %v872 = vshll.u32 %v688, 16
        %v874 = vrot.slane %v872, 1
        %v875 = vsel %vm703, %v870, %v874
        %v876 = vshrl.u32 %v688, 16
        %v878 = vor.u32 %v876, %v874
        %v880 = vshll.u32 %v689, 16
        %v882 = vrot.slane %v880, 1
        %v883 = vsel %vm703, %v878, %v882
        %v884 = vshrl.u32 %v689, 16
        %v886 = vor.u32 %v884, %v882
        %v888 = vshll.u32 %v690, 16
        %v890 = vrot.slane %v888, 1
        %v891 = vsel %vm703, %v886, %v890
        %v892 = vshrl.u32 %v690, 16
        %v894 = vor.u32 %v892, %v890
        %v896 = vshll.u32 %v691, 16
        %v898 = vrot.slane %v896, 1
        %v899 = vsel %vm703, %v894, %v898
        %v900 = vshrl.u32 %v691, 16
        %v902 = vor.u32 %v900, %v898
        %v904 = vshll.u32 %v692, 16
        %v906 = vrot.slane %v904, 1
        %v907 = vsel %vm703, %v902, %v906
        %v908 = vshrl.u32 %v692, 16
        %v910 = vor.u32 %v908, %v906
        %v912 = vshll.u32 %v693, 16
        %v914 = vrot.slane %v912, 1
        %v915 = vsel %vm703, %v910, %v914
        %v916 = vshrl.u32 %v693, 16
        %v918 = vor.u32 %v916, %v914
        %v920 = vshll.u32 %v694, 16
        %v922 = vrot.slane %v920, 1
        %v923 = vsel %vm703, %v918, %v922
        %v924 = vshrl.u32 %v694, 16
        %v926 = vor.u32 %v924, %v922
        %v928 = vshll.u32 %v695, 16
        %v930 = vrot.slane %v928, 1
        %v931 = vsel %vm703, %v926, %v930
        %v932 = vshrl.u32 %v695, 16
        %v934 = vor.u32 %v932, %v930
        %v936 = vshll.u32 %v696, 16
        %v938 = vrot.slane %v936, 1
        %v939 = vsel %vm703, %v934, %v938
        %v940 = vshrl.u32 %v696, 16
        %v942 = vor.u32 %v940, %v938
        %v944 = vshll.u32 %v697, 16
        %v946 = vrot.slane %v944, 1
        %v947 = vsel %vm703, %v942, %v946
        %v948 = vshrl.u32 %v697, 16
        %v950 = vor.u32 %v948, %v946
        %v952 = vshll.u32 %v698, 16
        %v954 = vrot.slane %v952, 1
        %v955 = vsel %vm703, %v950, %v954
        %v956 = vshrl.u32 %v698, 16
        %v958 = vor.u32 %v956, %v954
        %v960 = vshll.u32 %v700, 16
        %v962 = vrot.slane %v960, 1
        %v963 = vsel %vm703, %v958, %v962
        %vm964 = vcmask 64512
        %v966 = vsel %vm964, %v715, 0
        %v969 = vsel %vm964, %v723, 0
        %v972 = vsel %vm964, %v731, 0
        %v975 = vsel %vm964, %v739, 0
        %v978 = vsel %vm964, %v747, 0
        %v981 = vsel %vm964, %v755, 0
        %v984 = vsel %vm964, %v763, 0
        %v987 = vsel %vm964, %v771, 0
        %v990 = vsel %vm964, %v779, 0
        %v993 = vsel %vm964, %v787, 0
        %v996 = vsel %vm964, %v795, 0
        %v999 = vsel %vm964, %v803, 0
        %v1002 = vsel %vm964, %v811, 0
        %v1005 = vsel %vm964, %v819, 0
        %v1008 = vsel %vm964, %v827, 0
        %v1011 = vsel %vm964, %v835, 0
        %v1014 = vsel %vm964, %v843, 0
        %v1017 = vsel %vm964, %v851, 0
        %v1020 = vsel %vm964, %v859, 0
        %v1023 = vsel %vm964, %v867, 0
        %v1026 = vsel %vm964, %v875, 0
        %v1029 = vsel %vm964, %v883, 0
        %v1032 = vsel %vm964, %v891, 0
        %v1035 = vsel %vm964, %v899, 0
        %v1038 = vsel %vm964, %v907, 0
        %v1041 = vsel %vm964, %v915, 0
        %v1044 = vsel %vm964, %v923, 0
        %v1047 = vsel %vm964, %v931, 0
        %v1050 = vsel %vm964, %v939, 0
        %v1053 = vsel %vm964, %v947, 0
        %v1056 = vsel %vm964, %v955, 0
        %v1059 = vsel %vm964, %v963, 0
        %vm1061 = vcmask 1043456
        %v1063 = vsel %vm1061, %v702, 0
        %1065 = vmatprep.subr.bf16.mxu0 0
        %1066 = vmatpush1.bf16.msra.mxu0 %v1063
        %1067 = vmatprep.subr.bf16.mxu0 0
        %1068 = vmatpush1.bf16.msra.mxu0 0
        %1069 = vmatprep.subr.bf16.mxu0 0
        %1070 = vmatpush1.bf16.msra.mxu0 0
        %1071 = vmatprep.subr.bf16.mxu0 0
        %1072 = vmatpush1.bf16.msra.mxu0 0
        %1073 = vmatprep.subr.bf16.mxu0 0
        %1074 = vmatpush1.bf16.msra.mxu0 0
        %1075 = vmatprep.subr.bf16.mxu0 0
        %1076 = vmatpush1.bf16.msra.mxu0 0
        %1077 = vmatprep.subr.bf16.mxu0 0
        %1078 = vmatpush1.bf16.msra.mxu0 0
        %1079 = vmatprep.subr.bf16.mxu0 0
        %1080 = vmatpush1.bf16.msra.mxu0 0
        %1081 = vmatprep.subr.bf16.mxu0 0
        %1082 = vmatpush1.bf16.msra.mxu0 0
        %1083 = vmatprep.subr.bf16.mxu0 0
        %1084 = vmatpush1.bf16.msra.mxu0 0
        %1085 = vmatprep.subr.bf16.mxu0 0
        %1086 = vmatpush1.bf16.msra.mxu0 0
        %1087 = vmatprep.subr.bf16.mxu0 0
        %1088 = vmatpush1.bf16.msra.mxu0 0
        %1089 = vmatprep.subr.bf16.mxu0 0
        %1090 = vmatpush1.bf16.msra.mxu0 0
        %1091 = vmatprep.subr.bf16.mxu0 0
        %1092 = vmatpush1.bf16.msra.mxu0 0
        %1093 = vmatprep.subr.bf16.mxu0 0
        %1094 = vmatpush1.bf16.msra.mxu0 0
        %1095 = vmatprep.subr.bf16.mxu0 0
        %1096 = vmatpush1.bf16.msra.mxu0 0
        %1097 = vmatprep.mubr.bf16.mxu0 0
        %1098 = vmatmul.mubr.bf16.gmra.mrb[0].mxu0 %v966
        %v1099 = vpop.f32.mrb[0].mxu0
        %v1100 = vadd.f32 0.0, %v1099
        %v1101 = vpop.f32.mrb[0].mxu0
        %v1102 = vpop.f32.mrb[0].mxu0
        %v1103 = vadd.f32 0.0, %v1102
        %v1104 = vpop.f32.mrb[0].mxu0
        %1105 = vmatprep.mubr.bf16.mxu0 0
        %1106 = vmatmul.mubr.bf16.gmra.mrb[0].mxu0 %v969
        %v1107 = vpop.f32.mrb[0].mxu0
        %v1108 = vadd.f32 0.0, %v1107
        %v1109 = vpop.f32.mrb[0].mxu0
        %v1110 = vpop.f32.mrb[0].mxu0
        %v1111 = vadd.f32 0.0, %v1110
        %v1112 = vpop.f32.mrb[0].mxu0
        %1113 = vmatprep.mubr.bf16.mxu0 0
        %1114 = vmatmul.mubr.bf16.gmra.mrb[0].mxu0 %v972
        %v1115 = vpop.f32.mrb[0].mxu0
        %v1116 = vadd.f32 0.0, %v1115
        %v1117 = vpop.f32.mrb[0].mxu0
        %v1118 = vpop.f32.mrb[0].mxu0
        %v1119 = vadd.f32 0.0, %v1118
        %v1120 = vpop.f32.mrb[0].mxu0
        %1121 = vmatprep.mubr.bf16.mxu0 0
        %1122 = vmatmul.mubr.bf16.gmra.mrb[0].mxu0 %v975
        %v1123 = vpop.f32.mrb[0].mxu0
        %v1124 = vadd.f32 0.0, %v1123
        %v1125 = vpop.f32.mrb[0].mxu0
        %v1126 = vpop.f32.mrb[0].mxu0
        %v1127 = vadd.f32 0.0, %v1126
        %v1128 = vpop.f32.mrb[0].mxu0
        %1129 = vmatprep.mubr.bf16.mxu0 0
        %1130 = vmatmul.mubr.bf16.gmra.mrb[0].mxu0 %v978
        %v1131 = vpop.f32.mrb[0].mxu0
        %v1132 = vadd.f32 0.0, %v1131
        %v1133 = vpop.f32.mrb[0].mxu0
        %v1134 = vpop.f32.mrb[0].mxu0
        %v1135 = vadd.f32 0.0, %v1134
        %v1136 = vpop.f32.mrb[0].mxu0
        %1137 = vmatprep.mubr.bf16.mxu0 0
        %1138 = vmatmul.mubr.bf16.gmra.mrb[0].mxu0 %v981
        %v1139 = vpop.f32.mrb[0].mxu0
        %v1140 = vadd.f32 0.0, %v1139
        %v1141 = vpop.f32.mrb[0].mxu0
        %v1142 = vpop.f32.mrb[0].mxu0
        %v1143 = vadd.f32 0.0, %v1142
        %v1144 = vpop.f32.mrb[0].mxu0
        %1145 = vmatprep.mubr.bf16.mxu0 0
        %1146 = vmatmul.mubr.bf16.gmra.mrb[0].mxu0 %v984
        %v1147 = vpop.f32.mrb[0].mxu0
        %v1148 = vadd.f32 0.0, %v1147
        %v1149 = vpop.f32.mrb[0].mxu0
        %v1150 = vpop.f32.mrb[0].mxu0
        %v1151 = vadd.f32 0.0, %v1150
        %v1152 = vpop.f32.mrb[0].mxu0
        %1153 = vmatprep.mubr.bf16.mxu0 0
        %1154 = vmatmul.mubr.bf16.gmra.mrb[0].mxu0 %v987
        %v1155 = vpop.f32.mrb[0].mxu0
        %v1156 = vadd.f32 0.0, %v1155
        %v1157 = vpop.f32.mrb[0].mxu0
        %v1158 = vpop.f32.mrb[0].mxu0
        %v1159 = vadd.f32 0.0, %v1158
        %v1160 = vpop.f32.mrb[0].mxu0
        %1161 = vmatprep.mubr.bf16.mxu0 0
        %1162 = vmatmul.mubr.bf16.gmra.mrb[0].mxu0 %v990
        %v1163 = vpop.f32.mrb[0].mxu0
        %v1164 = vadd.f32 0.0, %v1163
        %v1165 = vpop.f32.mrb[0].mxu0
        %v1166 = vpop.f32.mrb[0].mxu0
        %v1167 = vadd.f32 0.0, %v1166
        %v1168 = vpop.f32.mrb[0].mxu0
        %1169 = vmatprep.mubr.bf16.mxu0 0
        %1170 = vmatmul.mubr.bf16.gmra.mrb[0].mxu0 %v993
        %v1171 = vpop.f32.mrb[0].mxu0
        %v1172 = vadd.f32 0.0, %v1171
        %v1173 = vpop.f32.mrb[0].mxu0
        %v1174 = vpop.f32.mrb[0].mxu0
        %v1175 = vadd.f32 0.0, %v1174
        %v1176 = vpop.f32.mrb[0].mxu0
        %1177 = vmatprep.mubr.bf16.mxu0 0
        %1178 = vmatmul.mubr.bf16.gmra.mrb[0].mxu0 %v996
        %v1179 = vpop.f32.mrb[0].mxu0
        %v1180 = vadd.f32 0.0, %v1179
        %v1181 = vpop.f32.mrb[0].mxu0
        %v1182 = vpop.f32.mrb[0].mxu0
        %v1183 = vadd.f32 0.0, %v1182
        %v1184 = vpop.f32.mrb[0].mxu0
        %1185 = vmatprep.mubr.bf16.mxu0 0
        %1186 = vmatmul.mubr.bf16.gmra.mrb[0].mxu0 %v999
        %v1187 = vpop.f32.mrb[0].mxu0
        %v1188 = vadd.f32 0.0, %v1187
        %v1189 = vpop.f32.mrb[0].mxu0
        %v1190 = vpop.f32.mrb[0].mxu0
        %v1191 = vadd.f32 0.0, %v1190
        %v1192 = vpop.f32.mrb[0].mxu0
        %1193 = vmatprep.mubr.bf16.mxu0 0
        %1194 = vmatmul.mubr.bf16.gmra.mrb[0].mxu0 %v1002
        %v1195 = vpop.f32.mrb[0].mxu0
        %v1196 = vadd.f32 0.0, %v1195
        %v1197 = vpop.f32.mrb[0].mxu0
        %v1198 = vpop.f32.mrb[0].mxu0
        %v1199 = vadd.f32 0.0, %v1198
        %v1200 = vpop.f32.mrb[0].mxu0
        %1201 = vmatprep.mubr.bf16.mxu0 0
        %1202 = vmatmul.mubr.bf16.gmra.mrb[0].mxu0 %v1005
        %v1203 = vpop.f32.mrb[0].mxu0
        %v1204 = vadd.f32 0.0, %v1203
        %v1205 = vpop.f32.mrb[0].mxu0
        %v1206 = vpop.f32.mrb[0].mxu0
        %v1207 = vadd.f32 0.0, %v1206
        %v1208 = vpop.f32.mrb[0].mxu0
        %1209 = vmatprep.mubr.bf16.mxu0 0
        %1210 = vmatmul.mubr.bf16.gmra.mrb[0].mxu0 %v1008
        %v1211 = vpop.f32.mrb[0].mxu0
        %v1212 = vadd.f32 0.0, %v1211
        %v1213 = vpop.f32.mrb[0].mxu0
        %v1214 = vpop.f32.mrb[0].mxu0
        %v1215 = vadd.f32 0.0, %v1214
        %v1216 = vpop.f32.mrb[0].mxu0
        %1217 = vmatprep.mubr.bf16.mxu0 0
        %1218 = vmatmul.mubr.bf16.gmra.mrb[0].mxu0 %v1011
        %v1219 = vpop.f32.mrb[0].mxu0
        %v1220 = vadd.f32 0.0, %v1219
        %v1221 = vpop.f32.mrb[0].mxu0
        %v1222 = vpop.f32.mrb[0].mxu0
        %v1223 = vadd.f32 0.0, %v1222
        %v1224 = vpop.f32.mrb[0].mxu0
        %1225 = vmatprep.mubr.bf16.mxu0 0
        %1226 = vmatmul.mubr.bf16.gmra.mrb[0].mxu0 %v1014
        %v1227 = vpop.f32.mrb[0].mxu0
        %v1228 = vadd.f32 0.0, %v1227
        %v1229 = vpop.f32.mrb[0].mxu0
        %v1230 = vpop.f32.mrb[0].mxu0
        %v1231 = vadd.f32 0.0, %v1230
        %v1232 = vpop.f32.mrb[0].mxu0
        %1233 = vmatprep.mubr.bf16.mxu0 0
        %1234 = vmatmul.mubr.bf16.gmra.mrb[0].mxu0 %v1017
        %v1235 = vpop.f32.mrb[0].mxu0
        %v1236 = vadd.f32 0.0, %v1235
        %v1237 = vpop.f32.mrb[0].mxu0
        %v1238 = vpop.f32.mrb[0].mxu0
        %v1239 = vadd.f32 0.0, %v1238
        %v1240 = vpop.f32.mrb[0].mxu0
        %1241 = vmatprep.mubr.bf16.mxu0 0
        %1242 = vmatmul.mubr.bf16.gmra.mrb[0].mxu0 %v1020
        %v1243 = vpop.f32.mrb[0].mxu0
        %v1244 = vadd.f32 0.0, %v1243
        %v1245 = vpop.f32.mrb[0].mxu0
        %v1246 = vpop.f32.mrb[0].mxu0
        %v1247 = vadd.f32 0.0, %v1246
        %v1248 = vpop.f32.mrb[0].mxu0
        %1249 = vmatprep.mubr.bf16.mxu0 0
        %1250 = vmatmul.mubr.bf16.gmra.mrb[0].mxu0 %v1023
        %v1251 = vpop.f32.mrb[0].mxu0
        %v1252 = vadd.f32 0.0, %v1251
        %v1253 = vpop.f32.mrb[0].mxu0
        %v1254 = vpop.f32.mrb[0].mxu0
        %v1255 = vadd.f32 0.0, %v1254
        %v1256 = vpop.f32.mrb[0].mxu0
        %1257 = vmatprep.mubr.bf16.mxu0 0
        %1258 = vmatmul.mubr.bf16.gmra.mrb[0].mxu0 %v1026
        %v1259 = vpop.f32.mrb[0].mxu0
        %v1260 = vadd.f32 0.0, %v1259
        %v1261 = vpop.f32.mrb[0].mxu0
        %v1262 = vpop.f32.mrb[0].mxu0
        %v1263 = vadd.f32 0.0, %v1262
        %v1264 = vpop.f32.mrb[0].mxu0
        %1265 = vmatprep.mubr.bf16.mxu0 0
        %1266 = vmatmul.mubr.bf16.gmra.mrb[0].mxu0 %v1029
        %v1267 = vpop.f32.mrb[0].mxu0
        %v1268 = vadd.f32 0.0, %v1267
        %v1269 = vpop.f32.mrb[0].mxu0
        %v1270 = vpop.f32.mrb[0].mxu0
        %v1271 = vadd.f32 0.0, %v1270
        %v1272 = vpop.f32.mrb[0].mxu0
        %1273 = vmatprep.mubr.bf16.mxu0 0
        %1274 = vmatmul.mubr.bf16.gmra.mrb[0].mxu0 %v1032
        %v1275 = vpop.f32.mrb[0].mxu0
        %v1276 = vadd.f32 0.0, %v1275
        %v1277 = vpop.f32.mrb[0].mxu0
        %v1278 = vpop.f32.mrb[0].mxu0
        %v1279 = vadd.f32 0.0, %v1278
        %v1280 = vpop.f32.mrb[0].mxu0
        %1281 = vmatprep.mubr.bf16.mxu0 0
        %1282 = vmatmul.mubr.bf16.gmra.mrb[0].mxu0 %v1035
        %v1283 = vpop.f32.mrb[0].mxu0
        %v1284 = vadd.f32 0.0, %v1283
        %v1285 = vpop.f32.mrb[0].mxu0
        %v1286 = vpop.f32.mrb[0].mxu0
        %v1287 = vadd.f32 0.0, %v1286
        %v1288 = vpop.f32.mrb[0].mxu0
        %1289 = vmatprep.mubr.bf16.mxu0 0
        %1290 = vmatmul.mubr.bf16.gmra.mrb[0].mxu0 %v1038
        %v1291 = vpop.f32.mrb[0].mxu0
        %v1292 = vadd.f32 0.0, %v1291
        %v1293 = vpop.f32.mrb[0].mxu0
        %v1294 = vpop.f32.mrb[0].mxu0
        %v1295 = vadd.f32 0.0, %v1294
        %v1296 = vpop.f32.mrb[0].mxu0
        %1297 = vmatprep.mubr.bf16.mxu0 0
        %1298 = vmatmul.mubr.bf16.gmra.mrb[0].mxu0 %v1041
        %v1299 = vpop.f32.mrb[0].mxu0
        %v1300 = vadd.f32 0.0, %v1299
        %v1301 = vpop.f32.mrb[0].mxu0
        %v1302 = vpop.f32.mrb[0].mxu0
        %v1303 = vadd.f32 0.0, %v1302
        %v1304 = vpop.f32.mrb[0].mxu0
        %1305 = vmatprep.mubr.bf16.mxu0 0
        %1306 = vmatmul.mubr.bf16.gmra.mrb[0].mxu0 %v1044
        %v1307 = vpop.f32.mrb[0].mxu0
        %v1308 = vadd.f32 0.0, %v1307
        %v1309 = vpop.f32.mrb[0].mxu0
        %v1310 = vpop.f32.mrb[0].mxu0
        %v1311 = vadd.f32 0.0, %v1310
        %v1312 = vpop.f32.mrb[0].mxu0
        %1313 = vmatprep.mubr.bf16.mxu0 0
        %1314 = vmatmul.mubr.bf16.gmra.mrb[0].mxu0 %v1047
        %v1315 = vpop.f32.mrb[0].mxu0
        %v1316 = vadd.f32 0.0, %v1315
        %v1317 = vpop.f32.mrb[0].mxu0
        %v1318 = vpop.f32.mrb[0].mxu0
        %v1319 = vadd.f32 0.0, %v1318
        %v1320 = vpop.f32.mrb[0].mxu0
        %1321 = vmatprep.mubr.bf16.mxu0 0
        %1322 = vmatmul.mubr.bf16.gmra.mrb[0].mxu0 %v1050
        %v1323 = vpop.f32.mrb[0].mxu0
        %v1324 = vadd.f32 0.0, %v1323
        %v1325 = vpop.f32.mrb[0].mxu0
        %v1326 = vpop.f32.mrb[0].mxu0
        %v1327 = vadd.f32 0.0, %v1326
        %v1328 = vpop.f32.mrb[0].mxu0
        %1329 = vmatprep.mubr.bf16.mxu0 0
        %1330 = vmatmul.mubr.bf16.gmra.mrb[0].mxu0 %v1053
        %v1331 = vpop.f32.mrb[0].mxu0
        %v1332 = vadd.f32 0.0, %v1331
        %v1333 = vpop.f32.mrb[0].mxu0
        %v1334 = vpop.f32.mrb[0].mxu0
        %v1335 = vadd.f32 0.0, %v1334
        %v1336 = vpop.f32.mrb[0].mxu0
        %1337 = vmatprep.mubr.bf16.mxu0 0
        %1338 = vmatmul.mubr.bf16.gmra.mrb[0].mxu0 %v1056
        %v1339 = vpop.f32.mrb[0].mxu0
        %v1340 = vadd.f32 0.0, %v1339
        %v1341 = vpop.f32.mrb[0].mxu0
        %v1342 = vpop.f32.mrb[0].mxu0
        %v1343 = vadd.f32 0.0, %v1342
        %v1344 = vpop.f32.mrb[0].mxu0
        %1345 = vmatprep.mubr.bf16.mxu0 0
        %1346 = vmatmul.mubr.bf16.gmra.mrb[0].mxu0 %v1059
        %v1347 = vpop.f32.mrb[0].mxu0
        %v1348 = vadd.f32 0.0, %v1347
        %v1349 = vpop.f32.mrb[0].mxu0
        %v1350 = vpop.f32.mrb[0].mxu0
        %v1351 = vadd.f32 0.0, %v1350
        %v1352 = vpop.f32.mrb[0].mxu0
        %1353 = vdwg.mxu0
        %v1354 = vsel %vm964, %v667, 0
        %v1356 = vsel %vm964, %v668, 0
        %v1358 = vsel %vm964, %v669, 0
        %v1360 = vsel %vm964, %v670, 0
        %v1362 = vsel %vm964, %v671, 0
        %v1364 = vsel %vm964, %v672, 0
        %v1366 = vsel %vm964, %v673, 0
        %v1368 = vsel %vm964, %v674, 0
        %v1370 = vsel %vm964, %v675, 0
        %v1372 = vsel %vm964, %v676, 0
        %v1374 = vsel %vm964, %v677, 0
        %v1376 = vsel %vm964, %v678, 0
        %v1378 = vsel %vm964, %v679, 0
        %v1380 = vsel %vm964, %v680, 0
        %v1382 = vsel %vm964, %v681, 0
        %v1384 = vsel %vm964, %v682, 0
        %v1386 = vsel %vm964, %v683, 0
        %v1388 = vsel %vm964, %v684, 0
        %v1390 = vsel %vm964, %v685, 0
        %v1392 = vsel %vm964, %v686, 0
        %v1394 = vsel %vm964, %v687, 0
        %v1396 = vsel %vm964, %v688, 0
        %v1398 = vsel %vm964, %v689, 0
        %v1400 = vsel %vm964, %v690, 0
        %v1402 = vsel %vm964, %v691, 0
        %v1404 = vsel %vm964, %v692, 0
        %v1406 = vsel %vm964, %v693, 0
        %v1408 = vsel %vm964, %v694, 0
        %v1410 = vsel %vm964, %v695, 0
        %v1412 = vsel %vm964, %v696, 0
        %v1414 = vsel %vm964, %v697, 0
        %v1416 = vsel %vm964, %v698, 0
        %v1419 = vsel %vm1061, %v699, 0
        %1421 = vmatprep.subr.bf16.mxu0 0
        %1422 = vmatpush1.bf16.msra.mxu0 %v1419
        %1423 = vmatprep.subr.bf16.mxu0 0
        %1424 = vmatpush1.bf16.msra.mxu0 0
        %1425 = vmatprep.subr.bf16.mxu0 0
        %1426 = vmatpush1.bf16.msra.mxu0 0
        %1427 = vmatprep.subr.bf16.mxu0 0
        %1428 = vmatpush1.bf16.msra.mxu0 0
        %1429 = vmatprep.subr.bf16.mxu0 0
        %1430 = vmatpush1.bf16.msra.mxu0 0
        %1431 = vmatprep.subr.bf16.mxu0 0
        %1432 = vmatpush1.bf16.msra.mxu0 0
        %1433 = vmatprep.subr.bf16.mxu0 0
        %1434 = vmatpush1.bf16.msra.mxu0 0
        %1435 = vmatprep.subr.bf16.mxu0 0
        %1436 = vmatpush1.bf16.msra.mxu0 0
        %1437 = vmatprep.subr.bf16.mxu0 0
        %1438 = vmatpush1.bf16.msra.mxu0 0
        %1439 = vmatprep.subr.bf16.mxu0 0
        %1440 = vmatpush1.bf16.msra.mxu0 0
        %1441 = vmatprep.subr.bf16.mxu0 0
        %1442 = vmatpush1.bf16.msra.mxu0 0
        %1443 = vmatprep.subr.bf16.mxu0 0
        %1444 = vmatpush1.bf16.msra.mxu0 0
        %1445 = vmatprep.subr.bf16.mxu0 0
        %1446 = vmatpush1.bf16.msra.mxu0 0
        %1447 = vmatprep.subr.bf16.mxu0 0
        %1448 = vmatpush1.bf16.msra.mxu0 0
        %1449 = vmatprep.subr.bf16.mxu0 0
        %1450 = vmatpush1.bf16.msra.mxu0 0
        %1451 = vmatprep.subr.bf16.mxu0 0
        %1452 = vmatpush1.bf16.msra.mxu0 0
        %1453 = vmatprep.mubr.bf16.mxu0 0
        %1454 = vmatmul.mubr.bf16.gmra.mrb[0].mxu0 %v1354
        %v1455 = vpop.f32.mrb[0].mxu0
        %v1456 = vadd.f32 %v1100, %v1455
        %v1457 = vpop.f32.mrb[0].mxu0
        %v1458 = vpop.f32.mrb[0].mxu0
        %v1459 = vadd.f32 %v1103, %v1458
        %v1460 = vpop.f32.mrb[0].mxu0
        %1461 = vmatprep.mubr.bf16.mxu0 0
        %1462 = vmatmul.mubr.bf16.gmra.mrb[0].mxu0 %v1356
        %v1463 = vpop.f32.mrb[0].mxu0
        %v1464 = vadd.f32 %v1108, %v1463
        %v1465 = vpop.f32.mrb[0].mxu0
        %v1466 = vpop.f32.mrb[0].mxu0
        %v1467 = vadd.f32 %v1111, %v1466
        %v1468 = vpop.f32.mrb[0].mxu0
        %1469 = vmatprep.mubr.bf16.mxu0 0
        %1470 = vmatmul.mubr.bf16.gmra.mrb[0].mxu0 %v1358
        %v1471 = vpop.f32.mrb[0].mxu0
        %v1472 = vadd.f32 %v1116, %v1471
        %v1473 = vpop.f32.mrb[0].mxu0
        %v1474 = vpop.f32.mrb[0].mxu0
        %v1475 = vadd.f32 %v1119, %v1474
        %v1476 = vpop.f32.mrb[0].mxu0
        %1477 = vmatprep.mubr.bf16.mxu0 0
        %1478 = vmatmul.mubr.bf16.gmra.mrb[0].mxu0 %v1360
        %v1479 = vpop.f32.mrb[0].mxu0
        %v1480 = vadd.f32 %v1124, %v1479
        %v1481 = vpop.f32.mrb[0].mxu0
        %v1482 = vpop.f32.mrb[0].mxu0
        %v1483 = vadd.f32 %v1127, %v1482
        %v1484 = vpop.f32.mrb[0].mxu0
        %1485 = vmatprep.mubr.bf16.mxu0 0
        %1486 = vmatmul.mubr.bf16.gmra.mrb[0].mxu0 %v1362
        %v1487 = vpop.f32.mrb[0].mxu0
        %v1488 = vadd.f32 %v1132, %v1487
        %v1489 = vpop.f32.mrb[0].mxu0
        %v1490 = vpop.f32.mrb[0].mxu0
        %v1491 = vadd.f32 %v1135, %v1490
        %v1492 = vpop.f32.mrb[0].mxu0
        %1493 = vmatprep.mubr.bf16.mxu0 0
        %1494 = vmatmul.mubr.bf16.gmra.mrb[0].mxu0 %v1364
        %v1495 = vpop.f32.mrb[0].mxu0
        %v1496 = vadd.f32 %v1140, %v1495
        %v1497 = vpop.f32.mrb[0].mxu0
        %v1498 = vpop.f32.mrb[0].mxu0
        %v1499 = vadd.f32 %v1143, %v1498
        %v1500 = vpop.f32.mrb[0].mxu0
        %1501 = vmatprep.mubr.bf16.mxu0 0
        %1502 = vmatmul.mubr.bf16.gmra.mrb[0].mxu0 %v1366
        %v1503 = vpop.f32.mrb[0].mxu0
        %v1504 = vadd.f32 %v1148, %v1503
        %v1505 = vpop.f32.mrb[0].mxu0
        %v1506 = vpop.f32.mrb[0].mxu0
        %v1507 = vadd.f32 %v1151, %v1506
        %v1508 = vpop.f32.mrb[0].mxu0
        %1509 = vmatprep.mubr.bf16.mxu0 0
        %1510 = vmatmul.mubr.bf16.gmra.mrb[0].mxu0 %v1368
        %v1511 = vpop.f32.mrb[0].mxu0
        %v1512 = vadd.f32 %v1156, %v1511
        %v1513 = vpop.f32.mrb[0].mxu0
        %v1514 = vpop.f32.mrb[0].mxu0
        %v1515 = vadd.f32 %v1159, %v1514
        %v1516 = vpop.f32.mrb[0].mxu0
        %1517 = vmatprep.mubr.bf16.mxu0 0
        %1518 = vmatmul.mubr.bf16.gmra.mrb[0].mxu0 %v1370
        %v1519 = vpop.f32.mrb[0].mxu0
        %v1520 = vadd.f32 %v1164, %v1519
        %v1521 = vpop.f32.mrb[0].mxu0
        %v1522 = vpop.f32.mrb[0].mxu0
        %v1523 = vadd.f32 %v1167, %v1522
        %v1524 = vpop.f32.mrb[0].mxu0
        %1525 = vmatprep.mubr.bf16.mxu0 0
        %1526 = vmatmul.mubr.bf16.gmra.mrb[0].mxu0 %v1372
        %v1527 = vpop.f32.mrb[0].mxu0
        %v1528 = vadd.f32 %v1172, %v1527
        %v1529 = vpop.f32.mrb[0].mxu0
        %v1530 = vpop.f32.mrb[0].mxu0
        %v1531 = vadd.f32 %v1175, %v1530
        %v1532 = vpop.f32.mrb[0].mxu0
        %1533 = vmatprep.mubr.bf16.mxu0 0
        %1534 = vmatmul.mubr.bf16.gmra.mrb[0].mxu0 %v1374
        %v1535 = vpop.f32.mrb[0].mxu0
        %v1536 = vadd.f32 %v1180, %v1535
        %v1537 = vpop.f32.mrb[0].mxu0
        %v1538 = vpop.f32.mrb[0].mxu0
        %v1539 = vadd.f32 %v1183, %v1538
        %v1540 = vpop.f32.mrb[0].mxu0
        %1541 = vmatprep.mubr.bf16.mxu0 0
        %1542 = vmatmul.mubr.bf16.gmra.mrb[0].mxu0 %v1376
        %v1543 = vpop.f32.mrb[0].mxu0
        %v1544 = vadd.f32 %v1188, %v1543
        %v1545 = vpop.f32.mrb[0].mxu0
        %v1546 = vpop.f32.mrb[0].mxu0
        %v1547 = vadd.f32 %v1191, %v1546
        %v1548 = vpop.f32.mrb[0].mxu0
        %1549 = vmatprep.mubr.bf16.mxu0 0
        %1550 = vmatmul.mubr.bf16.gmra.mrb[0].mxu0 %v1378
        %v1551 = vpop.f32.mrb[0].mxu0
        %v1552 = vadd.f32 %v1196, %v1551
        %v1553 = vpop.f32.mrb[0].mxu0
        %v1554 = vpop.f32.mrb[0].mxu0
        %v1555 = vadd.f32 %v1199, %v1554
        %v1556 = vpop.f32.mrb[0].mxu0
        %1557 = vmatprep.mubr.bf16.mxu0 0
        %1558 = vmatmul.mubr.bf16.gmra.mrb[0].mxu0 %v1380
        %v1559 = vpop.f32.mrb[0].mxu0
        %v1560 = vadd.f32 %v1204, %v1559
        %v1561 = vpop.f32.mrb[0].mxu0
        %v1562 = vpop.f32.mrb[0].mxu0
        %v1563 = vadd.f32 %v1207, %v1562
        %v1564 = vpop.f32.mrb[0].mxu0
        %1565 = vmatprep.mubr.bf16.mxu0 0
        %1566 = vmatmul.mubr.bf16.gmra.mrb[0].mxu0 %v1382
        %v1567 = vpop.f32.mrb[0].mxu0
        %v1568 = vadd.f32 %v1212, %v1567
        %v1569 = vpop.f32.mrb[0].mxu0
        %v1570 = vpop.f32.mrb[0].mxu0
        %v1571 = vadd.f32 %v1215, %v1570
        %v1572 = vpop.f32.mrb[0].mxu0
        %1573 = vmatprep.mubr.bf16.mxu0 0
        %1574 = vmatmul.mubr.bf16.gmra.mrb[0].mxu0 %v1384
        %v1575 = vpop.f32.mrb[0].mxu0
        %v1576 = vadd.f32 %v1220, %v1575
        %v1577 = vpop.f32.mrb[0].mxu0
        %v1578 = vpop.f32.mrb[0].mxu0
        %v1579 = vadd.f32 %v1223, %v1578
        %v1580 = vpop.f32.mrb[0].mxu0
        %1581 = vmatprep.mubr.bf16.mxu0 0
        %1582 = vmatmul.mubr.bf16.gmra.mrb[0].mxu0 %v1386
        %v1583 = vpop.f32.mrb[0].mxu0
        %v1584 = vadd.f32 %v1228, %v1583
        %v1585 = vpop.f32.mrb[0].mxu0
        %v1586 = vpop.f32.mrb[0].mxu0
        %v1587 = vadd.f32 %v1231, %v1586
        %v1588 = vpop.f32.mrb[0].mxu0
        %1589 = vmatprep.mubr.bf16.mxu0 0
        %1590 = vmatmul.mubr.bf16.gmra.mrb[0].mxu0 %v1388
        %v1591 = vpop.f32.mrb[0].mxu0
        %v1592 = vadd.f32 %v1236, %v1591
        %v1593 = vpop.f32.mrb[0].mxu0
        %v1594 = vpop.f32.mrb[0].mxu0
        %v1595 = vadd.f32 %v1239, %v1594
        %v1596 = vpop.f32.mrb[0].mxu0
        %1597 = vmatprep.mubr.bf16.mxu0 0
        %1598 = vmatmul.mubr.bf16.gmra.mrb[0].mxu0 %v1390
        %v1599 = vpop.f32.mrb[0].mxu0
        %v1600 = vadd.f32 %v1244, %v1599
        %v1601 = vpop.f32.mrb[0].mxu0
        %v1602 = vpop.f32.mrb[0].mxu0
        %v1603 = vadd.f32 %v1247, %v1602
        %v1604 = vpop.f32.mrb[0].mxu0
        %1605 = vmatprep.mubr.bf16.mxu0 0
        %1606 = vmatmul.mubr.bf16.gmra.mrb[0].mxu0 %v1392
        %v1607 = vpop.f32.mrb[0].mxu0
        %v1608 = vadd.f32 %v1252, %v1607
        %v1609 = vpop.f32.mrb[0].mxu0
        %v1610 = vpop.f32.mrb[0].mxu0
        %v1611 = vadd.f32 %v1255, %v1610
        %v1612 = vpop.f32.mrb[0].mxu0
        %1613 = vmatprep.mubr.bf16.mxu0 0
        %1614 = vmatmul.mubr.bf16.gmra.mrb[0].mxu0 %v1394
        %v1615 = vpop.f32.mrb[0].mxu0
        %v1616 = vadd.f32 %v1260, %v1615
        %v1617 = vpop.f32.mrb[0].mxu0
        %v1618 = vpop.f32.mrb[0].mxu0
        %v1619 = vadd.f32 %v1263, %v1618
        %v1620 = vpop.f32.mrb[0].mxu0
        %1621 = vmatprep.mubr.bf16.mxu0 0
        %1622 = vmatmul.mubr.bf16.gmra.mrb[0].mxu0 %v1396
        %v1623 = vpop.f32.mrb[0].mxu0
        %v1624 = vadd.f32 %v1268, %v1623
        %v1625 = vpop.f32.mrb[0].mxu0
        %v1626 = vpop.f32.mrb[0].mxu0
        %v1627 = vadd.f32 %v1271, %v1626
        %v1628 = vpop.f32.mrb[0].mxu0
        %1629 = vmatprep.mubr.bf16.mxu0 0
        %1630 = vmatmul.mubr.bf16.gmra.mrb[0].mxu0 %v1398
        %v1631 = vpop.f32.mrb[0].mxu0
        %v1632 = vadd.f32 %v1276, %v1631
        %v1633 = vpop.f32.mrb[0].mxu0
        %v1634 = vpop.f32.mrb[0].mxu0
        %v1635 = vadd.f32 %v1279, %v1634
        %v1636 = vpop.f32.mrb[0].mxu0
        %1637 = vmatprep.mubr.bf16.mxu0 0
        %1638 = vmatmul.mubr.bf16.gmra.mrb[0].mxu0 %v1400
        %v1639 = vpop.f32.mrb[0].mxu0
        %v1640 = vadd.f32 %v1284, %v1639
        %v1641 = vpop.f32.mrb[0].mxu0
        %v1642 = vpop.f32.mrb[0].mxu0
        %v1643 = vadd.f32 %v1287, %v1642
        %v1644 = vpop.f32.mrb[0].mxu0
        %1645 = vmatprep.mubr.bf16.mxu0 0
        %1646 = vmatmul.mubr.bf16.gmra.mrb[0].mxu0 %v1402
        %v1647 = vpop.f32.mrb[0].mxu0
        %v1648 = vadd.f32 %v1292, %v1647
        %v1649 = vpop.f32.mrb[0].mxu0
        %v1650 = vpop.f32.mrb[0].mxu0
        %v1651 = vadd.f32 %v1295, %v1650
        %v1652 = vpop.f32.mrb[0].mxu0
        %1653 = vmatprep.mubr.bf16.mxu0 0
        %1654 = vmatmul.mubr.bf16.gmra.mrb[0].mxu0 %v1404
        %v1655 = vpop.f32.mrb[0].mxu0
        %v1656 = vadd.f32 %v1300, %v1655
        %v1657 = vpop.f32.mrb[0].mxu0
        %v1658 = vpop.f32.mrb[0].mxu0
        %v1659 = vadd.f32 %v1303, %v1658
        %v1660 = vpop.f32.mrb[0].mxu0
        %1661 = vmatprep.mubr.bf16.mxu0 0
        %1662 = vmatmul.mubr.bf16.gmra.mrb[0].mxu0 %v1406
        %v1663 = vpop.f32.mrb[0].mxu0
        %v1664 = vadd.f32 %v1308, %v1663
        %v1665 = vpop.f32.mrb[0].mxu0
        %v1666 = vpop.f32.mrb[0].mxu0
        %v1667 = vadd.f32 %v1311, %v1666
        %v1668 = vpop.f32.mrb[0].mxu0
        %1669 = vmatprep.mubr.bf16.mxu0 0
        %1670 = vmatmul.mubr.bf16.gmra.mrb[0].mxu0 %v1408
        %v1671 = vpop.f32.mrb[0].mxu0
        %v1672 = vadd.f32 %v1316, %v1671
        %v1673 = vpop.f32.mrb[0].mxu0
        %v1674 = vpop.f32.mrb[0].mxu0
        %v1675 = vadd.f32 %v1319, %v1674
        %v1676 = vpop.f32.mrb[0].mxu0
        %1677 = vmatprep.mubr.bf16.mxu0 0
        %1678 = vmatmul.mubr.bf16.gmra.mrb[0].mxu0 %v1410
        %v1679 = vpop.f32.mrb[0].mxu0
        %v1680 = vadd.f32 %v1324, %v1679
        %v1681 = vpop.f32.mrb[0].mxu0
        %v1682 = vpop.f32.mrb[0].mxu0
        %v1683 = vadd.f32 %v1327, %v1682
        %v1684 = vpop.f32.mrb[0].mxu0
        %1685 = vmatprep.mubr.bf16.mxu0 0
        %1686 = vmatmul.mubr.bf16.gmra.mrb[0].mxu0 %v1412
        %v1687 = vpop.f32.mrb[0].mxu0
        %v1688 = vadd.f32 %v1332, %v1687
        %v1689 = vpop.f32.mrb[0].mxu0
        %v1690 = vpop.f32.mrb[0].mxu0
        %v1691 = vadd.f32 %v1335, %v1690
        %v1692 = vpop.f32.mrb[0].mxu0
        %1693 = vmatprep.mubr.bf16.mxu0 0
        %1694 = vmatmul.mubr.bf16.gmra.mrb[0].mxu0 %v1414
        %v1695 = vpop.f32.mrb[0].mxu0
        %v1696 = vadd.f32 %v1340, %v1695
        %v1697 = vpop.f32.mrb[0].mxu0
        %v1698 = vpop.f32.mrb[0].mxu0
        %v1699 = vadd.f32 %v1343, %v1698
        %v1700 = vpop.f32.mrb[0].mxu0
        %1701 = vmatprep.mubr.bf16.mxu0 0
        %1702 = vmatmul.mubr.bf16.gmra.mrb[0].mxu0 %v1416
        %v1703 = vpop.f32.mrb[0].mxu0
        %v1704 = vadd.f32 %v1348, %v1703
        %v1705 = vpop.f32.mrb[0].mxu0
        %v1706 = vpop.f32.mrb[0].mxu0
        %v1707 = vadd.f32 %v1351, %v1706
        %v1708 = vpop.f32.mrb[0].mxu0
        %1709 = vdwg.mxu0
        %s1710 = scalar_lea.vmem %s3, 8
        %v1711 = vld [vmem:[%s1710] sm:$0xf]
        %vm1745 = vcmask 1046528
        %v1746 = vrot.slane %v667, 1
        %v1747 = vrot.slane %v668, 1
        %v1748 = vsel %vm1745, %v1746, %v1747
        %v1749 = vrot.slane %v669, 1
        %v1750 = vsel %vm1745, %v1747, %v1749
        %v1751 = vrot.slane %v670, 1
        %v1752 = vsel %vm1745, %v1749, %v1751
        %v1753 = vrot.slane %v671, 1
        %v1754 = vsel %vm1745, %v1751, %v1753
        %v1755 = vrot.slane %v672, 1
        %v1756 = vsel %vm1745, %v1753, %v1755
        %v1757 = vrot.slane %v673, 1
        %v1758 = vsel %vm1745, %v1755, %v1757
        %v1759 = vrot.slane %v674, 1
        %v1760 = vsel %vm1745, %v1757, %v1759
        %v1761 = vrot.slane %v675, 1
        %v1762 = vsel %vm1745, %v1759, %v1761
        %v1763 = vrot.slane %v676, 1
        %v1764 = vsel %vm1745, %v1761, %v1763
        %v1765 = vrot.slane %v677, 1
        %v1766 = vsel %vm1745, %v1763, %v1765
        %v1767 = vrot.slane %v678, 1
        %v1768 = vsel %vm1745, %v1765, %v1767
        %v1769 = vrot.slane %v679, 1
        %v1770 = vsel %vm1745, %v1767, %v1769
        %v1771 = vrot.slane %v680, 1
        %v1772 = vsel %vm1745, %v1769, %v1771
        %v1773 = vrot.slane %v681, 1
        %v1774 = vsel %vm1745, %v1771, %v1773
        %v1775 = vrot.slane %v682, 1
        %v1776 = vsel %vm1745, %v1773, %v1775
        %v1777 = vrot.slane %v683, 1
        %v1778 = vsel %vm1745, %v1775, %v1777
        %v1779 = vrot.slane %v684, 1
        %v1780 = vsel %vm1745, %v1777, %v1779
        %v1781 = vrot.slane %v685, 1
        %v1782 = vsel %vm1745, %v1779, %v1781
        %v1783 = vrot.slane %v686, 1
        %v1784 = vsel %vm1745, %v1781, %v1783
        %v1785 = vrot.slane %v687, 1
        %v1786 = vsel %vm1745, %v1783, %v1785
        %v1787 = vrot.slane %v688, 1
        %v1788 = vsel %vm1745, %v1785, %v1787
        %v1789 = vrot.slane %v689, 1
        %v1790 = vsel %vm1745, %v1787, %v1789
        %v1791 = vrot.slane %v690, 1
        %v1792 = vsel %vm1745, %v1789, %v1791
        %v1793 = vrot.slane %v691, 1
        %v1794 = vsel %vm1745, %v1791, %v1793
        %v1795 = vrot.slane %v692, 1
        %v1796 = vsel %vm1745, %v1793, %v1795
        %v1797 = vrot.slane %v693, 1
        %v1798 = vsel %vm1745, %v1795, %v1797
        %v1799 = vrot.slane %v694, 1
        %v1800 = vsel %vm1745, %v1797, %v1799
        %v1801 = vrot.slane %v695, 1
        %v1802 = vsel %vm1745, %v1799, %v1801
        %v1803 = vrot.slane %v696, 1
        %v1804 = vsel %vm1745, %v1801, %v1803
        %v1805 = vrot.slane %v697, 1
        %v1806 = vsel %vm1745, %v1803, %v1805
        %v1807 = vrot.slane %v698, 1
        %v1808 = vsel %vm1745, %v1805, %v1807
        %v1809 = vrot.slane %v700, 1
        %v1810 = vsel %vm1745, %v1807, %v1809
        %v1812 = vsel %vm964, %v1748, 0
        %v1815 = vsel %vm964, %v1750, 0
        %v1818 = vsel %vm964, %v1752, 0
        %v1821 = vsel %vm964, %v1754, 0
        %v1824 = vsel %vm964, %v1756, 0
        %v1827 = vsel %vm964, %v1758, 0
        %v1830 = vsel %vm964, %v1760, 0
        %v1833 = vsel %vm964, %v1762, 0
        %v1836 = vsel %vm964, %v1764, 0
        %v1839 = vsel %vm964, %v1766, 0
        %v1842 = vsel %vm964, %v1768, 0
        %v1845 = vsel %vm964, %v1770, 0
        %v1848 = vsel %vm964, %v1772, 0
        %v1851 = vsel %vm964, %v1774, 0
        %v1854 = vsel %vm964, %v1776, 0
        %v1857 = vsel %vm964, %v1778, 0
        %v1860 = vsel %vm964, %v1780, 0
        %v1863 = vsel %vm964, %v1782, 0
        %v1866 = vsel %vm964, %v1784, 0
        %v1869 = vsel %vm964, %v1786, 0
        %v1872 = vsel %vm964, %v1788, 0
        %v1875 = vsel %vm964, %v1790, 0
        %v1878 = vsel %vm964, %v1792, 0
        %v1881 = vsel %vm964, %v1794, 0
        %v1884 = vsel %vm964, %v1796, 0
        %v1887 = vsel %vm964, %v1798, 0
        %v1890 = vsel %vm964, %v1800, 0
        %v1893 = vsel %vm964, %v1802, 0
        %v1896 = vsel %vm964, %v1804, 0
        %v1899 = vsel %vm964, %v1806, 0
        %v1902 = vsel %vm964, %v1808, 0
        %v1905 = vsel %vm964, %v1810, 0
        %v1908 = vsel %vm1061, %v1711, 0
        %1910 = vmatprep.subr.bf16.mxu0 0
        %1911 = vmatpush1.bf16.msra.mxu0 %v1908
        %1912 = vmatprep.subr.bf16.mxu0 0
        %1913 = vmatpush1.bf16.msra.mxu0 0
        %1914 = vmatprep.subr.bf16.mxu0 0
        %1915 = vmatpush1.bf16.msra.mxu0 0
        %1916 = vmatprep.subr.bf16.mxu0 0
        %1917 = vmatpush1.bf16.msra.mxu0 0
        %1918 = vmatprep.subr.bf16.mxu0 0
        %1919 = vmatpush1.bf16.msra.mxu0 0
        %1920 = vmatprep.subr.bf16.mxu0 0
        %1921 = vmatpush1.bf16.msra.mxu0 0
        %1922 = vmatprep.subr.bf16.mxu0 0
        %1923 = vmatpush1.bf16.msra.mxu0 0
        %1924 = vmatprep.subr.bf16.mxu0 0
        %1925 = vmatpush1.bf16.msra.mxu0 0
        %1926 = vmatprep.subr.bf16.mxu0 0
        %1927 = vmatpush1.bf16.msra.mxu0 0
        %1928 = vmatprep.subr.bf16.mxu0 0
        %1929 = vmatpush1.bf16.msra.mxu0 0
        %1930 = vmatprep.subr.bf16.mxu0 0
        %1931 = vmatpush1.bf16.msra.mxu0 0
        %1932 = vmatprep.subr.bf16.mxu0 0
        %1933 = vmatpush1.bf16.msra.mxu0 0
        %1934 = vmatprep.subr.bf16.mxu0 0
        %1935 = vmatpush1.bf16.msra.mxu0 0
        %1936 = vmatprep.subr.bf16.mxu0 0
        %1937 = vmatpush1.bf16.msra.mxu0 0
        %1938 = vmatprep.subr.bf16.mxu0 0
        %1939 = vmatpush1.bf16.msra.mxu0 0
        %1940 = vmatprep.subr.bf16.mxu0 0
        %1941 = vmatpush1.bf16.msra.mxu0 0
        %1942 = vmatprep.mubr.bf16.mxu0 0
        %1943 = vmatmul.mubr.bf16.gmra.mrb[0].mxu0 %v1812
        %v1944 = vpop.f32.mrb[0].mxu0
        %v1945 = vadd.f32 0.0, %v1944
        %v1946 = vpop.f32.mrb[0].mxu0
        %v1947 = vpop.f32.mrb[0].mxu0
        %v1948 = vadd.f32 0.0, %v1947
        %v1949 = vpop.f32.mrb[0].mxu0
        %1950 = vmatprep.mubr.bf16.mxu0 0
        %1951 = vmatmul.mubr.bf16.gmra.mrb[0].mxu0 %v1815
        %v1952 = vpop.f32.mrb[0].mxu0
        %v1953 = vadd.f32 0.0, %v1952
        %v1954 = vpop.f32.mrb[0].mxu0
        %v1955 = vpop.f32.mrb[0].mxu0
        %v1956 = vadd.f32 0.0, %v1955
        %v1957 = vpop.f32.mrb[0].mxu0
        %1958 = vmatprep.mubr.bf16.mxu0 0
        %1959 = vmatmul.mubr.bf16.gmra.mrb[0].mxu0 %v1818
        %v1960 = vpop.f32.mrb[0].mxu0
        %v1961 = vadd.f32 0.0, %v1960
        %v1962 = vpop.f32.mrb[0].mxu0
        %v1963 = vpop.f32.mrb[0].mxu0
        %v1964 = vadd.f32 0.0, %v1963
        %v1965 = vpop.f32.mrb[0].mxu0
        %1966 = vmatprep.mubr.bf16.mxu0 0
        %1967 = vmatmul.mubr.bf16.gmra.mrb[0].mxu0 %v1821
        %v1968 = vpop.f32.mrb[0].mxu0
        %v1969 = vadd.f32 0.0, %v1968
        %v1970 = vpop.f32.mrb[0].mxu0
        %v1971 = vpop.f32.mrb[0].mxu0
        %v1972 = vadd.f32 0.0, %v1971
        %v1973 = vpop.f32.mrb[0].mxu0
        %1974 = vmatprep.mubr.bf16.mxu0 0
        %1975 = vmatmul.mubr.bf16.gmra.mrb[0].mxu0 %v1824
        %v1976 = vpop.f32.mrb[0].mxu0
        %v1977 = vadd.f32 0.0, %v1976
        %v1978 = vpop.f32.mrb[0].mxu0
        %v1979 = vpop.f32.mrb[0].mxu0
        %v1980 = vadd.f32 0.0, %v1979
        %v1981 = vpop.f32.mrb[0].mxu0
        %1982 = vmatprep.mubr.bf16.mxu0 0
        %1983 = vmatmul.mubr.bf16.gmra.mrb[0].mxu0 %v1827
        %v1984 = vpop.f32.mrb[0].mxu0
        %v1985 = vadd.f32 0.0, %v1984
        %v1986 = vpop.f32.mrb[0].mxu0
        %v1987 = vpop.f32.mrb[0].mxu0
        %v1988 = vadd.f32 0.0, %v1987
        %v1989 = vpop.f32.mrb[0].mxu0
        %1990 = vmatprep.mubr.bf16.mxu0 0
        %1991 = vmatmul.mubr.bf16.gmra.mrb[0].mxu0 %v1830
        %v1992 = vpop.f32.mrb[0].mxu0
        %v1993 = vadd.f32 0.0, %v1992
        %v1994 = vpop.f32.mrb[0].mxu0
        %v1995 = vpop.f32.mrb[0].mxu0
        %v1996 = vadd.f32 0.0, %v1995
        %v1997 = vpop.f32.mrb[0].mxu0
        %1998 = vmatprep.mubr.bf16.mxu0 0
        %1999 = vmatmul.mubr.bf16.gmra.mrb[0].mxu0 %v1833
        %v2000 = vpop.f32.mrb[0].mxu0
        %v2001 = vadd.f32 0.0, %v2000
        %v2002 = vpop.f32.mrb[0].mxu0
        %v2003 = vpop.f32.mrb[0].mxu0
        %v2004 = vadd.f32 0.0, %v2003
        %v2005 = vpop.f32.mrb[0].mxu0
        %2006 = vmatprep.mubr.bf16.mxu0 0
        %2007 = vmatmul.mubr.bf16.gmra.mrb[0].mxu0 %v1836
        %v2008 = vpop.f32.mrb[0].mxu0
        %v2009 = vadd.f32 0.0, %v2008
        %v2010 = vpop.f32.mrb[0].mxu0
        %v2011 = vpop.f32.mrb[0].mxu0
        %v2012 = vadd.f32 0.0, %v2011
        %v2013 = vpop.f32.mrb[0].mxu0
        %2014 = vmatprep.mubr.bf16.mxu0 0
        %2015 = vmatmul.mubr.bf16.gmra.mrb[0].mxu0 %v1839
        %v2016 = vpop.f32.mrb[0].mxu0
        %v2017 = vadd.f32 0.0, %v2016
        %v2018 = vpop.f32.mrb[0].mxu0
        %v2019 = vpop.f32.mrb[0].mxu0
        %v2020 = vadd.f32 0.0, %v2019
        %v2021 = vpop.f32.mrb[0].mxu0
        %2022 = vmatprep.mubr.bf16.mxu0 0
        %2023 = vmatmul.mubr.bf16.gmra.mrb[0].mxu0 %v1842
        %v2024 = vpop.f32.mrb[0].mxu0
        %v2025 = vadd.f32 0.0, %v2024
        %v2026 = vpop.f32.mrb[0].mxu0
        %v2027 = vpop.f32.mrb[0].mxu0
        %v2028 = vadd.f32 0.0, %v2027
        %v2029 = vpop.f32.mrb[0].mxu0
        %2030 = vmatprep.mubr.bf16.mxu0 0
        %2031 = vmatmul.mubr.bf16.gmra.mrb[0].mxu0 %v1845
        %v2032 = vpop.f32.mrb[0].mxu0
        %v2033 = vadd.f32 0.0, %v2032
        %v2034 = vpop.f32.mrb[0].mxu0
        %v2035 = vpop.f32.mrb[0].mxu0
        %v2036 = vadd.f32 0.0, %v2035
        %v2037 = vpop.f32.mrb[0].mxu0
        %2038 = vmatprep.mubr.bf16.mxu0 0
        %2039 = vmatmul.mubr.bf16.gmra.mrb[0].mxu0 %v1848
        %v2040 = vpop.f32.mrb[0].mxu0
        %v2041 = vadd.f32 0.0, %v2040
        %v2042 = vpop.f32.mrb[0].mxu0
        %v2043 = vpop.f32.mrb[0].mxu0
        %v2044 = vadd.f32 0.0, %v2043
        %v2045 = vpop.f32.mrb[0].mxu0
        %2046 = vmatprep.mubr.bf16.mxu0 0
        %2047 = vmatmul.mubr.bf16.gmra.mrb[0].mxu0 %v1851
        %v2048 = vpop.f32.mrb[0].mxu0
        %v2049 = vadd.f32 0.0, %v2048
        %v2050 = vpop.f32.mrb[0].mxu0
        %v2051 = vpop.f32.mrb[0].mxu0
        %v2052 = vadd.f32 0.0, %v2051
        %v2053 = vpop.f32.mrb[0].mxu0
        %2054 = vmatprep.mubr.bf16.mxu0 0
        %2055 = vmatmul.mubr.bf16.gmra.mrb[0].mxu0 %v1854
        %v2056 = vpop.f32.mrb[0].mxu0
        %v2057 = vadd.f32 0.0, %v2056
        %v2058 = vpop.f32.mrb[0].mxu0
        %v2059 = vpop.f32.mrb[0].mxu0
        %v2060 = vadd.f32 0.0, %v2059
        %v2061 = vpop.f32.mrb[0].mxu0
        %2062 = vmatprep.mubr.bf16.mxu0 0
        %2063 = vmatmul.mubr.bf16.gmra.mrb[0].mxu0 %v1857
        %v2064 = vpop.f32.mrb[0].mxu0
        %v2065 = vadd.f32 0.0, %v2064
        %v2066 = vpop.f32.mrb[0].mxu0
        %v2067 = vpop.f32.mrb[0].mxu0
        %v2068 = vadd.f32 0.0, %v2067
        %v2069 = vpop.f32.mrb[0].mxu0
        %2070 = vmatprep.mubr.bf16.mxu0 0
        %2071 = vmatmul.mubr.bf16.gmra.mrb[0].mxu0 %v1860
        %v2072 = vpop.f32.mrb[0].mxu0
        %v2073 = vadd.f32 0.0, %v2072
        %v2074 = vpop.f32.mrb[0].mxu0
        %v2075 = vpop.f32.mrb[0].mxu0
        %v2076 = vadd.f32 0.0, %v2075
        %v2077 = vpop.f32.mrb[0].mxu0
        %2078 = vmatprep.mubr.bf16.mxu0 0
        %2079 = vmatmul.mubr.bf16.gmra.mrb[0].mxu0 %v1863
        %v2080 = vpop.f32.mrb[0].mxu0
        %v2081 = vadd.f32 0.0, %v2080
        %v2082 = vpop.f32.mrb[0].mxu0
        %v2083 = vpop.f32.mrb[0].mxu0
        %v2084 = vadd.f32 0.0, %v2083
        %v2085 = vpop.f32.mrb[0].mxu0
        %2086 = vmatprep.mubr.bf16.mxu0 0
        %2087 = vmatmul.mubr.bf16.gmra.mrb[0].mxu0 %v1866
        %v2088 = vpop.f32.mrb[0].mxu0
        %v2089 = vadd.f32 0.0, %v2088
        %v2090 = vpop.f32.mrb[0].mxu0
        %v2091 = vpop.f32.mrb[0].mxu0
        %v2092 = vadd.f32 0.0, %v2091
        %v2093 = vpop.f32.mrb[0].mxu0
        %2094 = vmatprep.mubr.bf16.mxu0 0
        %2095 = vmatmul.mubr.bf16.gmra.mrb[0].mxu0 %v1869
        %v2096 = vpop.f32.mrb[0].mxu0
        %v2097 = vadd.f32 0.0, %v2096
        %v2098 = vpop.f32.mrb[0].mxu0
        %v2099 = vpop.f32.mrb[0].mxu0
        %v2100 = vadd.f32 0.0, %v2099
        %v2101 = vpop.f32.mrb[0].mxu0
        %2102 = vmatprep.mubr.bf16.mxu0 0
        %2103 = vmatmul.mubr.bf16.gmra.mrb[0].mxu0 %v1872
        %v2104 = vpop.f32.mrb[0].mxu0
        %v2105 = vadd.f32 0.0, %v2104
        %v2106 = vpop.f32.mrb[0].mxu0
        %v2107 = vpop.f32.mrb[0].mxu0
        %v2108 = vadd.f32 0.0, %v2107
        %v2109 = vpop.f32.mrb[0].mxu0
        %2110 = vmatprep.mubr.bf16.mxu0 0
        %2111 = vmatmul.mubr.bf16.gmra.mrb[0].mxu0 %v1875
        %v2112 = vpop.f32.mrb[0].mxu0
        %v2113 = vadd.f32 0.0, %v2112
        %v2114 = vpop.f32.mrb[0].mxu0
        %v2115 = vpop.f32.mrb[0].mxu0
        %v2116 = vadd.f32 0.0, %v2115
        %v2117 = vpop.f32.mrb[0].mxu0
        %2118 = vmatprep.mubr.bf16.mxu0 0
        %2119 = vmatmul.mubr.bf16.gmra.mrb[0].mxu0 %v1878
        %v2120 = vpop.f32.mrb[0].mxu0
        %v2121 = vadd.f32 0.0, %v2120
        %v2122 = vpop.f32.mrb[0].mxu0
        %v2123 = vpop.f32.mrb[0].mxu0
        %v2124 = vadd.f32 0.0, %v2123
        %v2125 = vpop.f32.mrb[0].mxu0
        %2126 = vmatprep.mubr.bf16.mxu0 0
        %2127 = vmatmul.mubr.bf16.gmra.mrb[0].mxu0 %v1881
        %v2128 = vpop.f32.mrb[0].mxu0
        %v2129 = vadd.f32 0.0, %v2128
        %v2130 = vpop.f32.mrb[0].mxu0
        %v2131 = vpop.f32.mrb[0].mxu0
        %v2132 = vadd.f32 0.0, %v2131
        %v2133 = vpop.f32.mrb[0].mxu0
        %2134 = vmatprep.mubr.bf16.mxu0 0
        %2135 = vmatmul.mubr.bf16.gmra.mrb[0].mxu0 %v1884
        %v2136 = vpop.f32.mrb[0].mxu0
        %v2137 = vadd.f32 0.0, %v2136
        %v2138 = vpop.f32.mrb[0].mxu0
        %v2139 = vpop.f32.mrb[0].mxu0
        %v2140 = vadd.f32 0.0, %v2139
        %v2141 = vpop.f32.mrb[0].mxu0
        %2142 = vmatprep.mubr.bf16.mxu0 0
        %2143 = vmatmul.mubr.bf16.gmra.mrb[0].mxu0 %v1887
        %v2144 = vpop.f32.mrb[0].mxu0
        %v2145 = vadd.f32 0.0, %v2144
        %v2146 = vpop.f32.mrb[0].mxu0
        %v2147 = vpop.f32.mrb[0].mxu0
        %v2148 = vadd.f32 0.0, %v2147
        %v2149 = vpop.f32.mrb[0].mxu0
        %2150 = vmatprep.mubr.bf16.mxu0 0
        %2151 = vmatmul.mubr.bf16.gmra.mrb[0].mxu0 %v1890
        %v2152 = vpop.f32.mrb[0].mxu0
        %v2153 = vadd.f32 0.0, %v2152
        %v2154 = vpop.f32.mrb[0].mxu0
        %v2155 = vpop.f32.mrb[0].mxu0
        %v2156 = vadd.f32 0.0, %v2155
        %v2157 = vpop.f32.mrb[0].mxu0
        %2158 = vmatprep.mubr.bf16.mxu0 0
        %2159 = vmatmul.mubr.bf16.gmra.mrb[0].mxu0 %v1893
        %v2160 = vpop.f32.mrb[0].mxu0
        %v2161 = vadd.f32 0.0, %v2160
        %v2162 = vpop.f32.mrb[0].mxu0
        %v2163 = vpop.f32.mrb[0].mxu0
        %v2164 = vadd.f32 0.0, %v2163
        %v2165 = vpop.f32.mrb[0].mxu0
        %2166 = vmatprep.mubr.bf16.mxu0 0
        %2167 = vmatmul.mubr.bf16.gmra.mrb[0].mxu0 %v1896
        %v2168 = vpop.f32.mrb[0].mxu0
        %v2169 = vadd.f32 0.0, %v2168
        %v2170 = vpop.f32.mrb[0].mxu0
        %v2171 = vpop.f32.mrb[0].mxu0
        %v2172 = vadd.f32 0.0, %v2171
        %v2173 = vpop.f32.mrb[0].mxu0
        %2174 = vmatprep.mubr.bf16.mxu0 0
        %2175 = vmatmul.mubr.bf16.gmra.mrb[0].mxu0 %v1899
        %v2176 = vpop.f32.mrb[0].mxu0
        %v2177 = vadd.f32 0.0, %v2176
        %v2178 = vpop.f32.mrb[0].mxu0
        %v2179 = vpop.f32.mrb[0].mxu0
        %v2180 = vadd.f32 0.0, %v2179
        %v2181 = vpop.f32.mrb[0].mxu0
        %2182 = vmatprep.mubr.bf16.mxu0 0
        %2183 = vmatmul.mubr.bf16.gmra.mrb[0].mxu0 %v1902
        %v2184 = vpop.f32.mrb[0].mxu0
        %v2185 = vadd.f32 0.0, %v2184
        %v2186 = vpop.f32.mrb[0].mxu0
        %v2187 = vpop.f32.mrb[0].mxu0
        %v2188 = vadd.f32 0.0, %v2187
        %v2189 = vpop.f32.mrb[0].mxu0
        %2190 = vmatprep.mubr.bf16.mxu0 0
        %2191 = vmatmul.mubr.bf16.gmra.mrb[0].mxu0 %v1905
        %v2192 = vpop.f32.mrb[0].mxu0
        %v2193 = vadd.f32 0.0, %v2192
        %v2194 = vpop.f32.mrb[0].mxu0
        %v2195 = vpop.f32.mrb[0].mxu0
        %v2196 = vadd.f32 0.0, %v2195
        %v2197 = vpop.f32.mrb[0].mxu0
        %2198 = vdwg.mxu0
        %v2199 = vadd.f32 %v1456, %v1945
        %v2200 = vadd.f32 %v1459, %v1948
        %v2201 = vadd.f32 %v1464, %v1953
        %v2202 = vadd.f32 %v1467, %v1956
        %v2203 = vadd.f32 %v1472, %v1961
        %v2204 = vadd.f32 %v1475, %v1964
        %v2205 = vadd.f32 %v1480, %v1969
        %v2206 = vadd.f32 %v1483, %v1972
        %v2207 = vadd.f32 %v1488, %v1977
        %v2208 = vadd.f32 %v1491, %v1980
        %v2209 = vadd.f32 %v1496, %v1985
        %v2210 = vadd.f32 %v1499, %v1988
        %v2211 = vadd.f32 %v1504, %v1993
        %v2212 = vadd.f32 %v1507, %v1996
        %v2213 = vadd.f32 %v1512, %v2001
        %v2214 = vadd.f32 %v1515, %v2004
        %v2215 = vadd.f32 %v1520, %v2009
        %v2216 = vadd.f32 %v1523, %v2012
        %v2217 = vadd.f32 %v1528, %v2017
        %v2218 = vadd.f32 %v1531, %v2020
        %v2219 = vadd.f32 %v1536, %v2025
        %v2220 = vadd.f32 %v1539, %v2028
        %v2221 = vadd.f32 %v1544, %v2033
        %v2222 = vadd.f32 %v1547, %v2036
        %v2223 = vadd.f32 %v1552, %v2041
        %v2224 = vadd.f32 %v1555, %v2044
        %v2225 = vadd.f32 %v1560, %v2049
        %v2226 = vadd.f32 %v1563, %v2052
        %v2227 = vadd.f32 %v1568, %v2057
        %v2228 = vadd.f32 %v1571, %v2060
        %v2229 = vadd.f32 %v1576, %v2065
        %v2230 = vadd.f32 %v1579, %v2068
        %v2231 = vadd.f32 %v1584, %v2073
        %v2232 = vadd.f32 %v1587, %v2076
        %v2233 = vadd.f32 %v1592, %v2081
        %v2234 = vadd.f32 %v1595, %v2084
        %v2235 = vadd.f32 %v1600, %v2089
        %v2236 = vadd.f32 %v1603, %v2092
        %v2237 = vadd.f32 %v1608, %v2097
        %v2238 = vadd.f32 %v1611, %v2100
        %v2239 = vadd.f32 %v1616, %v2105
        %v2240 = vadd.f32 %v1619, %v2108
        %v2241 = vadd.f32 %v1624, %v2113
        %v2242 = vadd.f32 %v1627, %v2116
        %v2243 = vadd.f32 %v1632, %v2121
        %v2244 = vadd.f32 %v1635, %v2124
        %v2245 = vadd.f32 %v1640, %v2129
        %v2246 = vadd.f32 %v1643, %v2132
        %v2247 = vadd.f32 %v1648, %v2137
        %v2248 = vadd.f32 %v1651, %v2140
        %v2249 = vadd.f32 %v1656, %v2145
        %v2250 = vadd.f32 %v1659, %v2148
        %v2251 = vadd.f32 %v1664, %v2153
        %v2252 = vadd.f32 %v1667, %v2156
        %v2253 = vadd.f32 %v1672, %v2161
        %v2254 = vadd.f32 %v1675, %v2164
        %v2255 = vadd.f32 %v1680, %v2169
        %v2256 = vadd.f32 %v1683, %v2172
        %v2257 = vadd.f32 %v1688, %v2177
        %v2258 = vadd.f32 %v1691, %v2180
        %v2259 = vadd.f32 %v1696, %v2185
        %v2260 = vadd.f32 %v1699, %v2188
        %v2261 = vadd.f32 %v1704, %v2193
        %v2262 = vadd.f32 %v1707, %v2196
        %v2263 = vpack.c.bf16 %v663, %v662
        %v2264 = vpack.c.bf16 %v664, %v664
        %s2265 = scalar_lea.vmem %s3, 12
        %v2266 = vld [vmem:[%s2265] sm:$0xf]
        %v2269 = vrot.slane %v2263, 1
        %v2270 = vsel %vm1745, %v1807, %v2269
        %v2271 = vrot.slane %v2264, 1
        %v2272 = vsel %vm1745, %v2269, %v2271
        %v2274 = vsel %vm964, %v2270, 0
        %v2277 = vsel %vm964, %v2272, 0
        %v2280 = vsel %vm1061, %v2266, 0
        %2282 = vmatprep.subr.bf16.mxu0 0
        %2283 = vmatpush1.bf16.msra.mxu0 %v2280
        %2284 = vmatprep.subr.bf16.mxu0 0
        %2285 = vmatpush1.bf16.msra.mxu0 0
        %2286 = vmatprep.subr.bf16.mxu0 0
        %2287 = vmatpush1.bf16.msra.mxu0 0
        %2288 = vmatprep.subr.bf16.mxu0 0
        %2289 = vmatpush1.bf16.msra.mxu0 0
        %2290 = vmatprep.subr.bf16.mxu0 0
        %2291 = vmatpush1.bf16.msra.mxu0 0
        %2292 = vmatprep.subr.bf16.mxu0 0
        %2293 = vmatpush1.bf16.msra.mxu0 0
        %2294 = vmatprep.subr.bf16.mxu0 0
        %2295 = vmatpush1.bf16.msra.mxu0 0
        %2296 = vmatprep.subr.bf16.mxu0 0
        %2297 = vmatpush1.bf16.msra.mxu0 0
        %2298 = vmatprep.subr.bf16.mxu0 0
        %2299 = vmatpush1.bf16.msra.mxu0 0
        %2300 = vmatprep.subr.bf16.mxu0 0
        %2301 = vmatpush1.bf16.msra.mxu0 0
        %2302 = vmatprep.subr.bf16.mxu0 0
        %2303 = vmatpush1.bf16.msra.mxu0 0
        %2304 = vmatprep.subr.bf16.mxu0 0
        %2305 = vmatpush1.bf16.msra.mxu0 0
        %2306 = vmatprep.subr.bf16.mxu0 0
        %2307 = vmatpush1.bf16.msra.mxu0 0
        %2308 = vmatprep.subr.bf16.mxu0 0
        %2309 = vmatpush1.bf16.msra.mxu0 0
        %2310 = vmatprep.subr.bf16.mxu0 0
        %2311 = vmatpush1.bf16.msra.mxu0 0
        %2312 = vmatprep.subr.bf16.mxu0 0
        %2313 = vmatpush1.bf16.msra.mxu0 0
        %2314 = vmatprep.mubr.bf16.mxu0 0
        %2315 = vmatmul.mubr.bf16.gmra.mrb[0].mxu0 %v1815
        %v2316 = vpop.f32.mrb[0].mxu0
        %v2317 = vadd.f32 0.0, %v2316
        %v2318 = vpop.f32.mrb[0].mxu0
        %v2319 = vpop.f32.mrb[0].mxu0
        %v2320 = vadd.f32 0.0, %v2319
        %v2321 = vpop.f32.mrb[0].mxu0
        %2322 = vmatprep.mubr.bf16.mxu0 0
        %2323 = vmatmul.mubr.bf16.gmra.mrb[0].mxu0 %v1818
        %v2324 = vpop.f32.mrb[0].mxu0
        %v2325 = vadd.f32 0.0, %v2324
        %v2326 = vpop.f32.mrb[0].mxu0
        %v2327 = vpop.f32.mrb[0].mxu0
        %v2328 = vadd.f32 0.0, %v2327
        %v2329 = vpop.f32.mrb[0].mxu0
        %2330 = vmatprep.mubr.bf16.mxu0 0
        %2331 = vmatmul.mubr.bf16.gmra.mrb[0].mxu0 %v1821
        %v2332 = vpop.f32.mrb[0].mxu0
        %v2333 = vadd.f32 0.0, %v2332
        %v2334 = vpop.f32.mrb[0].mxu0
        %v2335 = vpop.f32.mrb[0].mxu0
        %v2336 = vadd.f32 0.0, %v2335
        %v2337 = vpop.f32.mrb[0].mxu0
        %2338 = vmatprep.mubr.bf16.mxu0 0
        %2339 = vmatmul.mubr.bf16.gmra.mrb[0].mxu0 %v1824
        %v2340 = vpop.f32.mrb[0].mxu0
        %v2341 = vadd.f32 0.0, %v2340
        %v2342 = vpop.f32.mrb[0].mxu0
        %v2343 = vpop.f32.mrb[0].mxu0
        %v2344 = vadd.f32 0.0, %v2343
        %v2345 = vpop.f32.mrb[0].mxu0
        %2346 = vmatprep.mubr.bf16.mxu0 0
        %2347 = vmatmul.mubr.bf16.gmra.mrb[0].mxu0 %v1827
        %v2348 = vpop.f32.mrb[0].mxu0
        %v2349 = vadd.f32 0.0, %v2348
        %v2350 = vpop.f32.mrb[0].mxu0
        %v2351 = vpop.f32.mrb[0].mxu0
        %v2352 = vadd.f32 0.0, %v2351
        %v2353 = vpop.f32.mrb[0].mxu0
        %2354 = vmatprep.mubr.bf16.mxu0 0
        %2355 = vmatmul.mubr.bf16.gmra.mrb[0].mxu0 %v1830
        %v2356 = vpop.f32.mrb[0].mxu0
        %v2357 = vadd.f32 0.0, %v2356
        %v2358 = vpop.f32.mrb[0].mxu0
        %v2359 = vpop.f32.mrb[0].mxu0
        %v2360 = vadd.f32 0.0, %v2359
        %v2361 = vpop.f32.mrb[0].mxu0
        %2362 = vmatprep.mubr.bf16.mxu0 0
        %2363 = vmatmul.mubr.bf16.gmra.mrb[0].mxu0 %v1833
        %v2364 = vpop.f32.mrb[0].mxu0
        %v2365 = vadd.f32 0.0, %v2364
        %v2366 = vpop.f32.mrb[0].mxu0
        %v2367 = vpop.f32.mrb[0].mxu0
        %v2368 = vadd.f32 0.0, %v2367
        %v2369 = vpop.f32.mrb[0].mxu0
        %2370 = vmatprep.mubr.bf16.mxu0 0
        %2371 = vmatmul.mubr.bf16.gmra.mrb[0].mxu0 %v1836
        %v2372 = vpop.f32.mrb[0].mxu0
        %v2373 = vadd.f32 0.0, %v2372
        %v2374 = vpop.f32.mrb[0].mxu0
        %v2375 = vpop.f32.mrb[0].mxu0
        %v2376 = vadd.f32 0.0, %v2375
        %v2377 = vpop.f32.mrb[0].mxu0
        %2378 = vmatprep.mubr.bf16.mxu0 0
        %2379 = vmatmul.mubr.bf16.gmra.mrb[0].mxu0 %v1839
        %v2380 = vpop.f32.mrb[0].mxu0
        %v2381 = vadd.f32 0.0, %v2380
        %v2382 = vpop.f32.mrb[0].mxu0
        %v2383 = vpop.f32.mrb[0].mxu0
        %v2384 = vadd.f32 0.0, %v2383
        %v2385 = vpop.f32.mrb[0].mxu0
        %2386 = vmatprep.mubr.bf16.mxu0 0
        %2387 = vmatmul.mubr.bf16.gmra.mrb[0].mxu0 %v1842
        %v2388 = vpop.f32.mrb[0].mxu0
        %v2389 = vadd.f32 0.0, %v2388
        %v2390 = vpop.f32.mrb[0].mxu0
        %v2391 = vpop.f32.mrb[0].mxu0
        %v2392 = vadd.f32 0.0, %v2391
        %v2393 = vpop.f32.mrb[0].mxu0
        %2394 = vmatprep.mubr.bf16.mxu0 0
        %2395 = vmatmul.mubr.bf16.gmra.mrb[0].mxu0 %v1845
        %v2396 = vpop.f32.mrb[0].mxu0
        %v2397 = vadd.f32 0.0, %v2396
        %v2398 = vpop.f32.mrb[0].mxu0
        %v2399 = vpop.f32.mrb[0].mxu0
        %v2400 = vadd.f32 0.0, %v2399
        %v2401 = vpop.f32.mrb[0].mxu0
        %2402 = vmatprep.mubr.bf16.mxu0 0
        %2403 = vmatmul.mubr.bf16.gmra.mrb[0].mxu0 %v1848
        %v2404 = vpop.f32.mrb[0].mxu0
        %v2405 = vadd.f32 0.0, %v2404
        %v2406 = vpop.f32.mrb[0].mxu0
        %v2407 = vpop.f32.mrb[0].mxu0
        %v2408 = vadd.f32 0.0, %v2407
        %v2409 = vpop.f32.mrb[0].mxu0
        %2410 = vmatprep.mubr.bf16.mxu0 0
        %2411 = vmatmul.mubr.bf16.gmra.mrb[0].mxu0 %v1851
        %v2412 = vpop.f32.mrb[0].mxu0
        %v2413 = vadd.f32 0.0, %v2412
        %v2414 = vpop.f32.mrb[0].mxu0
        %v2415 = vpop.f32.mrb[0].mxu0
        %v2416 = vadd.f32 0.0, %v2415
        %v2417 = vpop.f32.mrb[0].mxu0
        %2418 = vmatprep.mubr.bf16.mxu0 0
        %2419 = vmatmul.mubr.bf16.gmra.mrb[0].mxu0 %v1854
        %v2420 = vpop.f32.mrb[0].mxu0
        %v2421 = vadd.f32 0.0, %v2420
        %v2422 = vpop.f32.mrb[0].mxu0
        %v2423 = vpop.f32.mrb[0].mxu0
        %v2424 = vadd.f32 0.0, %v2423
        %v2425 = vpop.f32.mrb[0].mxu0
        %2426 = vmatprep.mubr.bf16.mxu0 0
        %2427 = vmatmul.mubr.bf16.gmra.mrb[0].mxu0 %v1857
        %v2428 = vpop.f32.mrb[0].mxu0
        %v2429 = vadd.f32 0.0, %v2428
        %v2430 = vpop.f32.mrb[0].mxu0
        %v2431 = vpop.f32.mrb[0].mxu0
        %v2432 = vadd.f32 0.0, %v2431
        %v2433 = vpop.f32.mrb[0].mxu0
        %2434 = vmatprep.mubr.bf16.mxu0 0
        %2435 = vmatmul.mubr.bf16.gmra.mrb[0].mxu0 %v1860
        %v2436 = vpop.f32.mrb[0].mxu0
        %v2437 = vadd.f32 0.0, %v2436
        %v2438 = vpop.f32.mrb[0].mxu0
        %v2439 = vpop.f32.mrb[0].mxu0
        %v2440 = vadd.f32 0.0, %v2439
        %v2441 = vpop.f32.mrb[0].mxu0
        %2442 = vmatprep.mubr.bf16.mxu0 0
        %2443 = vmatmul.mubr.bf16.gmra.mrb[0].mxu0 %v1863
        %v2444 = vpop.f32.mrb[0].mxu0
        %v2445 = vadd.f32 0.0, %v2444
        %v2446 = vpop.f32.mrb[0].mxu0
        %v2447 = vpop.f32.mrb[0].mxu0
        %v2448 = vadd.f32 0.0, %v2447
        %v2449 = vpop.f32.mrb[0].mxu0
        %2450 = vmatprep.mubr.bf16.mxu0 0
        %2451 = vmatmul.mubr.bf16.gmra.mrb[0].mxu0 %v1866
        %v2452 = vpop.f32.mrb[0].mxu0
        %v2453 = vadd.f32 0.0, %v2452
        %v2454 = vpop.f32.mrb[0].mxu0
        %v2455 = vpop.f32.mrb[0].mxu0
        %v2456 = vadd.f32 0.0, %v2455
        %v2457 = vpop.f32.mrb[0].mxu0
        %2458 = vmatprep.mubr.bf16.mxu0 0
        %2459 = vmatmul.mubr.bf16.gmra.mrb[0].mxu0 %v1869
        %v2460 = vpop.f32.mrb[0].mxu0
        %v2461 = vadd.f32 0.0, %v2460
        %v2462 = vpop.f32.mrb[0].mxu0
        %v2463 = vpop.f32.mrb[0].mxu0
        %v2464 = vadd.f32 0.0, %v2463
        %v2465 = vpop.f32.mrb[0].mxu0
        %2466 = vmatprep.mubr.bf16.mxu0 0
        %2467 = vmatmul.mubr.bf16.gmra.mrb[0].mxu0 %v1872
        %v2468 = vpop.f32.mrb[0].mxu0
        %v2469 = vadd.f32 0.0, %v2468
        %v2470 = vpop.f32.mrb[0].mxu0
        %v2471 = vpop.f32.mrb[0].mxu0
        %v2472 = vadd.f32 0.0, %v2471
        %v2473 = vpop.f32.mrb[0].mxu0
        %2474 = vmatprep.mubr.bf16.mxu0 0
        %2475 = vmatmul.mubr.bf16.gmra.mrb[0].mxu0 %v1875
        %v2476 = vpop.f32.mrb[0].mxu0
        %v2477 = vadd.f32 0.0, %v2476
        %v2478 = vpop.f32.mrb[0].mxu0
        %v2479 = vpop.f32.mrb[0].mxu0
        %v2480 = vadd.f32 0.0, %v2479
        %v2481 = vpop.f32.mrb[0].mxu0
        %2482 = vmatprep.mubr.bf16.mxu0 0
        %2483 = vmatmul.mubr.bf16.gmra.mrb[0].mxu0 %v1878
        %v2484 = vpop.f32.mrb[0].mxu0
        %v2485 = vadd.f32 0.0, %v2484
        %v2486 = vpop.f32.mrb[0].mxu0
        %v2487 = vpop.f32.mrb[0].mxu0
        %v2488 = vadd.f32 0.0, %v2487
        %v2489 = vpop.f32.mrb[0].mxu0
        %2490 = vmatprep.mubr.bf16.mxu0 0
        %2491 = vmatmul.mubr.bf16.gmra.mrb[0].mxu0 %v1881
        %v2492 = vpop.f32.mrb[0].mxu0
        %v2493 = vadd.f32 0.0, %v2492
        %v2494 = vpop.f32.mrb[0].mxu0
        %v2495 = vpop.f32.mrb[0].mxu0
        %v2496 = vadd.f32 0.0, %v2495
        %v2497 = vpop.f32.mrb[0].mxu0
        %2498 = vmatprep.mubr.bf16.mxu0 0
        %2499 = vmatmul.mubr.bf16.gmra.mrb[0].mxu0 %v1884
        %v2500 = vpop.f32.mrb[0].mxu0
        %v2501 = vadd.f32 0.0, %v2500
        %v2502 = vpop.f32.mrb[0].mxu0
        %v2503 = vpop.f32.mrb[0].mxu0
        %v2504 = vadd.f32 0.0, %v2503
        %v2505 = vpop.f32.mrb[0].mxu0
        %2506 = vmatprep.mubr.bf16.mxu0 0
        %2507 = vmatmul.mubr.bf16.gmra.mrb[0].mxu0 %v1887
        %v2508 = vpop.f32.mrb[0].mxu0
        %v2509 = vadd.f32 0.0, %v2508
        %v2510 = vpop.f32.mrb[0].mxu0
        %v2511 = vpop.f32.mrb[0].mxu0
        %v2512 = vadd.f32 0.0, %v2511
        %v2513 = vpop.f32.mrb[0].mxu0
        %2514 = vmatprep.mubr.bf16.mxu0 0
        %2515 = vmatmul.mubr.bf16.gmra.mrb[0].mxu0 %v1890
        %v2516 = vpop.f32.mrb[0].mxu0
        %v2517 = vadd.f32 0.0, %v2516
        %v2518 = vpop.f32.mrb[0].mxu0
        %v2519 = vpop.f32.mrb[0].mxu0
        %v2520 = vadd.f32 0.0, %v2519
        %v2521 = vpop.f32.mrb[0].mxu0
        %2522 = vmatprep.mubr.bf16.mxu0 0
        %2523 = vmatmul.mubr.bf16.gmra.mrb[0].mxu0 %v1893
        %v2524 = vpop.f32.mrb[0].mxu0
        %v2525 = vadd.f32 0.0, %v2524
        %v2526 = vpop.f32.mrb[0].mxu0
        %v2527 = vpop.f32.mrb[0].mxu0
        %v2528 = vadd.f32 0.0, %v2527
        %v2529 = vpop.f32.mrb[0].mxu0
        %2530 = vmatprep.mubr.bf16.mxu0 0
        %2531 = vmatmul.mubr.bf16.gmra.mrb[0].mxu0 %v1896
        %v2532 = vpop.f32.mrb[0].mxu0
        %v2533 = vadd.f32 0.0, %v2532
        %v2534 = vpop.f32.mrb[0].mxu0
        %v2535 = vpop.f32.mrb[0].mxu0
        %v2536 = vadd.f32 0.0, %v2535
        %v2537 = vpop.f32.mrb[0].mxu0
        %2538 = vmatprep.mubr.bf16.mxu0 0
        %2539 = vmatmul.mubr.bf16.gmra.mrb[0].mxu0 %v1899
        %v2540 = vpop.f32.mrb[0].mxu0
        %v2541 = vadd.f32 0.0, %v2540
        %v2542 = vpop.f32.mrb[0].mxu0
        %v2543 = vpop.f32.mrb[0].mxu0
        %v2544 = vadd.f32 0.0, %v2543
        %v2545 = vpop.f32.mrb[0].mxu0
        %2546 = vmatprep.mubr.bf16.mxu0 0
        %2547 = vmatmul.mubr.bf16.gmra.mrb[0].mxu0 %v1902
        %v2548 = vpop.f32.mrb[0].mxu0
        %v2549 = vadd.f32 0.0, %v2548
        %v2550 = vpop.f32.mrb[0].mxu0
        %v2551 = vpop.f32.mrb[0].mxu0
        %v2552 = vadd.f32 0.0, %v2551
        %v2553 = vpop.f32.mrb[0].mxu0
        %2554 = vmatprep.mubr.bf16.mxu0 0
        %2555 = vmatmul.mubr.bf16.gmra.mrb[0].mxu0 %v2274
        %v2556 = vpop.f32.mrb[0].mxu0
        %v2557 = vadd.f32 0.0, %v2556
        %v2558 = vpop.f32.mrb[0].mxu0
        %v2559 = vpop.f32.mrb[0].mxu0
        %v2560 = vadd.f32 0.0, %v2559
        %v2561 = vpop.f32.mrb[0].mxu0
        %2562 = vmatprep.mubr.bf16.mxu0 0
        %2563 = vmatmul.mubr.bf16.gmra.mrb[0].mxu0 %v2277
        %v2564 = vpop.f32.mrb[0].mxu0
        %v2565 = vadd.f32 0.0, %v2564
        %v2566 = vpop.f32.mrb[0].mxu0
        %v2567 = vpop.f32.mrb[0].mxu0
        %v2568 = vadd.f32 0.0, %v2567
        %v2569 = vpop.f32.mrb[0].mxu0
        %2570 = vdwg.mxu0
        %v2571 = vadd.f32 %v2199, %v2317
        %v2572 = vadd.f32 %v2200, %v2320
        %v2573 = vadd.f32 %v2201, %v2325
        %v2574 = vadd.f32 %v2202, %v2328
        %v2575 = vadd.f32 %v2203, %v2333
        %v2576 = vadd.f32 %v2204, %v2336
        %v2577 = vadd.f32 %v2205, %v2341
        %v2578 = vadd.f32 %v2206, %v2344
        %v2579 = vadd.f32 %v2207, %v2349
        %v2580 = vadd.f32 %v2208, %v2352
        %v2581 = vadd.f32 %v2209, %v2357
        %v2582 = vadd.f32 %v2210, %v2360
        %v2583 = vadd.f32 %v2211, %v2365
        %v2584 = vadd.f32 %v2212, %v2368
        %v2585 = vadd.f32 %v2213, %v2373
        %v2586 = vadd.f32 %v2214, %v2376
        %v2587 = vadd.f32 %v2215, %v2381
        %v2588 = vadd.f32 %v2216, %v2384
        %v2589 = vadd.f32 %v2217, %v2389
        %v2590 = vadd.f32 %v2218, %v2392
        %v2591 = vadd.f32 %v2219, %v2397
        %v2592 = vadd.f32 %v2220, %v2400
        %v2593 = vadd.f32 %v2221, %v2405
        %v2594 = vadd.f32 %v2222, %v2408
        %v2595 = vadd.f32 %v2223, %v2413
        %v2596 = vadd.f32 %v2224, %v2416
        %v2597 = vadd.f32 %v2225, %v2421
        %v2598 = vadd.f32 %v2226, %v2424
        %v2599 = vadd.f32 %v2227, %v2429
        %v2600 = vadd.f32 %v2228, %v2432
        %v2601 = vadd.f32 %v2229, %v2437
        %v2602 = vadd.f32 %v2230, %v2440
        %v2603 = vadd.f32 %v2231, %v2445
        %v2604 = vadd.f32 %v2232, %v2448
        %v2605 = vadd.f32 %v2233, %v2453
        %v2606 = vadd.f32 %v2234, %v2456
        %v2607 = vadd.f32 %v2235, %v2461
        %v2608 = vadd.f32 %v2236, %v2464
        %v2609 = vadd.f32 %v2237, %v2469
        %v2610 = vadd.f32 %v2238, %v2472
        %v2611 = vadd.f32 %v2239, %v2477
        %v2612 = vadd.f32 %v2240, %v2480
        %v2613 = vadd.f32 %v2241, %v2485
        %v2614 = vadd.f32 %v2242, %v2488
        %v2615 = vadd.f32 %v2243, %v2493
        %v2616 = vadd.f32 %v2244, %v2496
        %v2617 = vadd.f32 %v2245, %v2501
        %v2618 = vadd.f32 %v2246, %v2504
        %v2619 = vadd.f32 %v2247, %v2509
        %v2620 = vadd.f32 %v2248, %v2512
        %v2621 = vadd.f32 %v2249, %v2517
        %v2622 = vadd.f32 %v2250, %v2520
        %v2623 = vadd.f32 %v2251, %v2525
        %v2624 = vadd.f32 %v2252, %v2528
        %v2625 = vadd.f32 %v2253, %v2533
        %v2626 = vadd.f32 %v2254, %v2536
        %v2627 = vadd.f32 %v2255, %v2541
        %v2628 = vadd.f32 %v2256, %v2544
        %v2629 = vadd.f32 %v2257, %v2549
        %v2630 = vadd.f32 %v2258, %v2552
        %v2631 = vadd.f32 %v2259, %v2557
        %v2632 = vadd.f32 %v2260, %v2560
        %v2633 = vadd.f32 %v2261, %v2565
        %v2634 = vadd.f32 %v2262, %v2568
        %s2635 = scalar_lea.vmem %s3, 16
        %v2636 = vld [vmem:[%s2635] sm:$0xf]
        %vm2637 = vsmask.f32 6400
        %v2638 = vrot.slane %v716, 1
        %v2639 = vrot.slane %v712, 2
        %v2640 = vor.u32 %v2638, %v2639
        %v2641 = vrot.slane %v724, 1
        %v2642 = vrot.slane %v720, 2
        %v2643 = vor.u32 %v2641, %v2642
        %v2644 = vsel %vm2637, %v2640, %v2643
        %v2645 = vrot.slane %v732, 1
        %v2646 = vrot.slane %v728, 2
        %v2647 = vor.u32 %v2645, %v2646
        %v2648 = vsel %vm2637, %v2643, %v2647
        %v2649 = vrot.slane %v740, 1
        %v2650 = vrot.slane %v736, 2
        %v2651 = vor.u32 %v2649, %v2650
        %v2652 = vsel %vm2637, %v2647, %v2651
        %v2653 = vrot.slane %v748, 1
        %v2654 = vrot.slane %v744, 2
        %v2655 = vor.u32 %v2653, %v2654
        %v2656 = vsel %vm2637, %v2651, %v2655
        %v2657 = vrot.slane %v756, 1
        %v2658 = vrot.slane %v752, 2
        %v2659 = vor.u32 %v2657, %v2658
        %v2660 = vsel %vm2637, %v2655, %v2659
        %v2661 = vrot.slane %v764, 1
        %v2662 = vrot.slane %v760, 2
        %v2663 = vor.u32 %v2661, %v2662
        %v2664 = vsel %vm2637, %v2659, %v2663
        %v2665 = vrot.slane %v772, 1
        %v2666 = vrot.slane %v768, 2
        %v2667 = vor.u32 %v2665, %v2666
        %v2668 = vsel %vm2637, %v2663, %v2667
        %v2669 = vrot.slane %v780, 1
        %v2670 = vrot.slane %v776, 2
        %v2671 = vor.u32 %v2669, %v2670
        %v2672 = vsel %vm2637, %v2667, %v2671
        %v2673 = vrot.slane %v788, 1
        %v2674 = vrot.slane %v784, 2
        %v2675 = vor.u32 %v2673, %v2674
        %v2676 = vsel %vm2637, %v2671, %v2675
        %v2677 = vrot.slane %v796, 1
        %v2678 = vrot.slane %v792, 2
        %v2679 = vor.u32 %v2677, %v2678
        %v2680 = vsel %vm2637, %v2675, %v2679
        %v2681 = vrot.slane %v804, 1
        %v2682 = vrot.slane %v800, 2
        %v2683 = vor.u32 %v2681, %v2682
        %v2684 = vsel %vm2637, %v2679, %v2683
        %v2685 = vrot.slane %v812, 1
        %v2686 = vrot.slane %v808, 2
        %v2687 = vor.u32 %v2685, %v2686
        %v2688 = vsel %vm2637, %v2683, %v2687
        %v2689 = vrot.slane %v820, 1
        %v2690 = vrot.slane %v816, 2
        %v2691 = vor.u32 %v2689, %v2690
        %v2692 = vsel %vm2637, %v2687, %v2691
        %v2693 = vrot.slane %v828, 1
        %v2694 = vrot.slane %v824, 2
        %v2695 = vor.u32 %v2693, %v2694
        %v2696 = vsel %vm2637, %v2691, %v2695
        %v2697 = vrot.slane %v836, 1
        %v2698 = vrot.slane %v832, 2
        %v2699 = vor.u32 %v2697, %v2698
        %v2700 = vsel %vm2637, %v2695, %v2699
        %v2701 = vrot.slane %v844, 1
        %v2702 = vrot.slane %v840, 2
        %v2703 = vor.u32 %v2701, %v2702
        %v2704 = vsel %vm2637, %v2699, %v2703
        %v2705 = vrot.slane %v852, 1
        %v2706 = vrot.slane %v848, 2
        %v2707 = vor.u32 %v2705, %v2706
        %v2708 = vsel %vm2637, %v2703, %v2707
        %v2709 = vrot.slane %v860, 1
        %v2710 = vrot.slane %v856, 2
        %v2711 = vor.u32 %v2709, %v2710
        %v2712 = vsel %vm2637, %v2707, %v2711
        %v2713 = vrot.slane %v868, 1
        %v2714 = vrot.slane %v864, 2
        %v2715 = vor.u32 %v2713, %v2714
        %v2716 = vsel %vm2637, %v2711, %v2715
        %v2717 = vrot.slane %v876, 1
        %v2718 = vrot.slane %v872, 2
        %v2719 = vor.u32 %v2717, %v2718
        %v2720 = vsel %vm2637, %v2715, %v2719
        %v2721 = vrot.slane %v884, 1
        %v2722 = vrot.slane %v880, 2
        %v2723 = vor.u32 %v2721, %v2722
        %v2724 = vsel %vm2637, %v2719, %v2723
        %v2725 = vrot.slane %v892, 1
        %v2726 = vrot.slane %v888, 2
        %v2727 = vor.u32 %v2725, %v2726
        %v2728 = vsel %vm2637, %v2723, %v2727
        %v2729 = vrot.slane %v900, 1
        %v2730 = vrot.slane %v896, 2
        %v2731 = vor.u32 %v2729, %v2730
        %v2732 = vsel %vm2637, %v2727, %v2731
        %v2733 = vrot.slane %v908, 1
        %v2734 = vrot.slane %v904, 2
        %v2735 = vor.u32 %v2733, %v2734
        %v2736 = vsel %vm2637, %v2731, %v2735
        %v2737 = vrot.slane %v916, 1
        %v2738 = vrot.slane %v912, 2
        %v2739 = vor.u32 %v2737, %v2738
        %v2740 = vsel %vm2637, %v2735, %v2739
        %v2741 = vrot.slane %v924, 1
        %v2742 = vrot.slane %v920, 2
        %v2743 = vor.u32 %v2741, %v2742
        %v2744 = vsel %vm2637, %v2739, %v2743
        %v2745 = vrot.slane %v932, 1
        %v2746 = vrot.slane %v928, 2
        %v2747 = vor.u32 %v2745, %v2746
        %v2748 = vsel %vm2637, %v2743, %v2747
        %v2749 = vrot.slane %v940, 1
        %v2750 = vrot.slane %v936, 2
        %v2751 = vor.u32 %v2749, %v2750
        %v2752 = vsel %vm2637, %v2747, %v2751
        %v2753 = vrot.slane %v948, 1
        %v2754 = vrot.slane %v944, 2
        %v2755 = vor.u32 %v2753, %v2754
        %v2756 = vsel %vm2637, %v2751, %v2755
        %v2757 = vrot.slane %v956, 1
        %v2758 = vrot.slane %v952, 2
        %v2759 = vor.u32 %v2757, %v2758
        %v2760 = vsel %vm2637, %v2755, %v2759
        %v2762 = vshrl.u32 %v2263, 16
        %v2764 = vrot.slane %v2762, 1
        %v2765 = vshll.u32 %v2263, 16
        %v2767 = vrot.slane %v2765, 2
        %v2768 = vor.u32 %v2764, %v2767
        %v2769 = vsel %vm2637, %v2759, %v2768
        %v2771 = vshrl.u32 %v2264, 16
        %v2773 = vrot.slane %v2771, 1
        %v2774 = vshll.u32 %v2264, 16
        %v2776 = vrot.slane %v2774, 2
        %v2777 = vor.u32 %v2773, %v2776
        %v2778 = vsel %vm2637, %v2768, %v2777
        %v2780 = vsel %vm964, %v2644, 0
        %v2783 = vsel %vm964, %v2648, 0
        %v2786 = vsel %vm964, %v2652, 0
        %v2789 = vsel %vm964, %v2656, 0
        %v2792 = vsel %vm964, %v2660, 0
        %v2795 = vsel %vm964, %v2664, 0
        %v2798 = vsel %vm964, %v2668, 0
        %v2801 = vsel %vm964, %v2672, 0
        %v2804 = vsel %vm964, %v2676, 0
        %v2807 = vsel %vm964, %v2680, 0
        %v2810 = vsel %vm964, %v2684, 0
        %v2813 = vsel %vm964, %v2688, 0
        %v2816 = vsel %vm964, %v2692, 0
        %v2819 = vsel %vm964, %v2696, 0
        %v2822 = vsel %vm964, %v2700, 0
        %v2825 = vsel %vm964, %v2704, 0
        %v2828 = vsel %vm964, %v2708, 0
        %v2831 = vsel %vm964, %v2712, 0
        %v2834 = vsel %vm964, %v2716, 0
        %v2837 = vsel %vm964, %v2720, 0
        %v2840 = vsel %vm964, %v2724, 0
        %v2843 = vsel %vm964, %v2728, 0
        %v2846 = vsel %vm964, %v2732, 0
        %v2849 = vsel %vm964, %v2736, 0
        %v2852 = vsel %vm964, %v2740, 0
        %v2855 = vsel %vm964, %v2744, 0
        %v2858 = vsel %vm964, %v2748, 0
        %v2861 = vsel %vm964, %v2752, 0
        %v2864 = vsel %vm964, %v2756, 0
        %v2867 = vsel %vm964, %v2760, 0
        %v2870 = vsel %vm964, %v2769, 0
        %v2873 = vsel %vm964, %v2778, 0
        %v2876 = vsel %vm1061, %v2636, 0
        %2878 = vmatprep.subr.bf16.mxu0 0
        %2879 = vmatpush1.bf16.msra.mxu0 %v2876
        %2880 = vmatprep.subr.bf16.mxu0 0
        %2881 = vmatpush1.bf16.msra.mxu0 0
        %2882 = vmatprep.subr.bf16.mxu0 0
        %2883 = vmatpush1.bf16.msra.mxu0 0
        %2884 = vmatprep.subr.bf16.mxu0 0
        %2885 = vmatpush1.bf16.msra.mxu0 0
        %2886 = vmatprep.subr.bf16.mxu0 0
        %2887 = vmatpush1.bf16.msra.mxu0 0
        %2888 = vmatprep.subr.bf16.mxu0 0
        %2889 = vmatpush1.bf16.msra.mxu0 0
        %2890 = vmatprep.subr.bf16.mxu0 0
        %2891 = vmatpush1.bf16.msra.mxu0 0
        %2892 = vmatprep.subr.bf16.mxu0 0
        %2893 = vmatpush1.bf16.msra.mxu0 0
        %2894 = vmatprep.subr.bf16.mxu0 0
        %2895 = vmatpush1.bf16.msra.mxu0 0
        %2896 = vmatprep.subr.bf16.mxu0 0
        %2897 = vmatpush1.bf16.msra.mxu0 0
        %2898 = vmatprep.subr.bf16.mxu0 0
        %2899 = vmatpush1.bf16.msra.mxu0 0
        %2900 = vmatprep.subr.bf16.mxu0 0
        %2901 = vmatpush1.bf16.msra.mxu0 0
        %2902 = vmatprep.subr.bf16.mxu0 0
        %2903 = vmatpush1.bf16.msra.mxu0 0
        %2904 = vmatprep.subr.bf16.mxu0 0
        %2905 = vmatpush1.bf16.msra.mxu0 0
        %2906 = vmatprep.subr.bf16.mxu0 0
        %2907 = vmatpush1.bf16.msra.mxu0 0
        %2908 = vmatprep.subr.bf16.mxu0 0
        %2909 = vmatpush1.bf16.msra.mxu0 0
        %2910 = vmatprep.mubr.bf16.mxu0 0
        %2911 = vmatmul.mubr.bf16.gmra.mrb[0].mxu0 %v2780
        %v2912 = vpop.f32.mrb[0].mxu0
        %v2913 = vadd.f32 0.0, %v2912
        %v2914 = vpop.f32.mrb[0].mxu0
        %v2915 = vpop.f32.mrb[0].mxu0
        %v2916 = vadd.f32 0.0, %v2915
        %v2917 = vpop.f32.mrb[0].mxu0
        %2918 = vmatprep.mubr.bf16.mxu0 0
        %2919 = vmatmul.mubr.bf16.gmra.mrb[0].mxu0 %v2783
        %v2920 = vpop.f32.mrb[0].mxu0
        %v2921 = vadd.f32 0.0, %v2920
        %v2922 = vpop.f32.mrb[0].mxu0
        %v2923 = vpop.f32.mrb[0].mxu0
        %v2924 = vadd.f32 0.0, %v2923
        %v2925 = vpop.f32.mrb[0].mxu0
        %2926 = vmatprep.mubr.bf16.mxu0 0
        %2927 = vmatmul.mubr.bf16.gmra.mrb[0].mxu0 %v2786
        %v2928 = vpop.f32.mrb[0].mxu0
        %v2929 = vadd.f32 0.0, %v2928
        %v2930 = vpop.f32.mrb[0].mxu0
        %v2931 = vpop.f32.mrb[0].mxu0
        %v2932 = vadd.f32 0.0, %v2931
        %v2933 = vpop.f32.mrb[0].mxu0
        %2934 = vmatprep.mubr.bf16.mxu0 0
        %2935 = vmatmul.mubr.bf16.gmra.mrb[0].mxu0 %v2789
        %v2936 = vpop.f32.mrb[0].mxu0
        %v2937 = vadd.f32 0.0, %v2936
        %v2938 = vpop.f32.mrb[0].mxu0
        %v2939 = vpop.f32.mrb[0].mxu0
        %v2940 = vadd.f32 0.0, %v2939
        %v2941 = vpop.f32.mrb[0].mxu0
        %2942 = vmatprep.mubr.bf16.mxu0 0
        %2943 = vmatmul.mubr.bf16.gmra.mrb[0].mxu0 %v2792
        %v2944 = vpop.f32.mrb[0].mxu0
        %v2945 = vadd.f32 0.0, %v2944
        %v2946 = vpop.f32.mrb[0].mxu0
        %v2947 = vpop.f32.mrb[0].mxu0
        %v2948 = vadd.f32 0.0, %v2947
        %v2949 = vpop.f32.mrb[0].mxu0
        %2950 = vmatprep.mubr.bf16.mxu0 0
        %2951 = vmatmul.mubr.bf16.gmra.mrb[0].mxu0 %v2795
        %v2952 = vpop.f32.mrb[0].mxu0
        %v2953 = vadd.f32 0.0, %v2952
        %v2954 = vpop.f32.mrb[0].mxu0
        %v2955 = vpop.f32.mrb[0].mxu0
        %v2956 = vadd.f32 0.0, %v2955
        %v2957 = vpop.f32.mrb[0].mxu0
        %2958 = vmatprep.mubr.bf16.mxu0 0
        %2959 = vmatmul.mubr.bf16.gmra.mrb[0].mxu0 %v2798
        %v2960 = vpop.f32.mrb[0].mxu0
        %v2961 = vadd.f32 0.0, %v2960
        %v2962 = vpop.f32.mrb[0].mxu0
        %v2963 = vpop.f32.mrb[0].mxu0
        %v2964 = vadd.f32 0.0, %v2963
        %v2965 = vpop.f32.mrb[0].mxu0
        %2966 = vmatprep.mubr.bf16.mxu0 0
        %2967 = vmatmul.mubr.bf16.gmra.mrb[0].mxu0 %v2801
        %v2968 = vpop.f32.mrb[0].mxu0
        %v2969 = vadd.f32 0.0, %v2968
        %v2970 = vpop.f32.mrb[0].mxu0
        %v2971 = vpop.f32.mrb[0].mxu0
        %v2972 = vadd.f32 0.0, %v2971
        %v2973 = vpop.f32.mrb[0].mxu0
        %2974 = vmatprep.mubr.bf16.mxu0 0
        %2975 = vmatmul.mubr.bf16.gmra.mrb[0].mxu0 %v2804
        %v2976 = vpop.f32.mrb[0].mxu0
        %v2977 = vadd.f32 0.0, %v2976
        %v2978 = vpop.f32.mrb[0].mxu0
        %v2979 = vpop.f32.mrb[0].mxu0
        %v2980 = vadd.f32 0.0, %v2979
        %v2981 = vpop.f32.mrb[0].mxu0
        %2982 = vmatprep.mubr.bf16.mxu0 0
        %2983 = vmatmul.mubr.bf16.gmra.mrb[0].mxu0 %v2807
        %v2984 = vpop.f32.mrb[0].mxu0
        %v2985 = vadd.f32 0.0, %v2984
        %v2986 = vpop.f32.mrb[0].mxu0
        %v2987 = vpop.f32.mrb[0].mxu0
        %v2988 = vadd.f32 0.0, %v2987
        %v2989 = vpop.f32.mrb[0].mxu0
        %2990 = vmatprep.mubr.bf16.mxu0 0
        %2991 = vmatmul.mubr.bf16.gmra.mrb[0].mxu0 %v2810
        %v2992 = vpop.f32.mrb[0].mxu0
        %v2993 = vadd.f32 0.0, %v2992
        %v2994 = vpop.f32.mrb[0].mxu0
        %v2995 = vpop.f32.mrb[0].mxu0
        %v2996 = vadd.f32 0.0, %v2995
        %v2997 = vpop.f32.mrb[0].mxu0
        %2998 = vmatprep.mubr.bf16.mxu0 0
        %2999 = vmatmul.mubr.bf16.gmra.mrb[0].mxu0 %v2813
        %v3000 = vpop.f32.mrb[0].mxu0
        %v3001 = vadd.f32 0.0, %v3000
        %v3002 = vpop.f32.mrb[0].mxu0
        %v3003 = vpop.f32.mrb[0].mxu0
        %v3004 = vadd.f32 0.0, %v3003
        %v3005 = vpop.f32.mrb[0].mxu0
        %3006 = vmatprep.mubr.bf16.mxu0 0
        %3007 = vmatmul.mubr.bf16.gmra.mrb[0].mxu0 %v2816
        %v3008 = vpop.f32.mrb[0].mxu0
        %v3009 = vadd.f32 0.0, %v3008
        %v3010 = vpop.f32.mrb[0].mxu0
        %v3011 = vpop.f32.mrb[0].mxu0
        %v3012 = vadd.f32 0.0, %v3011
        %v3013 = vpop.f32.mrb[0].mxu0
        %3014 = vmatprep.mubr.bf16.mxu0 0
        %3015 = vmatmul.mubr.bf16.gmra.mrb[0].mxu0 %v2819
        %v3016 = vpop.f32.mrb[0].mxu0
        %v3017 = vadd.f32 0.0, %v3016
        %v3018 = vpop.f32.mrb[0].mxu0
        %v3019 = vpop.f32.mrb[0].mxu0
        %v3020 = vadd.f32 0.0, %v3019
        %v3021 = vpop.f32.mrb[0].mxu0
        %3022 = vmatprep.mubr.bf16.mxu0 0
        %3023 = vmatmul.mubr.bf16.gmra.mrb[0].mxu0 %v2822
        %v3024 = vpop.f32.mrb[0].mxu0
        %v3025 = vadd.f32 0.0, %v3024
        %v3026 = vpop.f32.mrb[0].mxu0
        %v3027 = vpop.f32.mrb[0].mxu0
        %v3028 = vadd.f32 0.0, %v3027
        %v3029 = vpop.f32.mrb[0].mxu0
        %3030 = vmatprep.mubr.bf16.mxu0 0
        %3031 = vmatmul.mubr.bf16.gmra.mrb[0].mxu0 %v2825
        %v3032 = vpop.f32.mrb[0].mxu0
        %v3033 = vadd.f32 0.0, %v3032
        %v3034 = vpop.f32.mrb[0].mxu0
        %v3035 = vpop.f32.mrb[0].mxu0
        %v3036 = vadd.f32 0.0, %v3035
        %v3037 = vpop.f32.mrb[0].mxu0
        %3038 = vmatprep.mubr.bf16.mxu0 0
        %3039 = vmatmul.mubr.bf16.gmra.mrb[0].mxu0 %v2828
        %v3040 = vpop.f32.mrb[0].mxu0
        %v3041 = vadd.f32 0.0, %v3040
        %v3042 = vpop.f32.mrb[0].mxu0
        %v3043 = vpop.f32.mrb[0].mxu0
        %v3044 = vadd.f32 0.0, %v3043
        %v3045 = vpop.f32.mrb[0].mxu0
        %3046 = vmatprep.mubr.bf16.mxu0 0
        %3047 = vmatmul.mubr.bf16.gmra.mrb[0].mxu0 %v2831
        %v3048 = vpop.f32.mrb[0].mxu0
        %v3049 = vadd.f32 0.0, %v3048
        %v3050 = vpop.f32.mrb[0].mxu0
        %v3051 = vpop.f32.mrb[0].mxu0
        %v3052 = vadd.f32 0.0, %v3051
        %v3053 = vpop.f32.mrb[0].mxu0
        %3054 = vmatprep.mubr.bf16.mxu0 0
        %3055 = vmatmul.mubr.bf16.gmra.mrb[0].mxu0 %v2834
        %v3056 = vpop.f32.mrb[0].mxu0
        %v3057 = vadd.f32 0.0, %v3056
        %v3058 = vpop.f32.mrb[0].mxu0
        %v3059 = vpop.f32.mrb[0].mxu0
        %v3060 = vadd.f32 0.0, %v3059
        %v3061 = vpop.f32.mrb[0].mxu0
        %3062 = vmatprep.mubr.bf16.mxu0 0
        %3063 = vmatmul.mubr.bf16.gmra.mrb[0].mxu0 %v2837
        %v3064 = vpop.f32.mrb[0].mxu0
        %v3065 = vadd.f32 0.0, %v3064
        %v3066 = vpop.f32.mrb[0].mxu0
        %v3067 = vpop.f32.mrb[0].mxu0
        %v3068 = vadd.f32 0.0, %v3067
        %v3069 = vpop.f32.mrb[0].mxu0
        %3070 = vmatprep.mubr.bf16.mxu0 0
        %3071 = vmatmul.mubr.bf16.gmra.mrb[0].mxu0 %v2840
        %v3072 = vpop.f32.mrb[0].mxu0
        %v3073 = vadd.f32 0.0, %v3072
        %v3074 = vpop.f32.mrb[0].mxu0
        %v3075 = vpop.f32.mrb[0].mxu0
        %v3076 = vadd.f32 0.0, %v3075
        %v3077 = vpop.f32.mrb[0].mxu0
        %3078 = vmatprep.mubr.bf16.mxu0 0
        %3079 = vmatmul.mubr.bf16.gmra.mrb[0].mxu0 %v2843
        %v3080 = vpop.f32.mrb[0].mxu0
        %v3081 = vadd.f32 0.0, %v3080
        %v3082 = vpop.f32.mrb[0].mxu0
        %v3083 = vpop.f32.mrb[0].mxu0
        %v3084 = vadd.f32 0.0, %v3083
        %v3085 = vpop.f32.mrb[0].mxu0
        %3086 = vmatprep.mubr.bf16.mxu0 0
        %3087 = vmatmul.mubr.bf16.gmra.mrb[0].mxu0 %v2846
        %v3088 = vpop.f32.mrb[0].mxu0
        %v3089 = vadd.f32 0.0, %v3088
        %v3090 = vpop.f32.mrb[0].mxu0
        %v3091 = vpop.f32.mrb[0].mxu0
        %v3092 = vadd.f32 0.0, %v3091
        %v3093 = vpop.f32.mrb[0].mxu0
        %3094 = vmatprep.mubr.bf16.mxu0 0
        %3095 = vmatmul.mubr.bf16.gmra.mrb[0].mxu0 %v2849
        %v3096 = vpop.f32.mrb[0].mxu0
        %v3097 = vadd.f32 0.0, %v3096
        %v3098 = vpop.f32.mrb[0].mxu0
        %v3099 = vpop.f32.mrb[0].mxu0
        %v3100 = vadd.f32 0.0, %v3099
        %v3101 = vpop.f32.mrb[0].mxu0
        %3102 = vmatprep.mubr.bf16.mxu0 0
        %3103 = vmatmul.mubr.bf16.gmra.mrb[0].mxu0 %v2852
        %v3104 = vpop.f32.mrb[0].mxu0
        %v3105 = vadd.f32 0.0, %v3104
        %v3106 = vpop.f32.mrb[0].mxu0
        %v3107 = vpop.f32.mrb[0].mxu0
        %v3108 = vadd.f32 0.0, %v3107
        %v3109 = vpop.f32.mrb[0].mxu0
        %3110 = vmatprep.mubr.bf16.mxu0 0
        %3111 = vmatmul.mubr.bf16.gmra.mrb[0].mxu0 %v2855
        %v3112 = vpop.f32.mrb[0].mxu0
        %v3113 = vadd.f32 0.0, %v3112
        %v3114 = vpop.f32.mrb[0].mxu0
        %v3115 = vpop.f32.mrb[0].mxu0
        %v3116 = vadd.f32 0.0, %v3115
        %v3117 = vpop.f32.mrb[0].mxu0
        %3118 = vmatprep.mubr.bf16.mxu0 0
        %3119 = vmatmul.mubr.bf16.gmra.mrb[0].mxu0 %v2858
        %v3120 = vpop.f32.mrb[0].mxu0
        %v3121 = vadd.f32 0.0, %v3120
        %v3122 = vpop.f32.mrb[0].mxu0
        %v3123 = vpop.f32.mrb[0].mxu0
        %v3124 = vadd.f32 0.0, %v3123
        %v3125 = vpop.f32.mrb[0].mxu0
        %3126 = vmatprep.mubr.bf16.mxu0 0
        %3127 = vmatmul.mubr.bf16.gmra.mrb[0].mxu0 %v2861
        %v3128 = vpop.f32.mrb[0].mxu0
        %v3129 = vadd.f32 0.0, %v3128
        %v3130 = vpop.f32.mrb[0].mxu0
        %v3131 = vpop.f32.mrb[0].mxu0
        %v3132 = vadd.f32 0.0, %v3131
        %v3133 = vpop.f32.mrb[0].mxu0
        %3134 = vmatprep.mubr.bf16.mxu0 0
        %3135 = vmatmul.mubr.bf16.gmra.mrb[0].mxu0 %v2864
        %v3136 = vpop.f32.mrb[0].mxu0
        %v3137 = vadd.f32 0.0, %v3136
        %v3138 = vpop.f32.mrb[0].mxu0
        %v3139 = vpop.f32.mrb[0].mxu0
        %v3140 = vadd.f32 0.0, %v3139
        %v3141 = vpop.f32.mrb[0].mxu0
        %3142 = vmatprep.mubr.bf16.mxu0 0
        %3143 = vmatmul.mubr.bf16.gmra.mrb[0].mxu0 %v2867
        %v3144 = vpop.f32.mrb[0].mxu0
        %v3145 = vadd.f32 0.0, %v3144
        %v3146 = vpop.f32.mrb[0].mxu0
        %v3147 = vpop.f32.mrb[0].mxu0
        %v3148 = vadd.f32 0.0, %v3147
        %v3149 = vpop.f32.mrb[0].mxu0
        %3150 = vmatprep.mubr.bf16.mxu0 0
        %3151 = vmatmul.mubr.bf16.gmra.mrb[0].mxu0 %v2870
        %v3152 = vpop.f32.mrb[0].mxu0
        %v3153 = vadd.f32 0.0, %v3152
        %v3154 = vpop.f32.mrb[0].mxu0
        %v3155 = vpop.f32.mrb[0].mxu0
        %v3156 = vadd.f32 0.0, %v3155
        %v3157 = vpop.f32.mrb[0].mxu0
        %3158 = vmatprep.mubr.bf16.mxu0 0
        %3159 = vmatmul.mubr.bf16.gmra.mrb[0].mxu0 %v2873
        %v3160 = vpop.f32.mrb[0].mxu0
        %v3161 = vadd.f32 0.0, %v3160
        %v3162 = vpop.f32.mrb[0].mxu0
        %v3163 = vpop.f32.mrb[0].mxu0
        %v3164 = vadd.f32 0.0, %v3163
        %v3165 = vpop.f32.mrb[0].mxu0
        %3166 = vdwg.mxu0
        %v3167 = vadd.f32 %v2571, %v2913
        %v3168 = vadd.f32 %v2572, %v2916
        %v3169 = vadd.f32 %v2573, %v2921
        %v3170 = vadd.f32 %v2574, %v2924
        %v3171 = vadd.f32 %v2575, %v2929
        %v3172 = vadd.f32 %v2576, %v2932
        %v3173 = vadd.f32 %v2577, %v2937
        %v3174 = vadd.f32 %v2578, %v2940
        %v3175 = vadd.f32 %v2579, %v2945
        %v3176 = vadd.f32 %v2580, %v2948
        %v3177 = vadd.f32 %v2581, %v2953
        %v3178 = vadd.f32 %v2582, %v2956
        %v3179 = vadd.f32 %v2583, %v2961
        %v3180 = vadd.f32 %v2584, %v2964
        %v3181 = vadd.f32 %v2585, %v2969
        %v3182 = vadd.f32 %v2586, %v2972
        %v3183 = vadd.f32 %v2587, %v2977
        %v3184 = vadd.f32 %v2588, %v2980
        %v3185 = vadd.f32 %v2589, %v2985
        %v3186 = vadd.f32 %v2590, %v2988
        %v3187 = vadd.f32 %v2591, %v2993
        %v3188 = vadd.f32 %v2592, %v2996
        %v3189 = vadd.f32 %v2593, %v3001
        %v3190 = vadd.f32 %v2594, %v3004
        %v3191 = vadd.f32 %v2595, %v3009
        %v3192 = vadd.f32 %v2596, %v3012
        %v3193 = vadd.f32 %v2597, %v3017
        %v3194 = vadd.f32 %v2598, %v3020
        %v3195 = vadd.f32 %v2599, %v3025
        %v3196 = vadd.f32 %v2600, %v3028
        %v3197 = vadd.f32 %v2601, %v3033
        %v3198 = vadd.f32 %v2602, %v3036
        %v3199 = vadd.f32 %v2603, %v3041
        %v3200 = vadd.f32 %v2604, %v3044
        %v3201 = vadd.f32 %v2605, %v3049
        %v3202 = vadd.f32 %v2606, %v3052
        %v3203 = vadd.f32 %v2607, %v3057
        %v3204 = vadd.f32 %v2608, %v3060
        %v3205 = vadd.f32 %v2609, %v3065
        %v3206 = vadd.f32 %v2610, %v3068
        %v3207 = vadd.f32 %v2611, %v3073
        %v3208 = vadd.f32 %v2612, %v3076
        %v3209 = vadd.f32 %v2613, %v3081
        %v3210 = vadd.f32 %v2614, %v3084
        %v3211 = vadd.f32 %v2615, %v3089
        %v3212 = vadd.f32 %v2616, %v3092
        %v3213 = vadd.f32 %v2617, %v3097
        %v3214 = vadd.f32 %v2618, %v3100
        %v3215 = vadd.f32 %v2619, %v3105
        %v3216 = vadd.f32 %v2620, %v3108
        %v3217 = vadd.f32 %v2621, %v3113
        %v3218 = vadd.f32 %v2622, %v3116
        %v3219 = vadd.f32 %v2623, %v3121
        %v3220 = vadd.f32 %v2624, %v3124
        %v3221 = vadd.f32 %v2625, %v3129
        %v3222 = vadd.f32 %v2626, %v3132
        %v3223 = vadd.f32 %v2627, %v3137
        %v3224 = vadd.f32 %v2628, %v3140
        %v3225 = vadd.f32 %v2629, %v3145
        %v3226 = vadd.f32 %v2630, %v3148
        %v3227 = vadd.f32 %v2631, %v3153
        %v3228 = vadd.f32 %v2632, %v3156
        %v3229 = vadd.f32 %v2633, %v3161
        %v3230 = vadd.f32 %v2634, %v3164
        %s3231 = scalar_lea.vmem %s3, 20
        %v3232 = vld [vmem:[%s3231] sm:$0xf]
        %vm3233 = vcmask 1045504
        %v3234 = vrot.slane %v668, 2
        %v3235 = vrot.slane %v669, 2
        %v3236 = vsel %vm3233, %v3234, %v3235
        %v3237 = vrot.slane %v670, 2
        %v3238 = vsel %vm3233, %v3235, %v3237
        %v3239 = vrot.slane %v671, 2
        %v3240 = vsel %vm3233, %v3237, %v3239
        %v3241 = vrot.slane %v672, 2
        %v3242 = vsel %vm3233, %v3239, %v3241
        %v3243 = vrot.slane %v673, 2
        %v3244 = vsel %vm3233, %v3241, %v3243
        %v3245 = vrot.slane %v674, 2
        %v3246 = vsel %vm3233, %v3243, %v3245
        %v3247 = vrot.slane %v675, 2
        %v3248 = vsel %vm3233, %v3245, %v3247
        %v3249 = vrot.slane %v676, 2
        %v3250 = vsel %vm3233, %v3247, %v3249
        %v3251 = vrot.slane %v677, 2
        %v3252 = vsel %vm3233, %v3249, %v3251
        %v3253 = vrot.slane %v678, 2
        %v3254 = vsel %vm3233, %v3251, %v3253
        %v3255 = vrot.slane %v679, 2
        %v3256 = vsel %vm3233, %v3253, %v3255
        %v3257 = vrot.slane %v680, 2
        %v3258 = vsel %vm3233, %v3255, %v3257
        %v3259 = vrot.slane %v681, 2
        %v3260 = vsel %vm3233, %v3257, %v3259
        %v3261 = vrot.slane %v682, 2
        %v3262 = vsel %vm3233, %v3259, %v3261
        %v3263 = vrot.slane %v683, 2
        %v3264 = vsel %vm3233, %v3261, %v3263
        %v3265 = vrot.slane %v684, 2
        %v3266 = vsel %vm3233, %v3263, %v3265
        %v3267 = vrot.slane %v685, 2
        %v3268 = vsel %vm3233, %v3265, %v3267
        %v3269 = vrot.slane %v686, 2
        %v3270 = vsel %vm3233, %v3267, %v3269
        %v3271 = vrot.slane %v687, 2
        %v3272 = vsel %vm3233, %v3269, %v3271
        %v3273 = vrot.slane %v688, 2
        %v3274 = vsel %vm3233, %v3271, %v3273
        %v3275 = vrot.slane %v689, 2
        %v3276 = vsel %vm3233, %v3273, %v3275
        %v3277 = vrot.slane %v690, 2
        %v3278 = vsel %vm3233, %v3275, %v3277
        %v3279 = vrot.slane %v691, 2
        %v3280 = vsel %vm3233, %v3277, %v3279
        %v3281 = vrot.slane %v692, 2
        %v3282 = vsel %vm3233, %v3279, %v3281
        %v3283 = vrot.slane %v693, 2
        %v3284 = vsel %vm3233, %v3281, %v3283
        %v3285 = vrot.slane %v694, 2
        %v3286 = vsel %vm3233, %v3283, %v3285
        %v3287 = vrot.slane %v695, 2
        %v3288 = vsel %vm3233, %v3285, %v3287
        %v3289 = vrot.slane %v696, 2
        %v3290 = vsel %vm3233, %v3287, %v3289
        %v3291 = vrot.slane %v697, 2
        %v3292 = vsel %vm3233, %v3289, %v3291
        %v3293 = vrot.slane %v698, 2
        %v3294 = vsel %vm3233, %v3291, %v3293
        %v3295 = vrot.slane %v2263, 2
        %v3296 = vsel %vm3233, %v3293, %v3295
        %v3297 = vrot.slane %v2264, 2
        %v3298 = vsel %vm3233, %v3295, %v3297
        %v3300 = vsel %vm964, %v3236, 0
        %v3303 = vsel %vm964, %v3238, 0
        %v3306 = vsel %vm964, %v3240, 0
        %v3309 = vsel %vm964, %v3242, 0
        %v3312 = vsel %vm964, %v3244, 0
        %v3315 = vsel %vm964, %v3246, 0
        %v3318 = vsel %vm964, %v3248, 0
        %v3321 = vsel %vm964, %v3250, 0
        %v3324 = vsel %vm964, %v3252, 0
        %v3327 = vsel %vm964, %v3254, 0
        %v3330 = vsel %vm964, %v3256, 0
        %v3333 = vsel %vm964, %v3258, 0
        %v3336 = vsel %vm964, %v3260, 0
        %v3339 = vsel %vm964, %v3262, 0
        %v3342 = vsel %vm964, %v3264, 0
        %v3345 = vsel %vm964, %v3266, 0
        %v3348 = vsel %vm964, %v3268, 0
        %v3351 = vsel %vm964, %v3270, 0
        %v3354 = vsel %vm964, %v3272, 0
        %v3357 = vsel %vm964, %v3274, 0
        %v3360 = vsel %vm964, %v3276, 0
        %v3363 = vsel %vm964, %v3278, 0
        %v3366 = vsel %vm964, %v3280, 0
        %v3369 = vsel %vm964, %v3282, 0
        %v3372 = vsel %vm964, %v3284, 0
        %v3375 = vsel %vm964, %v3286, 0
        %v3378 = vsel %vm964, %v3288, 0
        %v3381 = vsel %vm964, %v3290, 0
        %v3384 = vsel %vm964, %v3292, 0
        %v3387 = vsel %vm964, %v3294, 0
        %v3390 = vsel %vm964, %v3296, 0
        %v3393 = vsel %vm964, %v3298, 0
        %v3396 = vsel %vm1061, %v3232, 0
        %3398 = vmatprep.subr.bf16.mxu0 0
        %3399 = vmatpush1.bf16.msra.mxu0 %v3396
        %3400 = vmatprep.subr.bf16.mxu0 0
        %3401 = vmatpush1.bf16.msra.mxu0 0
        %3402 = vmatprep.subr.bf16.mxu0 0
        %3403 = vmatpush1.bf16.msra.mxu0 0
        %3404 = vmatprep.subr.bf16.mxu0 0
        %3405 = vmatpush1.bf16.msra.mxu0 0
        %3406 = vmatprep.subr.bf16.mxu0 0
        %3407 = vmatpush1.bf16.msra.mxu0 0
        %3408 = vmatprep.subr.bf16.mxu0 0
        %3409 = vmatpush1.bf16.msra.mxu0 0
        %3410 = vmatprep.subr.bf16.mxu0 0
        %3411 = vmatpush1.bf16.msra.mxu0 0
        %3412 = vmatprep.subr.bf16.mxu0 0
        %3413 = vmatpush1.bf16.msra.mxu0 0
        %3414 = vmatprep.subr.bf16.mxu0 0
        %3415 = vmatpush1.bf16.msra.mxu0 0
        %3416 = vmatprep.subr.bf16.mxu0 0
        %3417 = vmatpush1.bf16.msra.mxu0 0
        %3418 = vmatprep.subr.bf16.mxu0 0
        %3419 = vmatpush1.bf16.msra.mxu0 0
        %3420 = vmatprep.subr.bf16.mxu0 0
        %3421 = vmatpush1.bf16.msra.mxu0 0
        %3422 = vmatprep.subr.bf16.mxu0 0
        %3423 = vmatpush1.bf16.msra.mxu0 0
        %3424 = vmatprep.subr.bf16.mxu0 0
        %3425 = vmatpush1.bf16.msra.mxu0 0
        %3426 = vmatprep.subr.bf16.mxu0 0
        %3427 = vmatpush1.bf16.msra.mxu0 0
        %3428 = vmatprep.subr.bf16.mxu0 0
        %3429 = vmatpush1.bf16.msra.mxu0 0
        %3430 = vmatprep.mubr.bf16.mxu0 0
        %3431 = vmatmul.mubr.bf16.gmra.mrb[0].mxu0 %v3300
        %v3432 = vpop.f32.mrb[0].mxu0
        %v3433 = vadd.f32 0.0, %v3432
        %v3434 = vpop.f32.mrb[0].mxu0
        %v3435 = vpop.f32.mrb[0].mxu0
        %v3436 = vadd.f32 0.0, %v3435
        %v3437 = vpop.f32.mrb[0].mxu0
        %3438 = vmatprep.mubr.bf16.mxu0 0
        %3439 = vmatmul.mubr.bf16.gmra.mrb[0].mxu0 %v3303
        %v3440 = vpop.f32.mrb[0].mxu0
        %v3441 = vadd.f32 0.0, %v3440
        %v3442 = vpop.f32.mrb[0].mxu0
        %v3443 = vpop.f32.mrb[0].mxu0
        %v3444 = vadd.f32 0.0, %v3443
        %v3445 = vpop.f32.mrb[0].mxu0
        %3446 = vmatprep.mubr.bf16.mxu0 0
        %3447 = vmatmul.mubr.bf16.gmra.mrb[0].mxu0 %v3306
        %v3448 = vpop.f32.mrb[0].mxu0
        %v3449 = vadd.f32 0.0, %v3448
        %v3450 = vpop.f32.mrb[0].mxu0
        %v3451 = vpop.f32.mrb[0].mxu0
        %v3452 = vadd.f32 0.0, %v3451
        %v3453 = vpop.f32.mrb[0].mxu0
        %3454 = vmatprep.mubr.bf16.mxu0 0
        %3455 = vmatmul.mubr.bf16.gmra.mrb[0].mxu0 %v3309
        %v3456 = vpop.f32.mrb[0].mxu0
        %v3457 = vadd.f32 0.0, %v3456
        %v3458 = vpop.f32.mrb[0].mxu0
        %v3459 = vpop.f32.mrb[0].mxu0
        %v3460 = vadd.f32 0.0, %v3459
        %v3461 = vpop.f32.mrb[0].mxu0
        %3462 = vmatprep.mubr.bf16.mxu0 0
        %3463 = vmatmul.mubr.bf16.gmra.mrb[0].mxu0 %v3312
        %v3464 = vpop.f32.mrb[0].mxu0
        %v3465 = vadd.f32 0.0, %v3464
        %v3466 = vpop.f32.mrb[0].mxu0
        %v3467 = vpop.f32.mrb[0].mxu0
        %v3468 = vadd.f32 0.0, %v3467
        %v3469 = vpop.f32.mrb[0].mxu0
        %3470 = vmatprep.mubr.bf16.mxu0 0
        %3471 = vmatmul.mubr.bf16.gmra.mrb[0].mxu0 %v3315
        %v3472 = vpop.f32.mrb[0].mxu0
        %v3473 = vadd.f32 0.0, %v3472
        %v3474 = vpop.f32.mrb[0].mxu0
        %v3475 = vpop.f32.mrb[0].mxu0
        %v3476 = vadd.f32 0.0, %v3475
        %v3477 = vpop.f32.mrb[0].mxu0
        %3478 = vmatprep.mubr.bf16.mxu0 0
        %3479 = vmatmul.mubr.bf16.gmra.mrb[0].mxu0 %v3318
        %v3480 = vpop.f32.mrb[0].mxu0
        %v3481 = vadd.f32 0.0, %v3480
        %v3482 = vpop.f32.mrb[0].mxu0
        %v3483 = vpop.f32.mrb[0].mxu0
        %v3484 = vadd.f32 0.0, %v3483
        %v3485 = vpop.f32.mrb[0].mxu0
        %3486 = vmatprep.mubr.bf16.mxu0 0
        %3487 = vmatmul.mubr.bf16.gmra.mrb[0].mxu0 %v3321
        %v3488 = vpop.f32.mrb[0].mxu0
        %v3489 = vadd.f32 0.0, %v3488
        %v3490 = vpop.f32.mrb[0].mxu0
        %v3491 = vpop.f32.mrb[0].mxu0
        %v3492 = vadd.f32 0.0, %v3491
        %v3493 = vpop.f32.mrb[0].mxu0
        %3494 = vmatprep.mubr.bf16.mxu0 0
        %3495 = vmatmul.mubr.bf16.gmra.mrb[0].mxu0 %v3324
        %v3496 = vpop.f32.mrb[0].mxu0
        %v3497 = vadd.f32 0.0, %v3496
        %v3498 = vpop.f32.mrb[0].mxu0
        %v3499 = vpop.f32.mrb[0].mxu0
        %v3500 = vadd.f32 0.0, %v3499
        %v3501 = vpop.f32.mrb[0].mxu0
        %3502 = vmatprep.mubr.bf16.mxu0 0
        %3503 = vmatmul.mubr.bf16.gmra.mrb[0].mxu0 %v3327
        %v3504 = vpop.f32.mrb[0].mxu0
        %v3505 = vadd.f32 0.0, %v3504
        %v3506 = vpop.f32.mrb[0].mxu0
        %v3507 = vpop.f32.mrb[0].mxu0
        %v3508 = vadd.f32 0.0, %v3507
        %v3509 = vpop.f32.mrb[0].mxu0
        %3510 = vmatprep.mubr.bf16.mxu0 0
        %3511 = vmatmul.mubr.bf16.gmra.mrb[0].mxu0 %v3330
        %v3512 = vpop.f32.mrb[0].mxu0
        %v3513 = vadd.f32 0.0, %v3512
        %v3514 = vpop.f32.mrb[0].mxu0
        %v3515 = vpop.f32.mrb[0].mxu0
        %v3516 = vadd.f32 0.0, %v3515
        %v3517 = vpop.f32.mrb[0].mxu0
        %3518 = vmatprep.mubr.bf16.mxu0 0
        %3519 = vmatmul.mubr.bf16.gmra.mrb[0].mxu0 %v3333
        %v3520 = vpop.f32.mrb[0].mxu0
        %v3521 = vadd.f32 0.0, %v3520
        %v3522 = vpop.f32.mrb[0].mxu0
        %v3523 = vpop.f32.mrb[0].mxu0
        %v3524 = vadd.f32 0.0, %v3523
        %v3525 = vpop.f32.mrb[0].mxu0
        %3526 = vmatprep.mubr.bf16.mxu0 0
        %3527 = vmatmul.mubr.bf16.gmra.mrb[0].mxu0 %v3336
        %v3528 = vpop.f32.mrb[0].mxu0
        %v3529 = vadd.f32 0.0, %v3528
        %v3530 = vpop.f32.mrb[0].mxu0
        %v3531 = vpop.f32.mrb[0].mxu0
        %v3532 = vadd.f32 0.0, %v3531
        %v3533 = vpop.f32.mrb[0].mxu0
        %3534 = vmatprep.mubr.bf16.mxu0 0
        %3535 = vmatmul.mubr.bf16.gmra.mrb[0].mxu0 %v3339
        %v3536 = vpop.f32.mrb[0].mxu0
        %v3537 = vadd.f32 0.0, %v3536
        %v3538 = vpop.f32.mrb[0].mxu0
        %v3539 = vpop.f32.mrb[0].mxu0
        %v3540 = vadd.f32 0.0, %v3539
        %v3541 = vpop.f32.mrb[0].mxu0
        %3542 = vmatprep.mubr.bf16.mxu0 0
        %3543 = vmatmul.mubr.bf16.gmra.mrb[0].mxu0 %v3342
        %v3544 = vpop.f32.mrb[0].mxu0
        %v3545 = vadd.f32 0.0, %v3544
        %v3546 = vpop.f32.mrb[0].mxu0
        %v3547 = vpop.f32.mrb[0].mxu0
        %v3548 = vadd.f32 0.0, %v3547
        %v3549 = vpop.f32.mrb[0].mxu0
        %3550 = vmatprep.mubr.bf16.mxu0 0
        %3551 = vmatmul.mubr.bf16.gmra.mrb[0].mxu0 %v3345
        %v3552 = vpop.f32.mrb[0].mxu0
        %v3553 = vadd.f32 0.0, %v3552
        %v3554 = vpop.f32.mrb[0].mxu0
        %v3555 = vpop.f32.mrb[0].mxu0
        %v3556 = vadd.f32 0.0, %v3555
        %v3557 = vpop.f32.mrb[0].mxu0
        %3558 = vmatprep.mubr.bf16.mxu0 0
        %3559 = vmatmul.mubr.bf16.gmra.mrb[0].mxu0 %v3348
        %v3560 = vpop.f32.mrb[0].mxu0
        %v3561 = vadd.f32 0.0, %v3560
        %v3562 = vpop.f32.mrb[0].mxu0
        %v3563 = vpop.f32.mrb[0].mxu0
        %v3564 = vadd.f32 0.0, %v3563
        %v3565 = vpop.f32.mrb[0].mxu0
        %3566 = vmatprep.mubr.bf16.mxu0 0
        %3567 = vmatmul.mubr.bf16.gmra.mrb[0].mxu0 %v3351
        %v3568 = vpop.f32.mrb[0].mxu0
        %v3569 = vadd.f32 0.0, %v3568
        %v3570 = vpop.f32.mrb[0].mxu0
        %v3571 = vpop.f32.mrb[0].mxu0
        %v3572 = vadd.f32 0.0, %v3571
        %v3573 = vpop.f32.mrb[0].mxu0
        %3574 = vmatprep.mubr.bf16.mxu0 0
        %3575 = vmatmul.mubr.bf16.gmra.mrb[0].mxu0 %v3354
        %v3576 = vpop.f32.mrb[0].mxu0
        %v3577 = vadd.f32 0.0, %v3576
        %v3578 = vpop.f32.mrb[0].mxu0
        %v3579 = vpop.f32.mrb[0].mxu0
        %v3580 = vadd.f32 0.0, %v3579
        %v3581 = vpop.f32.mrb[0].mxu0
        %3582 = vmatprep.mubr.bf16.mxu0 0
        %3583 = vmatmul.mubr.bf16.gmra.mrb[0].mxu0 %v3357
        %v3584 = vpop.f32.mrb[0].mxu0
        %v3585 = vadd.f32 0.0, %v3584
        %v3586 = vpop.f32.mrb[0].mxu0
        %v3587 = vpop.f32.mrb[0].mxu0
        %v3588 = vadd.f32 0.0, %v3587
        %v3589 = vpop.f32.mrb[0].mxu0
        %3590 = vmatprep.mubr.bf16.mxu0 0
        %3591 = vmatmul.mubr.bf16.gmra.mrb[0].mxu0 %v3360
        %v3592 = vpop.f32.mrb[0].mxu0
        %v3593 = vadd.f32 0.0, %v3592
        %v3594 = vpop.f32.mrb[0].mxu0
        %v3595 = vpop.f32.mrb[0].mxu0
        %v3596 = vadd.f32 0.0, %v3595
        %v3597 = vpop.f32.mrb[0].mxu0
        %3598 = vmatprep.mubr.bf16.mxu0 0
        %3599 = vmatmul.mubr.bf16.gmra.mrb[0].mxu0 %v3363
        %v3600 = vpop.f32.mrb[0].mxu0
        %v3601 = vadd.f32 0.0, %v3600
        %v3602 = vpop.f32.mrb[0].mxu0
        %v3603 = vpop.f32.mrb[0].mxu0
        %v3604 = vadd.f32 0.0, %v3603
        %v3605 = vpop.f32.mrb[0].mxu0
        %3606 = vmatprep.mubr.bf16.mxu0 0
        %3607 = vmatmul.mubr.bf16.gmra.mrb[0].mxu0 %v3366
        %v3608 = vpop.f32.mrb[0].mxu0
        %v3609 = vadd.f32 0.0, %v3608
        %v3610 = vpop.f32.mrb[0].mxu0
        %v3611 = vpop.f32.mrb[0].mxu0
        %v3612 = vadd.f32 0.0, %v3611
        %v3613 = vpop.f32.mrb[0].mxu0
        %3614 = vmatprep.mubr.bf16.mxu0 0
        %3615 = vmatmul.mubr.bf16.gmra.mrb[0].mxu0 %v3369
        %v3616 = vpop.f32.mrb[0].mxu0
        %v3617 = vadd.f32 0.0, %v3616
        %v3618 = vpop.f32.mrb[0].mxu0
        %v3619 = vpop.f32.mrb[0].mxu0
        %v3620 = vadd.f32 0.0, %v3619
        %v3621 = vpop.f32.mrb[0].mxu0
        %3622 = vmatprep.mubr.bf16.mxu0 0
        %3623 = vmatmul.mubr.bf16.gmra.mrb[0].mxu0 %v3372
        %v3624 = vpop.f32.mrb[0].mxu0
        %v3625 = vadd.f32 0.0, %v3624
        %v3626 = vpop.f32.mrb[0].mxu0
        %v3627 = vpop.f32.mrb[0].mxu0
        %v3628 = vadd.f32 0.0, %v3627
        %v3629 = vpop.f32.mrb[0].mxu0
        %3630 = vmatprep.mubr.bf16.mxu0 0
        %3631 = vmatmul.mubr.bf16.gmra.mrb[0].mxu0 %v3375
        %v3632 = vpop.f32.mrb[0].mxu0
        %v3633 = vadd.f32 0.0, %v3632
        %v3634 = vpop.f32.mrb[0].mxu0
        %v3635 = vpop.f32.mrb[0].mxu0
        %v3636 = vadd.f32 0.0, %v3635
        %v3637 = vpop.f32.mrb[0].mxu0
        %3638 = vmatprep.mubr.bf16.mxu0 0
        %3639 = vmatmul.mubr.bf16.gmra.mrb[0].mxu0 %v3378
        %v3640 = vpop.f32.mrb[0].mxu0
        %v3641 = vadd.f32 0.0, %v3640
        %v3642 = vpop.f32.mrb[0].mxu0
        %v3643 = vpop.f32.mrb[0].mxu0
        %v3644 = vadd.f32 0.0, %v3643
        %v3645 = vpop.f32.mrb[0].mxu0
        %3646 = vmatprep.mubr.bf16.mxu0 0
        %3647 = vmatmul.mubr.bf16.gmra.mrb[0].mxu0 %v3381
        %v3648 = vpop.f32.mrb[0].mxu0
        %v3649 = vadd.f32 0.0, %v3648
        %v3650 = vpop.f32.mrb[0].mxu0
        %v3651 = vpop.f32.mrb[0].mxu0
        %v3652 = vadd.f32 0.0, %v3651
        %v3653 = vpop.f32.mrb[0].mxu0
        %3654 = vmatprep.mubr.bf16.mxu0 0
        %3655 = vmatmul.mubr.bf16.gmra.mrb[0].mxu0 %v3384
        %v3656 = vpop.f32.mrb[0].mxu0
        %v3657 = vadd.f32 0.0, %v3656
        %v3658 = vpop.f32.mrb[0].mxu0
        %v3659 = vpop.f32.mrb[0].mxu0
        %v3660 = vadd.f32 0.0, %v3659
        %v3661 = vpop.f32.mrb[0].mxu0
        %3662 = vmatprep.mubr.bf16.mxu0 0
        %3663 = vmatmul.mubr.bf16.gmra.mrb[0].mxu0 %v3387
        %v3664 = vpop.f32.mrb[0].mxu0
        %v3665 = vadd.f32 0.0, %v3664
        %v3666 = vpop.f32.mrb[0].mxu0
        %v3667 = vpop.f32.mrb[0].mxu0
        %v3668 = vadd.f32 0.0, %v3667
        %v3669 = vpop.f32.mrb[0].mxu0
        %3670 = vmatprep.mubr.bf16.mxu0 0
        %3671 = vmatmul.mubr.bf16.gmra.mrb[0].mxu0 %v3390
        %v3672 = vpop.f32.mrb[0].mxu0
        %v3673 = vadd.f32 0.0, %v3672
        %v3674 = vpop.f32.mrb[0].mxu0
        %v3675 = vpop.f32.mrb[0].mxu0
        %v3676 = vadd.f32 0.0, %v3675
        %v3677 = vpop.f32.mrb[0].mxu0
        %3678 = vmatprep.mubr.bf16.mxu0 0
        %3679 = vmatmul.mubr.bf16.gmra.mrb[0].mxu0 %v3393
        %v3680 = vpop.f32.mrb[0].mxu0
        %v3681 = vadd.f32 0.0, %v3680
        %v3682 = vpop.f32.mrb[0].mxu0
        %v3683 = vpop.f32.mrb[0].mxu0
        %v3684 = vadd.f32 0.0, %v3683
        %v3685 = vpop.f32.mrb[0].mxu0
        %3686 = vdwg.mxu0
        %v3687 = vadd.f32 %v3167, %v3433
        %v3688 = vadd.f32 %v3168, %v3436
        %v3689 = vadd.f32 %v3169, %v3441
        %v3690 = vadd.f32 %v3170, %v3444
        %v3691 = vadd.f32 %v3171, %v3449
        %v3692 = vadd.f32 %v3172, %v3452
        %v3693 = vadd.f32 %v3173, %v3457
        %v3694 = vadd.f32 %v3174, %v3460
        %v3695 = vadd.f32 %v3175, %v3465
        %v3696 = vadd.f32 %v3176, %v3468
        %v3697 = vadd.f32 %v3177, %v3473
        %v3698 = vadd.f32 %v3178, %v3476
        %v3699 = vadd.f32 %v3179, %v3481
        %v3700 = vadd.f32 %v3180, %v3484
        %v3701 = vadd.f32 %v3181, %v3489
        %v3702 = vadd.f32 %v3182, %v3492
        %v3703 = vadd.f32 %v3183, %v3497
        %v3704 = vadd.f32 %v3184, %v3500
        %v3705 = vadd.f32 %v3185, %v3505
        %v3706 = vadd.f32 %v3186, %v3508
        %v3707 = vadd.f32 %v3187, %v3513
        %v3708 = vadd.f32 %v3188, %v3516
        %v3709 = vadd.f32 %v3189, %v3521
        %v3710 = vadd.f32 %v3190, %v3524
        %v3711 = vadd.f32 %v3191, %v3529
        %v3712 = vadd.f32 %v3192, %v3532
        %v3713 = vadd.f32 %v3193, %v3537
        %v3714 = vadd.f32 %v3194, %v3540
        %v3715 = vadd.f32 %v3195, %v3545
        %v3716 = vadd.f32 %v3196, %v3548
        %v3717 = vadd.f32 %v3197, %v3553
        %v3718 = vadd.f32 %v3198, %v3556
        %v3719 = vadd.f32 %v3199, %v3561
        %v3720 = vadd.f32 %v3200, %v3564
        %v3721 = vadd.f32 %v3201, %v3569
        %v3722 = vadd.f32 %v3202, %v3572
        %v3723 = vadd.f32 %v3203, %v3577
        %v3724 = vadd.f32 %v3204, %v3580
        %v3725 = vadd.f32 %v3205, %v3585
        %v3726 = vadd.f32 %v3206, %v3588
        %v3727 = vadd.f32 %v3207, %v3593
        %v3728 = vadd.f32 %v3208, %v3596
        %v3729 = vadd.f32 %v3209, %v3601
        %v3730 = vadd.f32 %v3210, %v3604
        %v3731 = vadd.f32 %v3211, %v3609
        %v3732 = vadd.f32 %v3212, %v3612
        %v3733 = vadd.f32 %v3213, %v3617
        %v3734 = vadd.f32 %v3214, %v3620
        %v3735 = vadd.f32 %v3215, %v3625
        %v3736 = vadd.f32 %v3216, %v3628
        %v3737 = vadd.f32 %v3217, %v3633
        %v3738 = vadd.f32 %v3218, %v3636
        %v3739 = vadd.f32 %v3219, %v3641
        %v3740 = vadd.f32 %v3220, %v3644
        %v3741 = vadd.f32 %v3221, %v3649
        %v3742 = vadd.f32 %v3222, %v3652
        %v3743 = vadd.f32 %v3223, %v3657
        %v3744 = vadd.f32 %v3224, %v3660
        %v3745 = vadd.f32 %v3225, %v3665
        %v3746 = vadd.f32 %v3226, %v3668
        %v3747 = vadd.f32 %v3227, %v3673
        %v3748 = vadd.f32 %v3228, %v3676
        %v3749 = vadd.f32 %v3229, %v3681
        %v3750 = vadd.f32 %v3230, %v3684
        %v3751 = vpack.c.bf16 %v665, %v664
        %v3752 = vpack.c.bf16 %v666, %v666
        %s3753 = scalar_lea.vmem %s3, 24
        %v3754 = vld [vmem:[%s3753] sm:$0xf]
        %v3757 = vrot.slane %v3751, 2
        %v3758 = vsel %vm3233, %v3295, %v3757
        %v3759 = vrot.slane %v3752, 2
        %v3760 = vsel %vm3233, %v3757, %v3759
        %v3762 = vsel %vm964, %v3758, 0
        %v3765 = vsel %vm964, %v3760, 0
        %v3768 = vsel %vm1061, %v3754, 0
        %3770 = vmatprep.subr.bf16.mxu0 0
        %3771 = vmatpush1.bf16.msra.mxu0 %v3768
        %3772 = vmatprep.subr.bf16.mxu0 0
        %3773 = vmatpush1.bf16.msra.mxu0 0
        %3774 = vmatprep.subr.bf16.mxu0 0
        %3775 = vmatpush1.bf16.msra.mxu0 0
        %3776 = vmatprep.subr.bf16.mxu0 0
        %3777 = vmatpush1.bf16.msra.mxu0 0
        %3778 = vmatprep.subr.bf16.mxu0 0
        %3779 = vmatpush1.bf16.msra.mxu0 0
        %3780 = vmatprep.subr.bf16.mxu0 0
        %3781 = vmatpush1.bf16.msra.mxu0 0
        %3782 = vmatprep.subr.bf16.mxu0 0
        %3783 = vmatpush1.bf16.msra.mxu0 0
        %3784 = vmatprep.subr.bf16.mxu0 0
        %3785 = vmatpush1.bf16.msra.mxu0 0
        %3786 = vmatprep.subr.bf16.mxu0 0
        %3787 = vmatpush1.bf16.msra.mxu0 0
        %3788 = vmatprep.subr.bf16.mxu0 0
        %3789 = vmatpush1.bf16.msra.mxu0 0
        %3790 = vmatprep.subr.bf16.mxu0 0
        %3791 = vmatpush1.bf16.msra.mxu0 0
        %3792 = vmatprep.subr.bf16.mxu0 0
        %3793 = vmatpush1.bf16.msra.mxu0 0
        %3794 = vmatprep.subr.bf16.mxu0 0
        %3795 = vmatpush1.bf16.msra.mxu0 0
        %3796 = vmatprep.subr.bf16.mxu0 0
        %3797 = vmatpush1.bf16.msra.mxu0 0
        %3798 = vmatprep.subr.bf16.mxu0 0
        %3799 = vmatpush1.bf16.msra.mxu0 0
        %3800 = vmatprep.subr.bf16.mxu0 0
        %3801 = vmatpush1.bf16.msra.mxu0 0
        %3802 = vmatprep.mubr.bf16.mxu0 0
        %3803 = vmatmul.mubr.bf16.gmra.mrb[0].mxu0 %v3303
        %v3804 = vpop.f32.mrb[0].mxu0
        %v3805 = vadd.f32 0.0, %v3804
        %v3806 = vpop.f32.mrb[0].mxu0
        %v3807 = vpop.f32.mrb[0].mxu0
        %v3808 = vadd.f32 0.0, %v3807
        %v3809 = vpop.f32.mrb[0].mxu0
        %3810 = vmatprep.mubr.bf16.mxu0 0
        %3811 = vmatmul.mubr.bf16.gmra.mrb[0].mxu0 %v3306
        %v3812 = vpop.f32.mrb[0].mxu0
        %v3813 = vadd.f32 0.0, %v3812
        %v3814 = vpop.f32.mrb[0].mxu0
        %v3815 = vpop.f32.mrb[0].mxu0
        %v3816 = vadd.f32 0.0, %v3815
        %v3817 = vpop.f32.mrb[0].mxu0
        %3818 = vmatprep.mubr.bf16.mxu0 0
        %3819 = vmatmul.mubr.bf16.gmra.mrb[0].mxu0 %v3309
        %v3820 = vpop.f32.mrb[0].mxu0
        %v3821 = vadd.f32 0.0, %v3820
        %v3822 = vpop.f32.mrb[0].mxu0
        %v3823 = vpop.f32.mrb[0].mxu0
        %v3824 = vadd.f32 0.0, %v3823
        %v3825 = vpop.f32.mrb[0].mxu0
        %3826 = vmatprep.mubr.bf16.mxu0 0
        %3827 = vmatmul.mubr.bf16.gmra.mrb[0].mxu0 %v3312
        %v3828 = vpop.f32.mrb[0].mxu0
        %v3829 = vadd.f32 0.0, %v3828
        %v3830 = vpop.f32.mrb[0].mxu0
        %v3831 = vpop.f32.mrb[0].mxu0
        %v3832 = vadd.f32 0.0, %v3831
        %v3833 = vpop.f32.mrb[0].mxu0
        %3834 = vmatprep.mubr.bf16.mxu0 0
        %3835 = vmatmul.mubr.bf16.gmra.mrb[0].mxu0 %v3315
        %v3836 = vpop.f32.mrb[0].mxu0
        %v3837 = vadd.f32 0.0, %v3836
        %v3838 = vpop.f32.mrb[0].mxu0
        %v3839 = vpop.f32.mrb[0].mxu0
        %v3840 = vadd.f32 0.0, %v3839
        %v3841 = vpop.f32.mrb[0].mxu0
        %3842 = vmatprep.mubr.bf16.mxu0 0
        %3843 = vmatmul.mubr.bf16.gmra.mrb[0].mxu0 %v3318
        %v3844 = vpop.f32.mrb[0].mxu0
        %v3845 = vadd.f32 0.0, %v3844
        %v3846 = vpop.f32.mrb[0].mxu0
        %v3847 = vpop.f32.mrb[0].mxu0
        %v3848 = vadd.f32 0.0, %v3847
        %v3849 = vpop.f32.mrb[0].mxu0
        %3850 = vmatprep.mubr.bf16.mxu0 0
        %3851 = vmatmul.mubr.bf16.gmra.mrb[0].mxu0 %v3321
        %v3852 = vpop.f32.mrb[0].mxu0
        %v3853 = vadd.f32 0.0, %v3852
        %v3854 = vpop.f32.mrb[0].mxu0
        %v3855 = vpop.f32.mrb[0].mxu0
        %v3856 = vadd.f32 0.0, %v3855
        %v3857 = vpop.f32.mrb[0].mxu0
        %3858 = vmatprep.mubr.bf16.mxu0 0
        %3859 = vmatmul.mubr.bf16.gmra.mrb[0].mxu0 %v3324
        %v3860 = vpop.f32.mrb[0].mxu0
        %v3861 = vadd.f32 0.0, %v3860
        %v3862 = vpop.f32.mrb[0].mxu0
        %v3863 = vpop.f32.mrb[0].mxu0
        %v3864 = vadd.f32 0.0, %v3863
        %v3865 = vpop.f32.mrb[0].mxu0
        %3866 = vmatprep.mubr.bf16.mxu0 0
        %3867 = vmatmul.mubr.bf16.gmra.mrb[0].mxu0 %v3327
        %v3868 = vpop.f32.mrb[0].mxu0
        %v3869 = vadd.f32 0.0, %v3868
        %v3870 = vpop.f32.mrb[0].mxu0
        %v3871 = vpop.f32.mrb[0].mxu0
        %v3872 = vadd.f32 0.0, %v3871
        %v3873 = vpop.f32.mrb[0].mxu0
        %3874 = vmatprep.mubr.bf16.mxu0 0
        %3875 = vmatmul.mubr.bf16.gmra.mrb[0].mxu0 %v3330
        %v3876 = vpop.f32.mrb[0].mxu0
        %v3877 = vadd.f32 0.0, %v3876
        %v3878 = vpop.f32.mrb[0].mxu0
        %v3879 = vpop.f32.mrb[0].mxu0
        %v3880 = vadd.f32 0.0, %v3879
        %v3881 = vpop.f32.mrb[0].mxu0
        %3882 = vmatprep.mubr.bf16.mxu0 0
        %3883 = vmatmul.mubr.bf16.gmra.mrb[0].mxu0 %v3333
        %v3884 = vpop.f32.mrb[0].mxu0
        %v3885 = vadd.f32 0.0, %v3884
        %v3886 = vpop.f32.mrb[0].mxu0
        %v3887 = vpop.f32.mrb[0].mxu0
        %v3888 = vadd.f32 0.0, %v3887
        %v3889 = vpop.f32.mrb[0].mxu0
        %3890 = vmatprep.mubr.bf16.mxu0 0
        %3891 = vmatmul.mubr.bf16.gmra.mrb[0].mxu0 %v3336
        %v3892 = vpop.f32.mrb[0].mxu0
        %v3893 = vadd.f32 0.0, %v3892
        %v3894 = vpop.f32.mrb[0].mxu0
        %v3895 = vpop.f32.mrb[0].mxu0
        %v3896 = vadd.f32 0.0, %v3895
        %v3897 = vpop.f32.mrb[0].mxu0
        %3898 = vmatprep.mubr.bf16.mxu0 0
        %3899 = vmatmul.mubr.bf16.gmra.mrb[0].mxu0 %v3339
        %v3900 = vpop.f32.mrb[0].mxu0
        %v3901 = vadd.f32 0.0, %v3900
        %v3902 = vpop.f32.mrb[0].mxu0
        %v3903 = vpop.f32.mrb[0].mxu0
        %v3904 = vadd.f32 0.0, %v3903
        %v3905 = vpop.f32.mrb[0].mxu0
        %3906 = vmatprep.mubr.bf16.mxu0 0
        %3907 = vmatmul.mubr.bf16.gmra.mrb[0].mxu0 %v3342
        %v3908 = vpop.f32.mrb[0].mxu0
        %v3909 = vadd.f32 0.0, %v3908
        %v3910 = vpop.f32.mrb[0].mxu0
        %v3911 = vpop.f32.mrb[0].mxu0
        %v3912 = vadd.f32 0.0, %v3911
        %v3913 = vpop.f32.mrb[0].mxu0
        %3914 = vmatprep.mubr.bf16.mxu0 0
        %3915 = vmatmul.mubr.bf16.gmra.mrb[0].mxu0 %v3345
        %v3916 = vpop.f32.mrb[0].mxu0
        %v3917 = vadd.f32 0.0, %v3916
        %v3918 = vpop.f32.mrb[0].mxu0
        %v3919 = vpop.f32.mrb[0].mxu0
        %v3920 = vadd.f32 0.0, %v3919
        %v3921 = vpop.f32.mrb[0].mxu0
        %3922 = vmatprep.mubr.bf16.mxu0 0
        %3923 = vmatmul.mubr.bf16.gmra.mrb[0].mxu0 %v3348
        %v3924 = vpop.f32.mrb[0].mxu0
        %v3925 = vadd.f32 0.0, %v3924
        %v3926 = vpop.f32.mrb[0].mxu0
        %v3927 = vpop.f32.mrb[0].mxu0
        %v3928 = vadd.f32 0.0, %v3927
        %v3929 = vpop.f32.mrb[0].mxu0
        %3930 = vmatprep.mubr.bf16.mxu0 0
        %3931 = vmatmul.mubr.bf16.gmra.mrb[0].mxu0 %v3351
        %v3932 = vpop.f32.mrb[0].mxu0
        %v3933 = vadd.f32 0.0, %v3932
        %v3934 = vpop.f32.mrb[0].mxu0
        %v3935 = vpop.f32.mrb[0].mxu0
        %v3936 = vadd.f32 0.0, %v3935
        %v3937 = vpop.f32.mrb[0].mxu0
        %3938 = vmatprep.mubr.bf16.mxu0 0
        %3939 = vmatmul.mubr.bf16.gmra.mrb[0].mxu0 %v3354
        %v3940 = vpop.f32.mrb[0].mxu0
        %v3941 = vadd.f32 0.0, %v3940
        %v3942 = vpop.f32.mrb[0].mxu0
        %v3943 = vpop.f32.mrb[0].mxu0
        %v3944 = vadd.f32 0.0, %v3943
        %v3945 = vpop.f32.mrb[0].mxu0
        %3946 = vmatprep.mubr.bf16.mxu0 0
        %3947 = vmatmul.mubr.bf16.gmra.mrb[0].mxu0 %v3357
        %v3948 = vpop.f32.mrb[0].mxu0
        %v3949 = vadd.f32 0.0, %v3948
        %v3950 = vpop.f32.mrb[0].mxu0
        %v3951 = vpop.f32.mrb[0].mxu0
        %v3952 = vadd.f32 0.0, %v3951
        %v3953 = vpop.f32.mrb[0].mxu0
        %3954 = vmatprep.mubr.bf16.mxu0 0
        %3955 = vmatmul.mubr.bf16.gmra.mrb[0].mxu0 %v3360
        %v3956 = vpop.f32.mrb[0].mxu0
        %v3957 = vadd.f32 0.0, %v3956
        %v3958 = vpop.f32.mrb[0].mxu0
        %v3959 = vpop.f32.mrb[0].mxu0
        %v3960 = vadd.f32 0.0, %v3959
        %v3961 = vpop.f32.mrb[0].mxu0
        %3962 = vmatprep.mubr.bf16.mxu0 0
        %3963 = vmatmul.mubr.bf16.gmra.mrb[0].mxu0 %v3363
        %v3964 = vpop.f32.mrb[0].mxu0
        %v3965 = vadd.f32 0.0, %v3964
        %v3966 = vpop.f32.mrb[0].mxu0
        %v3967 = vpop.f32.mrb[0].mxu0
        %v3968 = vadd.f32 0.0, %v3967
        %v3969 = vpop.f32.mrb[0].mxu0
        %3970 = vmatprep.mubr.bf16.mxu0 0
        %3971 = vmatmul.mubr.bf16.gmra.mrb[0].mxu0 %v3366
        %v3972 = vpop.f32.mrb[0].mxu0
        %v3973 = vadd.f32 0.0, %v3972
        %v3974 = vpop.f32.mrb[0].mxu0
        %v3975 = vpop.f32.mrb[0].mxu0
        %v3976 = vadd.f32 0.0, %v3975
        %v3977 = vpop.f32.mrb[0].mxu0
        %3978 = vmatprep.mubr.bf16.mxu0 0
        %3979 = vmatmul.mubr.bf16.gmra.mrb[0].mxu0 %v3369
        %v3980 = vpop.f32.mrb[0].mxu0
        %v3981 = vadd.f32 0.0, %v3980
        %v3982 = vpop.f32.mrb[0].mxu0
        %v3983 = vpop.f32.mrb[0].mxu0
        %v3984 = vadd.f32 0.0, %v3983
        %v3985 = vpop.f32.mrb[0].mxu0
        %3986 = vmatprep.mubr.bf16.mxu0 0
        %3987 = vmatmul.mubr.bf16.gmra.mrb[0].mxu0 %v3372
        %v3988 = vpop.f32.mrb[0].mxu0
        %v3989 = vadd.f32 0.0, %v3988
        %v3990 = vpop.f32.mrb[0].mxu0
        %v3991 = vpop.f32.mrb[0].mxu0
        %v3992 = vadd.f32 0.0, %v3991
        %v3993 = vpop.f32.mrb[0].mxu0
        %3994 = vmatprep.mubr.bf16.mxu0 0
        %3995 = vmatmul.mubr.bf16.gmra.mrb[0].mxu0 %v3375
        %v3996 = vpop.f32.mrb[0].mxu0
        %v3997 = vadd.f32 0.0, %v3996
        %v3998 = vpop.f32.mrb[0].mxu0
        %v3999 = vpop.f32.mrb[0].mxu0
        %v4000 = vadd.f32 0.0, %v3999
        %v4001 = vpop.f32.mrb[0].mxu0
        %4002 = vmatprep.mubr.bf16.mxu0 0
        %4003 = vmatmul.mubr.bf16.gmra.mrb[0].mxu0 %v3378
        %v4004 = vpop.f32.mrb[0].mxu0
        %v4005 = vadd.f32 0.0, %v4004
        %v4006 = vpop.f32.mrb[0].mxu0
        %v4007 = vpop.f32.mrb[0].mxu0
        %v4008 = vadd.f32 0.0, %v4007
        %v4009 = vpop.f32.mrb[0].mxu0
        %4010 = vmatprep.mubr.bf16.mxu0 0
        %4011 = vmatmul.mubr.bf16.gmra.mrb[0].mxu0 %v3381
        %v4012 = vpop.f32.mrb[0].mxu0
        %v4013 = vadd.f32 0.0, %v4012
        %v4014 = vpop.f32.mrb[0].mxu0
        %v4015 = vpop.f32.mrb[0].mxu0
        %v4016 = vadd.f32 0.0, %v4015
        %v4017 = vpop.f32.mrb[0].mxu0
        %4018 = vmatprep.mubr.bf16.mxu0 0
        %4019 = vmatmul.mubr.bf16.gmra.mrb[0].mxu0 %v3384
        %v4020 = vpop.f32.mrb[0].mxu0
        %v4021 = vadd.f32 0.0, %v4020
        %v4022 = vpop.f32.mrb[0].mxu0
        %v4023 = vpop.f32.mrb[0].mxu0
        %v4024 = vadd.f32 0.0, %v4023
        %v4025 = vpop.f32.mrb[0].mxu0
        %4026 = vmatprep.mubr.bf16.mxu0 0
        %4027 = vmatmul.mubr.bf16.gmra.mrb[0].mxu0 %v3387
        %v4028 = vpop.f32.mrb[0].mxu0
        %v4029 = vadd.f32 0.0, %v4028
        %v4030 = vpop.f32.mrb[0].mxu0
        %v4031 = vpop.f32.mrb[0].mxu0
        %v4032 = vadd.f32 0.0, %v4031
        %v4033 = vpop.f32.mrb[0].mxu0
        %4034 = vmatprep.mubr.bf16.mxu0 0
        %4035 = vmatmul.mubr.bf16.gmra.mrb[0].mxu0 %v3390
        %v4036 = vpop.f32.mrb[0].mxu0
        %v4037 = vadd.f32 0.0, %v4036
        %v4038 = vpop.f32.mrb[0].mxu0
        %v4039 = vpop.f32.mrb[0].mxu0
        %v4040 = vadd.f32 0.0, %v4039
        %v4041 = vpop.f32.mrb[0].mxu0
        %4042 = vmatprep.mubr.bf16.mxu0 0
        %4043 = vmatmul.mubr.bf16.gmra.mrb[0].mxu0 %v3762
        %v4044 = vpop.f32.mrb[0].mxu0
        %v4045 = vadd.f32 0.0, %v4044
        %v4046 = vpop.f32.mrb[0].mxu0
        %v4047 = vpop.f32.mrb[0].mxu0
        %v4048 = vadd.f32 0.0, %v4047
        %v4049 = vpop.f32.mrb[0].mxu0
        %4050 = vmatprep.mubr.bf16.mxu0 0
        %4051 = vmatmul.mubr.bf16.gmra.mrb[0].mxu0 %v3765
        %v4052 = vpop.f32.mrb[0].mxu0
        %v4053 = vadd.f32 0.0, %v4052
        %v4054 = vpop.f32.mrb[0].mxu0
        %v4055 = vpop.f32.mrb[0].mxu0
        %v4056 = vadd.f32 0.0, %v4055
        %v4057 = vpop.f32.mrb[0].mxu0
        %4058 = vdwg.mxu0
        %v4059 = vadd.f32 %v3687, %v3805
        %v4060 = vadd.f32 %v3688, %v3808
        %v4061 = vadd.f32 %v3689, %v3813
        %v4062 = vadd.f32 %v3690, %v3816
        %v4063 = vadd.f32 %v3691, %v3821
        %v4064 = vadd.f32 %v3692, %v3824
        %v4065 = vadd.f32 %v3693, %v3829
        %v4066 = vadd.f32 %v3694, %v3832
        %v4067 = vadd.f32 %v3695, %v3837
        %v4068 = vadd.f32 %v3696, %v3840
        %v4069 = vadd.f32 %v3697, %v3845
        %v4070 = vadd.f32 %v3698, %v3848
        %v4071 = vadd.f32 %v3699, %v3853
        %v4072 = vadd.f32 %v3700, %v3856
        %v4073 = vadd.f32 %v3701, %v3861
        %v4074 = vadd.f32 %v3702, %v3864
        %v4075 = vadd.f32 %v3703, %v3869
        %v4076 = vadd.f32 %v3704, %v3872
        %v4077 = vadd.f32 %v3705, %v3877
        %v4078 = vadd.f32 %v3706, %v3880
        %v4079 = vadd.f32 %v3707, %v3885
        %v4080 = vadd.f32 %v3708, %v3888
        %v4081 = vadd.f32 %v3709, %v3893
        %v4082 = vadd.f32 %v3710, %v3896
        %v4083 = vadd.f32 %v3711, %v3901
        %v4084 = vadd.f32 %v3712, %v3904
        %v4085 = vadd.f32 %v3713, %v3909
        %v4086 = vadd.f32 %v3714, %v3912
        %v4087 = vadd.f32 %v3715, %v3917
        %v4088 = vadd.f32 %v3716, %v3920
        %v4089 = vadd.f32 %v3717, %v3925
        %v4090 = vadd.f32 %v3718, %v3928
        %v4091 = vadd.f32 %v3719, %v3933
        %v4092 = vadd.f32 %v3720, %v3936
        %v4093 = vadd.f32 %v3721, %v3941
        %v4094 = vadd.f32 %v3722, %v3944
        %v4095 = vadd.f32 %v3723, %v3949
        %v4096 = vadd.f32 %v3724, %v3952
        %v4097 = vadd.f32 %v3725, %v3957
        %v4098 = vadd.f32 %v3726, %v3960
        %v4099 = vadd.f32 %v3727, %v3965
        %v4100 = vadd.f32 %v3728, %v3968
        %v4101 = vadd.f32 %v3729, %v3973
        %v4102 = vadd.f32 %v3730, %v3976
        %v4103 = vadd.f32 %v3731, %v3981
        %v4104 = vadd.f32 %v3732, %v3984
        %v4105 = vadd.f32 %v3733, %v3989
        %v4106 = vadd.f32 %v3734, %v3992
        %v4107 = vadd.f32 %v3735, %v3997
        %v4108 = vadd.f32 %v3736, %v4000
        %v4109 = vadd.f32 %v3737, %v4005
        %v4110 = vadd.f32 %v3738, %v4008
        %v4111 = vadd.f32 %v3739, %v4013
        %v4112 = vadd.f32 %v3740, %v4016
        %v4113 = vadd.f32 %v3741, %v4021
        %v4114 = vadd.f32 %v3742, %v4024
        %v4115 = vadd.f32 %v3743, %v4029
        %v4116 = vadd.f32 %v3744, %v4032
        %v4117 = vadd.f32 %v3745, %v4037
        %v4118 = vadd.f32 %v3746, %v4040
        %v4119 = vadd.f32 %v3747, %v4045
        %v4120 = vadd.f32 %v3748, %v4048
        %v4121 = vadd.f32 %v3749, %v4053
        %v4122 = vadd.f32 %v3750, %v4056
        %s4123 = scalar_lea.vmem %s3, 28
        %v4124 = vld [vmem:[%s4123] sm:$0xf]
        %vm4125 = vsmask.f32 5376
        %v4126 = vrot.slane %v724, 2
        %v4127 = vrot.slane %v720, 3
        %v4128 = vor.u32 %v4126, %v4127
        %v4129 = vrot.slane %v732, 2
        %v4130 = vrot.slane %v728, 3
        %v4131 = vor.u32 %v4129, %v4130
        %v4132 = vsel %vm4125, %v4128, %v4131
        %v4133 = vrot.slane %v740, 2
        %v4134 = vrot.slane %v736, 3
        %v4135 = vor.u32 %v4133, %v4134
        %v4136 = vsel %vm4125, %v4131, %v4135
        %v4137 = vrot.slane %v748, 2
        %v4138 = vrot.slane %v744, 3
        %v4139 = vor.u32 %v4137, %v4138
        %v4140 = vsel %vm4125, %v4135, %v4139
        %v4141 = vrot.slane %v756, 2
        %v4142 = vrot.slane %v752, 3
        %v4143 = vor.u32 %v4141, %v4142
        %v4144 = vsel %vm4125, %v4139, %v4143
        %v4145 = vrot.slane %v764, 2
        %v4146 = vrot.slane %v760, 3
        %v4147 = vor.u32 %v4145, %v4146
        %v4148 = vsel %vm4125, %v4143, %v4147
        %v4149 = vrot.slane %v772, 2
        %v4150 = vrot.slane %v768, 3
        %v4151 = vor.u32 %v4149, %v4150
        %v4152 = vsel %vm4125, %v4147, %v4151
        %v4153 = vrot.slane %v780, 2
        %v4154 = vrot.slane %v776, 3
        %v4155 = vor.u32 %v4153, %v4154
        %v4156 = vsel %vm4125, %v4151, %v4155
        %v4157 = vrot.slane %v788, 2
        %v4158 = vrot.slane %v784, 3
        %v4159 = vor.u32 %v4157, %v4158
        %v4160 = vsel %vm4125, %v4155, %v4159
        %v4161 = vrot.slane %v796, 2
        %v4162 = vrot.slane %v792, 3
        %v4163 = vor.u32 %v4161, %v4162
        %v4164 = vsel %vm4125, %v4159, %v4163
        %v4165 = vrot.slane %v804, 2
        %v4166 = vrot.slane %v800, 3
        %v4167 = vor.u32 %v4165, %v4166
        %v4168 = vsel %vm4125, %v4163, %v4167
        %v4169 = vrot.slane %v812, 2
        %v4170 = vrot.slane %v808, 3
        %v4171 = vor.u32 %v4169, %v4170
        %v4172 = vsel %vm4125, %v4167, %v4171
        %v4173 = vrot.slane %v820, 2
        %v4174 = vrot.slane %v816, 3
        %v4175 = vor.u32 %v4173, %v4174
        %v4176 = vsel %vm4125, %v4171, %v4175
        %v4177 = vrot.slane %v828, 2
        %v4178 = vrot.slane %v824, 3
        %v4179 = vor.u32 %v4177, %v4178
        %v4180 = vsel %vm4125, %v4175, %v4179
        %v4181 = vrot.slane %v836, 2
        %v4182 = vrot.slane %v832, 3
        %v4183 = vor.u32 %v4181, %v4182
        %v4184 = vsel %vm4125, %v4179, %v4183
        %v4185 = vrot.slane %v844, 2
        %v4186 = vrot.slane %v840, 3
        %v4187 = vor.u32 %v4185, %v4186
        %v4188 = vsel %vm4125, %v4183, %v4187
        %v4189 = vrot.slane %v852, 2
        %v4190 = vrot.slane %v848, 3
        %v4191 = vor.u32 %v4189, %v4190
        %v4192 = vsel %vm4125, %v4187, %v4191
        %v4193 = vrot.slane %v860, 2
        %v4194 = vrot.slane %v856, 3
        %v4195 = vor.u32 %v4193, %v4194
        %v4196 = vsel %vm4125, %v4191, %v4195
        %v4197 = vrot.slane %v868, 2
        %v4198 = vrot.slane %v864, 3
        %v4199 = vor.u32 %v4197, %v4198
        %v4200 = vsel %vm4125, %v4195, %v4199
        %v4201 = vrot.slane %v876, 2
        %v4202 = vrot.slane %v872, 3
        %v4203 = vor.u32 %v4201, %v4202
        %v4204 = vsel %vm4125, %v4199, %v4203
        %v4205 = vrot.slane %v884, 2
        %v4206 = vrot.slane %v880, 3
        %v4207 = vor.u32 %v4205, %v4206
        %v4208 = vsel %vm4125, %v4203, %v4207
        %v4209 = vrot.slane %v892, 2
        %v4210 = vrot.slane %v888, 3
        %v4211 = vor.u32 %v4209, %v4210
        %v4212 = vsel %vm4125, %v4207, %v4211
        %v4213 = vrot.slane %v900, 2
        %v4214 = vrot.slane %v896, 3
        %v4215 = vor.u32 %v4213, %v4214
        %v4216 = vsel %vm4125, %v4211, %v4215
        %v4217 = vrot.slane %v908, 2
        %v4218 = vrot.slane %v904, 3
        %v4219 = vor.u32 %v4217, %v4218
        %v4220 = vsel %vm4125, %v4215, %v4219
        %v4221 = vrot.slane %v916, 2
        %v4222 = vrot.slane %v912, 3
        %v4223 = vor.u32 %v4221, %v4222
        %v4224 = vsel %vm4125, %v4219, %v4223
        %v4225 = vrot.slane %v924, 2
        %v4226 = vrot.slane %v920, 3
        %v4227 = vor.u32 %v4225, %v4226
        %v4228 = vsel %vm4125, %v4223, %v4227
        %v4229 = vrot.slane %v932, 2
        %v4230 = vrot.slane %v928, 3
        %v4231 = vor.u32 %v4229, %v4230
        %v4232 = vsel %vm4125, %v4227, %v4231
        %v4233 = vrot.slane %v940, 2
        %v4234 = vrot.slane %v936, 3
        %v4235 = vor.u32 %v4233, %v4234
        %v4236 = vsel %vm4125, %v4231, %v4235
        %v4237 = vrot.slane %v948, 2
        %v4238 = vrot.slane %v944, 3
        %v4239 = vor.u32 %v4237, %v4238
        %v4240 = vsel %vm4125, %v4235, %v4239
        %v4241 = vrot.slane %v956, 2
        %v4242 = vrot.slane %v952, 3
        %v4243 = vor.u32 %v4241, %v4242
        %v4244 = vsel %vm4125, %v4239, %v4243
        %v4245 = vrot.slane %v2762, 2
        %v4246 = vrot.slane %v2765, 3
        %v4247 = vor.u32 %v4245, %v4246
        %v4248 = vsel %vm4125, %v4243, %v4247
        %v4250 = vshrl.u32 %v3751, 16
        %v4252 = vrot.slane %v4250, 2
        %v4253 = vshll.u32 %v3751, 16
        %v4255 = vrot.slane %v4253, 3
        %v4256 = vor.u32 %v4252, %v4255
        %v4257 = vsel %vm4125, %v4247, %v4256
        %v4259 = vshrl.u32 %v3752, 16
        %v4261 = vrot.slane %v4259, 2
        %v4262 = vshll.u32 %v3752, 16
        %v4264 = vrot.slane %v4262, 3
        %v4265 = vor.u32 %v4261, %v4264
        %v4266 = vsel %vm4125, %v4256, %v4265
        %v4268 = vsel %vm964, %v4132, 0
        %v4271 = vsel %vm964, %v4136, 0
        %v4274 = vsel %vm964, %v4140, 0
        %v4277 = vsel %vm964, %v4144, 0
        %v4280 = vsel %vm964, %v4148, 0
        %v4283 = vsel %vm964, %v4152, 0
        %v4286 = vsel %vm964, %v4156, 0
        %v4289 = vsel %vm964, %v4160, 0
        %v4292 = vsel %vm964, %v4164, 0
        %v4295 = vsel %vm964, %v4168, 0
        %v4298 = vsel %vm964, %v4172, 0
        %v4301 = vsel %vm964, %v4176, 0
        %v4304 = vsel %vm964, %v4180, 0
        %v4307 = vsel %vm964, %v4184, 0
        %v4310 = vsel %vm964, %v4188, 0
        %v4313 = vsel %vm964, %v4192, 0
        %v4316 = vsel %vm964, %v4196, 0
        %v4319 = vsel %vm964, %v4200, 0
        %v4322 = vsel %vm964, %v4204, 0
        %v4325 = vsel %vm964, %v4208, 0
        %v4328 = vsel %vm964, %v4212, 0
        %v4331 = vsel %vm964, %v4216, 0
        %v4334 = vsel %vm964, %v4220, 0
        %v4337 = vsel %vm964, %v4224, 0
        %v4340 = vsel %vm964, %v4228, 0
        %v4343 = vsel %vm964, %v4232, 0
        %v4346 = vsel %vm964, %v4236, 0
        %v4349 = vsel %vm964, %v4240, 0
        %v4352 = vsel %vm964, %v4244, 0
        %v4355 = vsel %vm964, %v4248, 0
        %v4358 = vsel %vm964, %v4257, 0
        %v4361 = vsel %vm964, %v4266, 0
        %v4364 = vsel %vm1061, %v4124, 0
        %4366 = vmatprep.subr.bf16.mxu0 0
        %4367 = vmatpush1.bf16.msra.mxu0 %v4364
        %4368 = vmatprep.subr.bf16.mxu0 0
        %4369 = vmatpush1.bf16.msra.mxu0 0
        %4370 = vmatprep.subr.bf16.mxu0 0
        %4371 = vmatpush1.bf16.msra.mxu0 0
        %4372 = vmatprep.subr.bf16.mxu0 0
        %4373 = vmatpush1.bf16.msra.mxu0 0
        %4374 = vmatprep.subr.bf16.mxu0 0
        %4375 = vmatpush1.bf16.msra.mxu0 0
        %4376 = vmatprep.subr.bf16.mxu0 0
        %4377 = vmatpush1.bf16.msra.mxu0 0
        %4378 = vmatprep.subr.bf16.mxu0 0
        %4379 = vmatpush1.bf16.msra.mxu0 0
        %4380 = vmatprep.subr.bf16.mxu0 0
        %4381 = vmatpush1.bf16.msra.mxu0 0
        %4382 = vmatprep.subr.bf16.mxu0 0
        %4383 = vmatpush1.bf16.msra.mxu0 0
        %4384 = vmatprep.subr.bf16.mxu0 0
        %4385 = vmatpush1.bf16.msra.mxu0 0
        %4386 = vmatprep.subr.bf16.mxu0 0
        %4387 = vmatpush1.bf16.msra.mxu0 0
        %4388 = vmatprep.subr.bf16.mxu0 0
        %4389 = vmatpush1.bf16.msra.mxu0 0
        %4390 = vmatprep.subr.bf16.mxu0 0
        %4391 = vmatpush1.bf16.msra.mxu0 0
        %4392 = vmatprep.subr.bf16.mxu0 0
        %4393 = vmatpush1.bf16.msra.mxu0 0
        %4394 = vmatprep.subr.bf16.mxu0 0
        %4395 = vmatpush1.bf16.msra.mxu0 0
        %4396 = vmatprep.subr.bf16.mxu0 0
        %4397 = vmatpush1.bf16.msra.mxu0 0
        %4398 = vmatprep.mubr.bf16.mxu0 0
        %4399 = vmatmul.mubr.bf16.gmra.mrb[0].mxu0 %v4268
        %v4400 = vpop.f32.mrb[0].mxu0
        %v4401 = vadd.f32 0.0, %v4400
        %v4402 = vpop.f32.mrb[0].mxu0
        %v4403 = vpop.f32.mrb[0].mxu0
        %v4404 = vadd.f32 0.0, %v4403
        %v4405 = vpop.f32.mrb[0].mxu0
        %4406 = vmatprep.mubr.bf16.mxu0 0
        %4407 = vmatmul.mubr.bf16.gmra.mrb[0].mxu0 %v4271
        %v4408 = vpop.f32.mrb[0].mxu0
        %v4409 = vadd.f32 0.0, %v4408
        %v4410 = vpop.f32.mrb[0].mxu0
        %v4411 = vpop.f32.mrb[0].mxu0
        %v4412 = vadd.f32 0.0, %v4411
        %v4413 = vpop.f32.mrb[0].mxu0
        %4414 = vmatprep.mubr.bf16.mxu0 0
        %4415 = vmatmul.mubr.bf16.gmra.mrb[0].mxu0 %v4274
        %v4416 = vpop.f32.mrb[0].mxu0
        %v4417 = vadd.f32 0.0, %v4416
        %v4418 = vpop.f32.mrb[0].mxu0
        %v4419 = vpop.f32.mrb[0].mxu0
        %v4420 = vadd.f32 0.0, %v4419
        %v4421 = vpop.f32.mrb[0].mxu0
        %4422 = vmatprep.mubr.bf16.mxu0 0
        %4423 = vmatmul.mubr.bf16.gmra.mrb[0].mxu0 %v4277
        %v4424 = vpop.f32.mrb[0].mxu0
        %v4425 = vadd.f32 0.0, %v4424
        %v4426 = vpop.f32.mrb[0].mxu0
        %v4427 = vpop.f32.mrb[0].mxu0
        %v4428 = vadd.f32 0.0, %v4427
        %v4429 = vpop.f32.mrb[0].mxu0
        %4430 = vmatprep.mubr.bf16.mxu0 0
        %4431 = vmatmul.mubr.bf16.gmra.mrb[0].mxu0 %v4280
        %v4432 = vpop.f32.mrb[0].mxu0
        %v4433 = vadd.f32 0.0, %v4432
        %v4434 = vpop.f32.mrb[0].mxu0
        %v4435 = vpop.f32.mrb[0].mxu0
        %v4436 = vadd.f32 0.0, %v4435
        %v4437 = vpop.f32.mrb[0].mxu0
        %4438 = vmatprep.mubr.bf16.mxu0 0
        %4439 = vmatmul.mubr.bf16.gmra.mrb[0].mxu0 %v4283
        %v4440 = vpop.f32.mrb[0].mxu0
        %v4441 = vadd.f32 0.0, %v4440
        %v4442 = vpop.f32.mrb[0].mxu0
        %v4443 = vpop.f32.mrb[0].mxu0
        %v4444 = vadd.f32 0.0, %v4443
        %v4445 = vpop.f32.mrb[0].mxu0
        %4446 = vmatprep.mubr.bf16.mxu0 0
        %4447 = vmatmul.mubr.bf16.gmra.mrb[0].mxu0 %v4286
        %v4448 = vpop.f32.mrb[0].mxu0
        %v4449 = vadd.f32 0.0, %v4448
        %v4450 = vpop.f32.mrb[0].mxu0
        %v4451 = vpop.f32.mrb[0].mxu0
        %v4452 = vadd.f32 0.0, %v4451
        %v4453 = vpop.f32.mrb[0].mxu0
        %4454 = vmatprep.mubr.bf16.mxu0 0
        %4455 = vmatmul.mubr.bf16.gmra.mrb[0].mxu0 %v4289
        %v4456 = vpop.f32.mrb[0].mxu0
        %v4457 = vadd.f32 0.0, %v4456
        %v4458 = vpop.f32.mrb[0].mxu0
        %v4459 = vpop.f32.mrb[0].mxu0
        %v4460 = vadd.f32 0.0, %v4459
        %v4461 = vpop.f32.mrb[0].mxu0
        %4462 = vmatprep.mubr.bf16.mxu0 0
        %4463 = vmatmul.mubr.bf16.gmra.mrb[0].mxu0 %v4292
        %v4464 = vpop.f32.mrb[0].mxu0
        %v4465 = vadd.f32 0.0, %v4464
        %v4466 = vpop.f32.mrb[0].mxu0
        %v4467 = vpop.f32.mrb[0].mxu0
        %v4468 = vadd.f32 0.0, %v4467
        %v4469 = vpop.f32.mrb[0].mxu0
        %4470 = vmatprep.mubr.bf16.mxu0 0
        %4471 = vmatmul.mubr.bf16.gmra.mrb[0].mxu0 %v4295
        %v4472 = vpop.f32.mrb[0].mxu0
        %v4473 = vadd.f32 0.0, %v4472
        %v4474 = vpop.f32.mrb[0].mxu0
        %v4475 = vpop.f32.mrb[0].mxu0
        %v4476 = vadd.f32 0.0, %v4475
        %v4477 = vpop.f32.mrb[0].mxu0
        %4478 = vmatprep.mubr.bf16.mxu0 0
        %4479 = vmatmul.mubr.bf16.gmra.mrb[0].mxu0 %v4298
        %v4480 = vpop.f32.mrb[0].mxu0
        %v4481 = vadd.f32 0.0, %v4480
        %v4482 = vpop.f32.mrb[0].mxu0
        %v4483 = vpop.f32.mrb[0].mxu0
        %v4484 = vadd.f32 0.0, %v4483
        %v4485 = vpop.f32.mrb[0].mxu0
        %4486 = vmatprep.mubr.bf16.mxu0 0
        %4487 = vmatmul.mubr.bf16.gmra.mrb[0].mxu0 %v4301
        %v4488 = vpop.f32.mrb[0].mxu0
        %v4489 = vadd.f32 0.0, %v4488
        %v4490 = vpop.f32.mrb[0].mxu0
        %v4491 = vpop.f32.mrb[0].mxu0
        %v4492 = vadd.f32 0.0, %v4491
        %v4493 = vpop.f32.mrb[0].mxu0
        %4494 = vmatprep.mubr.bf16.mxu0 0
        %4495 = vmatmul.mubr.bf16.gmra.mrb[0].mxu0 %v4304
        %v4496 = vpop.f32.mrb[0].mxu0
        %v4497 = vadd.f32 0.0, %v4496
        %v4498 = vpop.f32.mrb[0].mxu0
        %v4499 = vpop.f32.mrb[0].mxu0
        %v4500 = vadd.f32 0.0, %v4499
        %v4501 = vpop.f32.mrb[0].mxu0
        %4502 = vmatprep.mubr.bf16.mxu0 0
        %4503 = vmatmul.mubr.bf16.gmra.mrb[0].mxu0 %v4307
        %v4504 = vpop.f32.mrb[0].mxu0
        %v4505 = vadd.f32 0.0, %v4504
        %v4506 = vpop.f32.mrb[0].mxu0
        %v4507 = vpop.f32.mrb[0].mxu0
        %v4508 = vadd.f32 0.0, %v4507
        %v4509 = vpop.f32.mrb[0].mxu0
        %4510 = vmatprep.mubr.bf16.mxu0 0
        %4511 = vmatmul.mubr.bf16.gmra.mrb[0].mxu0 %v4310
        %v4512 = vpop.f32.mrb[0].mxu0
        %v4513 = vadd.f32 0.0, %v4512
        %v4514 = vpop.f32.mrb[0].mxu0
        %v4515 = vpop.f32.mrb[0].mxu0
        %v4516 = vadd.f32 0.0, %v4515
        %v4517 = vpop.f32.mrb[0].mxu0
        %4518 = vmatprep.mubr.bf16.mxu0 0
        %4519 = vmatmul.mubr.bf16.gmra.mrb[0].mxu0 %v4313
        %v4520 = vpop.f32.mrb[0].mxu0
        %v4521 = vadd.f32 0.0, %v4520
        %v4522 = vpop.f32.mrb[0].mxu0
        %v4523 = vpop.f32.mrb[0].mxu0
        %v4524 = vadd.f32 0.0, %v4523
        %v4525 = vpop.f32.mrb[0].mxu0
        %4526 = vmatprep.mubr.bf16.mxu0 0
        %4527 = vmatmul.mubr.bf16.gmra.mrb[0].mxu0 %v4316
        %v4528 = vpop.f32.mrb[0].mxu0
        %v4529 = vadd.f32 0.0, %v4528
        %v4530 = vpop.f32.mrb[0].mxu0
        %v4531 = vpop.f32.mrb[0].mxu0
        %v4532 = vadd.f32 0.0, %v4531
        %v4533 = vpop.f32.mrb[0].mxu0
        %4534 = vmatprep.mubr.bf16.mxu0 0
        %4535 = vmatmul.mubr.bf16.gmra.mrb[0].mxu0 %v4319
        %v4536 = vpop.f32.mrb[0].mxu0
        %v4537 = vadd.f32 0.0, %v4536
        %v4538 = vpop.f32.mrb[0].mxu0
        %v4539 = vpop.f32.mrb[0].mxu0
        %v4540 = vadd.f32 0.0, %v4539
        %v4541 = vpop.f32.mrb[0].mxu0
        %4542 = vmatprep.mubr.bf16.mxu0 0
        %4543 = vmatmul.mubr.bf16.gmra.mrb[0].mxu0 %v4322
        %v4544 = vpop.f32.mrb[0].mxu0
        %v4545 = vadd.f32 0.0, %v4544
        %v4546 = vpop.f32.mrb[0].mxu0
        %v4547 = vpop.f32.mrb[0].mxu0
        %v4548 = vadd.f32 0.0, %v4547
        %v4549 = vpop.f32.mrb[0].mxu0
        %4550 = vmatprep.mubr.bf16.mxu0 0
        %4551 = vmatmul.mubr.bf16.gmra.mrb[0].mxu0 %v4325
        %v4552 = vpop.f32.mrb[0].mxu0
        %v4553 = vadd.f32 0.0, %v4552
        %v4554 = vpop.f32.mrb[0].mxu0
        %v4555 = vpop.f32.mrb[0].mxu0
        %v4556 = vadd.f32 0.0, %v4555
        %v4557 = vpop.f32.mrb[0].mxu0
        %4558 = vmatprep.mubr.bf16.mxu0 0
        %4559 = vmatmul.mubr.bf16.gmra.mrb[0].mxu0 %v4328
        %v4560 = vpop.f32.mrb[0].mxu0
        %v4561 = vadd.f32 0.0, %v4560
        %v4562 = vpop.f32.mrb[0].mxu0
        %v4563 = vpop.f32.mrb[0].mxu0
        %v4564 = vadd.f32 0.0, %v4563
        %v4565 = vpop.f32.mrb[0].mxu0
        %4566 = vmatprep.mubr.bf16.mxu0 0
        %4567 = vmatmul.mubr.bf16.gmra.mrb[0].mxu0 %v4331
        %v4568 = vpop.f32.mrb[0].mxu0
        %v4569 = vadd.f32 0.0, %v4568
        %v4570 = vpop.f32.mrb[0].mxu0
        %v4571 = vpop.f32.mrb[0].mxu0
        %v4572 = vadd.f32 0.0, %v4571
        %v4573 = vpop.f32.mrb[0].mxu0
        %4574 = vmatprep.mubr.bf16.mxu0 0
        %4575 = vmatmul.mubr.bf16.gmra.mrb[0].mxu0 %v4334
        %v4576 = vpop.f32.mrb[0].mxu0
        %v4577 = vadd.f32 0.0, %v4576
        %v4578 = vpop.f32.mrb[0].mxu0
        %v4579 = vpop.f32.mrb[0].mxu0
        %v4580 = vadd.f32 0.0, %v4579
        %v4581 = vpop.f32.mrb[0].mxu0
        %4582 = vmatprep.mubr.bf16.mxu0 0
        %4583 = vmatmul.mubr.bf16.gmra.mrb[0].mxu0 %v4337
        %v4584 = vpop.f32.mrb[0].mxu0
        %v4585 = vadd.f32 0.0, %v4584
        %v4586 = vpop.f32.mrb[0].mxu0
        %v4587 = vpop.f32.mrb[0].mxu0
        %v4588 = vadd.f32 0.0, %v4587
        %v4589 = vpop.f32.mrb[0].mxu0
        %4590 = vmatprep.mubr.bf16.mxu0 0
        %4591 = vmatmul.mubr.bf16.gmra.mrb[0].mxu0 %v4340
        %v4592 = vpop.f32.mrb[0].mxu0
        %v4593 = vadd.f32 0.0, %v4592
        %v4594 = vpop.f32.mrb[0].mxu0
        %v4595 = vpop.f32.mrb[0].mxu0
        %v4596 = vadd.f32 0.0, %v4595
        %v4597 = vpop.f32.mrb[0].mxu0
        %4598 = vmatprep.mubr.bf16.mxu0 0
        %4599 = vmatmul.mubr.bf16.gmra.mrb[0].mxu0 %v4343
        %v4600 = vpop.f32.mrb[0].mxu0
        %v4601 = vadd.f32 0.0, %v4600
        %v4602 = vpop.f32.mrb[0].mxu0
        %v4603 = vpop.f32.mrb[0].mxu0
        %v4604 = vadd.f32 0.0, %v4603
        %v4605 = vpop.f32.mrb[0].mxu0
        %4606 = vmatprep.mubr.bf16.mxu0 0
        %4607 = vmatmul.mubr.bf16.gmra.mrb[0].mxu0 %v4346
        %v4608 = vpop.f32.mrb[0].mxu0
        %v4609 = vadd.f32 0.0, %v4608
        %v4610 = vpop.f32.mrb[0].mxu0
        %v4611 = vpop.f32.mrb[0].mxu0
        %v4612 = vadd.f32 0.0, %v4611
        %v4613 = vpop.f32.mrb[0].mxu0
        %4614 = vmatprep.mubr.bf16.mxu0 0
        %4615 = vmatmul.mubr.bf16.gmra.mrb[0].mxu0 %v4349
        %v4616 = vpop.f32.mrb[0].mxu0
        %v4617 = vadd.f32 0.0, %v4616
        %v4618 = vpop.f32.mrb[0].mxu0
        %v4619 = vpop.f32.mrb[0].mxu0
        %v4620 = vadd.f32 0.0, %v4619
        %v4621 = vpop.f32.mrb[0].mxu0
        %4622 = vmatprep.mubr.bf16.mxu0 0
        %4623 = vmatmul.mubr.bf16.gmra.mrb[0].mxu0 %v4352
        %v4624 = vpop.f32.mrb[0].mxu0
        %v4625 = vadd.f32 0.0, %v4624
        %v4626 = vpop.f32.mrb[0].mxu0
        %v4627 = vpop.f32.mrb[0].mxu0
        %v4628 = vadd.f32 0.0, %v4627
        %v4629 = vpop.f32.mrb[0].mxu0
        %4630 = vmatprep.mubr.bf16.mxu0 0
        %4631 = vmatmul.mubr.bf16.gmra.mrb[0].mxu0 %v4355
        %v4632 = vpop.f32.mrb[0].mxu0
        %v4633 = vadd.f32 0.0, %v4632
        %v4634 = vpop.f32.mrb[0].mxu0
        %v4635 = vpop.f32.mrb[0].mxu0
        %v4636 = vadd.f32 0.0, %v4635
        %v4637 = vpop.f32.mrb[0].mxu0
        %4638 = vmatprep.mubr.bf16.mxu0 0
        %4639 = vmatmul.mubr.bf16.gmra.mrb[0].mxu0 %v4358
        %v4640 = vpop.f32.mrb[0].mxu0
        %v4641 = vadd.f32 0.0, %v4640
        %v4642 = vpop.f32.mrb[0].mxu0
        %v4643 = vpop.f32.mrb[0].mxu0
        %v4644 = vadd.f32 0.0, %v4643
        %v4645 = vpop.f32.mrb[0].mxu0
        %4646 = vmatprep.mubr.bf16.mxu0 0
        %4647 = vmatmul.mubr.bf16.gmra.mrb[0].mxu0 %v4361
        %v4648 = vpop.f32.mrb[0].mxu0
        %v4649 = vadd.f32 0.0, %v4648
        %v4650 = vpop.f32.mrb[0].mxu0
        %v4651 = vpop.f32.mrb[0].mxu0
        %v4652 = vadd.f32 0.0, %v4651
        %v4653 = vpop.f32.mrb[0].mxu0
        %4654 = vdwg.mxu0
        %v4655 = vadd.f32 %v4059, %v4401
        %v4656 = vadd.f32 %v4060, %v4404
        %v4657 = vadd.f32 %v4061, %v4409
        %v4658 = vadd.f32 %v4062, %v4412
        %v4659 = vadd.f32 %v4063, %v4417
        %v4660 = vadd.f32 %v4064, %v4420
        %v4661 = vadd.f32 %v4065, %v4425
        %v4662 = vadd.f32 %v4066, %v4428
        %v4663 = vadd.f32 %v4067, %v4433
        %v4664 = vadd.f32 %v4068, %v4436
        %v4665 = vadd.f32 %v4069, %v4441
        %v4666 = vadd.f32 %v4070, %v4444
        %v4667 = vadd.f32 %v4071, %v4449
        %v4668 = vadd.f32 %v4072, %v4452
        %v4669 = vadd.f32 %v4073, %v4457
        %v4670 = vadd.f32 %v4074, %v4460
        %v4671 = vadd.f32 %v4075, %v4465
        %v4672 = vadd.f32 %v4076, %v4468
        %v4673 = vadd.f32 %v4077, %v4473
        %v4674 = vadd.f32 %v4078, %v4476
        %v4675 = vadd.f32 %v4079, %v4481
        %v4676 = vadd.f32 %v4080, %v4484
        %v4677 = vadd.f32 %v4081, %v4489
        %v4678 = vadd.f32 %v4082, %v4492
        %v4679 = vadd.f32 %v4083, %v4497
        %v4680 = vadd.f32 %v4084, %v4500
        %v4681 = vadd.f32 %v4085, %v4505
        %v4682 = vadd.f32 %v4086, %v4508
        %v4683 = vadd.f32 %v4087, %v4513
        %v4684 = vadd.f32 %v4088, %v4516
        %v4685 = vadd.f32 %v4089, %v4521
        %v4686 = vadd.f32 %v4090, %v4524
        %v4687 = vadd.f32 %v4091, %v4529
        %v4688 = vadd.f32 %v4092, %v4532
        %v4689 = vadd.f32 %v4093, %v4537
        %v4690 = vadd.f32 %v4094, %v4540
        %v4691 = vadd.f32 %v4095, %v4545
        %v4692 = vadd.f32 %v4096, %v4548
        %v4693 = vadd.f32 %v4097, %v4553
        %v4694 = vadd.f32 %v4098, %v4556
        %v4695 = vadd.f32 %v4099, %v4561
        %v4696 = vadd.f32 %v4100, %v4564
        %v4697 = vadd.f32 %v4101, %v4569
        %v4698 = vadd.f32 %v4102, %v4572
        %v4699 = vadd.f32 %v4103, %v4577
        %v4700 = vadd.f32 %v4104, %v4580
        %v4701 = vadd.f32 %v4105, %v4585
        %v4702 = vadd.f32 %v4106, %v4588
        %v4703 = vadd.f32 %v4107, %v4593
        %v4704 = vadd.f32 %v4108, %v4596
        %v4705 = vadd.f32 %v4109, %v4601
        %v4706 = vadd.f32 %v4110, %v4604
        %v4707 = vadd.f32 %v4111, %v4609
        %v4708 = vadd.f32 %v4112, %v4612
        %v4709 = vadd.f32 %v4113, %v4617
        %v4710 = vadd.f32 %v4114, %v4620
        %v4711 = vadd.f32 %v4115, %v4625
        %v4712 = vadd.f32 %v4116, %v4628
        %v4713 = vadd.f32 %v4117, %v4633
        %v4714 = vadd.f32 %v4118, %v4636
        %v4715 = vadd.f32 %v4119, %v4641
        %v4716 = vadd.f32 %v4120, %v4644
        %v4717 = vadd.f32 %v4121, %v4649
        %v4718 = vadd.f32 %v4122, %v4652
        %s4719 = scalar_lea.vmem %s3, 32
        %v4720 = vld [vmem:[%s4719] sm:$0xf]
        %vm4721 = vcmask 1044480
        %v4722 = vrot.slane %v669, 3
        %v4723 = vrot.slane %v670, 3
        %v4724 = vsel %vm4721, %v4722, %v4723
        %v4725 = vrot.slane %v671, 3
        %v4726 = vsel %vm4721, %v4723, %v4725
        %v4727 = vrot.slane %v672, 3
        %v4728 = vsel %vm4721, %v4725, %v4727
        %v4729 = vrot.slane %v673, 3
        %v4730 = vsel %vm4721, %v4727, %v4729
        %v4731 = vrot.slane %v674, 3
        %v4732 = vsel %vm4721, %v4729, %v4731
        %v4733 = vrot.slane %v675, 3
        %v4734 = vsel %vm4721, %v4731, %v4733
        %v4735 = vrot.slane %v676, 3
        %v4736 = vsel %vm4721, %v4733, %v4735
        %v4737 = vrot.slane %v677, 3
        %v4738 = vsel %vm4721, %v4735, %v4737
        %v4739 = vrot.slane %v678, 3
        %v4740 = vsel %vm4721, %v4737, %v4739
        %v4741 = vrot.slane %v679, 3
        %v4742 = vsel %vm4721, %v4739, %v4741
        %v4743 = vrot.slane %v680, 3
        %v4744 = vsel %vm4721, %v4741, %v4743
        %v4745 = vrot.slane %v681, 3
        %v4746 = vsel %vm4721, %v4743, %v4745
        %v4747 = vrot.slane %v682, 3
        %v4748 = vsel %vm4721, %v4745, %v4747
        %v4749 = vrot.slane %v683, 3
        %v4750 = vsel %vm4721, %v4747, %v4749
        %v4751 = vrot.slane %v684, 3
        %v4752 = vsel %vm4721, %v4749, %v4751
        %v4753 = vrot.slane %v685, 3
        %v4754 = vsel %vm4721, %v4751, %v4753
        %v4755 = vrot.slane %v686, 3
        %v4756 = vsel %vm4721, %v4753, %v4755
        %v4757 = vrot.slane %v687, 3
        %v4758 = vsel %vm4721, %v4755, %v4757
        %v4759 = vrot.slane %v688, 3
        %v4760 = vsel %vm4721, %v4757, %v4759
        %v4761 = vrot.slane %v689, 3
        %v4762 = vsel %vm4721, %v4759, %v4761
        %v4763 = vrot.slane %v690, 3
        %v4764 = vsel %vm4721, %v4761, %v4763
        %v4765 = vrot.slane %v691, 3
        %v4766 = vsel %vm4721, %v4763, %v4765
        %v4767 = vrot.slane %v692, 3
        %v4768 = vsel %vm4721, %v4765, %v4767
        %v4769 = vrot.slane %v693, 3
        %v4770 = vsel %vm4721, %v4767, %v4769
        %v4771 = vrot.slane %v694, 3
        %v4772 = vsel %vm4721, %v4769, %v4771
        %v4773 = vrot.slane %v695, 3
        %v4774 = vsel %vm4721, %v4771, %v4773
        %v4775 = vrot.slane %v696, 3
        %v4776 = vsel %vm4721, %v4773, %v4775
        %v4777 = vrot.slane %v697, 3
        %v4778 = vsel %vm4721, %v4775, %v4777
        %v4779 = vrot.slane %v698, 3
        %v4780 = vsel %vm4721, %v4777, %v4779
        %v4781 = vrot.slane %v2263, 3
        %v4782 = vsel %vm4721, %v4779, %v4781
        %v4783 = vrot.slane %v3751, 3
        %v4784 = vsel %vm4721, %v4781, %v4783
        %v4785 = vrot.slane %v3752, 3
        %v4786 = vsel %vm4721, %v4783, %v4785
        %v4788 = vsel %vm964, %v4724, 0
        %v4791 = vsel %vm964, %v4726, 0
        %v4794 = vsel %vm964, %v4728, 0
        %v4797 = vsel %vm964, %v4730, 0
        %v4800 = vsel %vm964, %v4732, 0
        %v4803 = vsel %vm964, %v4734, 0
        %v4806 = vsel %vm964, %v4736, 0
        %v4809 = vsel %vm964, %v4738, 0
        %v4812 = vsel %vm964, %v4740, 0
        %v4815 = vsel %vm964, %v4742, 0
        %v4818 = vsel %vm964, %v4744, 0
        %v4821 = vsel %vm964, %v4746, 0
        %v4824 = vsel %vm964, %v4748, 0
        %v4827 = vsel %vm964, %v4750, 0
        %v4830 = vsel %vm964, %v4752, 0
        %v4833 = vsel %vm964, %v4754, 0
        %v4836 = vsel %vm964, %v4756, 0
        %v4839 = vsel %vm964, %v4758, 0
        %v4842 = vsel %vm964, %v4760, 0
        %v4845 = vsel %vm964, %v4762, 0
        %v4848 = vsel %vm964, %v4764, 0
        %v4851 = vsel %vm964, %v4766, 0
        %v4854 = vsel %vm964, %v4768, 0
        %v4857 = vsel %vm964, %v4770, 0
        %v4860 = vsel %vm964, %v4772, 0
        %v4863 = vsel %vm964, %v4774, 0
        %v4866 = vsel %vm964, %v4776, 0
        %v4869 = vsel %vm964, %v4778, 0
        %v4872 = vsel %vm964, %v4780, 0
        %v4875 = vsel %vm964, %v4782, 0
        %v4878 = vsel %vm964, %v4784, 0
        %v4881 = vsel %vm964, %v4786, 0
        %v4884 = vsel %vm1061, %v4720, 0
        %4886 = vmatprep.subr.bf16.mxu0 0
        %4887 = vmatpush1.bf16.msra.mxu0 %v4884
        %4888 = vmatprep.subr.bf16.mxu0 0
        %4889 = vmatpush1.bf16.msra.mxu0 0
        %4890 = vmatprep.subr.bf16.mxu0 0
        %4891 = vmatpush1.bf16.msra.mxu0 0
        %4892 = vmatprep.subr.bf16.mxu0 0
        %4893 = vmatpush1.bf16.msra.mxu0 0
        %4894 = vmatprep.subr.bf16.mxu0 0
        %4895 = vmatpush1.bf16.msra.mxu0 0
        %4896 = vmatprep.subr.bf16.mxu0 0
        %4897 = vmatpush1.bf16.msra.mxu0 0
        %4898 = vmatprep.subr.bf16.mxu0 0
        %4899 = vmatpush1.bf16.msra.mxu0 0
        %4900 = vmatprep.subr.bf16.mxu0 0
        %4901 = vmatpush1.bf16.msra.mxu0 0
        %4902 = vmatprep.subr.bf16.mxu0 0
        %4903 = vmatpush1.bf16.msra.mxu0 0
        %4904 = vmatprep.subr.bf16.mxu0 0
        %4905 = vmatpush1.bf16.msra.mxu0 0
        %4906 = vmatprep.subr.bf16.mxu0 0
        %4907 = vmatpush1.bf16.msra.mxu0 0
        %4908 = vmatprep.subr.bf16.mxu0 0
        %4909 = vmatpush1.bf16.msra.mxu0 0
        %4910 = vmatprep.subr.bf16.mxu0 0
        %4911 = vmatpush1.bf16.msra.mxu0 0
        %4912 = vmatprep.subr.bf16.mxu0 0
        %4913 = vmatpush1.bf16.msra.mxu0 0
        %4914 = vmatprep.subr.bf16.mxu0 0
        %4915 = vmatpush1.bf16.msra.mxu0 0
        %4916 = vmatprep.subr.bf16.mxu0 0
        %4917 = vmatpush1.bf16.msra.mxu0 0
        %4918 = vmatprep.mubr.bf16.mxu0 0
        %4919 = vmatmul.mubr.bf16.gmra.mrb[0].mxu0 %v4788
        %v4920 = vpop.f32.mrb[0].mxu0
        %v4921 = vadd.f32 0.0, %v4920
        %v4922 = vpop.f32.mrb[0].mxu0
        %v4923 = vpop.f32.mrb[0].mxu0
        %v4924 = vadd.f32 0.0, %v4923
        %v4925 = vpop.f32.mrb[0].mxu0
        %4926 = vmatprep.mubr.bf16.mxu0 0
        %4927 = vmatmul.mubr.bf16.gmra.mrb[0].mxu0 %v4791
        %v4928 = vpop.f32.mrb[0].mxu0
        %v4929 = vadd.f32 0.0, %v4928
        %v4930 = vpop.f32.mrb[0].mxu0
        %v4931 = vpop.f32.mrb[0].mxu0
        %v4932 = vadd.f32 0.0, %v4931
        %v4933 = vpop.f32.mrb[0].mxu0
        %4934 = vmatprep.mubr.bf16.mxu0 0
        %4935 = vmatmul.mubr.bf16.gmra.mrb[0].mxu0 %v4794
        %v4936 = vpop.f32.mrb[0].mxu0
        %v4937 = vadd.f32 0.0, %v4936
        %v4938 = vpop.f32.mrb[0].mxu0
        %v4939 = vpop.f32.mrb[0].mxu0
        %v4940 = vadd.f32 0.0, %v4939
        %v4941 = vpop.f32.mrb[0].mxu0
        %4942 = vmatprep.mubr.bf16.mxu0 0
        %4943 = vmatmul.mubr.bf16.gmra.mrb[0].mxu0 %v4797
        %v4944 = vpop.f32.mrb[0].mxu0
        %v4945 = vadd.f32 0.0, %v4944
        %v4946 = vpop.f32.mrb[0].mxu0
        %v4947 = vpop.f32.mrb[0].mxu0
        %v4948 = vadd.f32 0.0, %v4947
        %v4949 = vpop.f32.mrb[0].mxu0
        %4950 = vmatprep.mubr.bf16.mxu0 0
        %4951 = vmatmul.mubr.bf16.gmra.mrb[0].mxu0 %v4800
        %v4952 = vpop.f32.mrb[0].mxu0
        %v4953 = vadd.f32 0.0, %v4952
        %v4954 = vpop.f32.mrb[0].mxu0
        %v4955 = vpop.f32.mrb[0].mxu0
        %v4956 = vadd.f32 0.0, %v4955
        %v4957 = vpop.f32.mrb[0].mxu0
        %4958 = vmatprep.mubr.bf16.mxu0 0
        %4959 = vmatmul.mubr.bf16.gmra.mrb[0].mxu0 %v4803
        %v4960 = vpop.f32.mrb[0].mxu0
        %v4961 = vadd.f32 0.0, %v4960
        %v4962 = vpop.f32.mrb[0].mxu0
        %v4963 = vpop.f32.mrb[0].mxu0
        %v4964 = vadd.f32 0.0, %v4963
        %v4965 = vpop.f32.mrb[0].mxu0
        %4966 = vmatprep.mubr.bf16.mxu0 0
        %4967 = vmatmul.mubr.bf16.gmra.mrb[0].mxu0 %v4806
        %v4968 = vpop.f32.mrb[0].mxu0
        %v4969 = vadd.f32 0.0, %v4968
        %v4970 = vpop.f32.mrb[0].mxu0
        %v4971 = vpop.f32.mrb[0].mxu0
        %v4972 = vadd.f32 0.0, %v4971
        %v4973 = vpop.f32.mrb[0].mxu0
        %4974 = vmatprep.mubr.bf16.mxu0 0
        %4975 = vmatmul.mubr.bf16.gmra.mrb[0].mxu0 %v4809
        %v4976 = vpop.f32.mrb[0].mxu0
        %v4977 = vadd.f32 0.0, %v4976
        %v4978 = vpop.f32.mrb[0].mxu0
        %v4979 = vpop.f32.mrb[0].mxu0
        %v4980 = vadd.f32 0.0, %v4979
        %v4981 = vpop.f32.mrb[0].mxu0
        %4982 = vmatprep.mubr.bf16.mxu0 0
        %4983 = vmatmul.mubr.bf16.gmra.mrb[0].mxu0 %v4812
        %v4984 = vpop.f32.mrb[0].mxu0
        %v4985 = vadd.f32 0.0, %v4984
        %v4986 = vpop.f32.mrb[0].mxu0
        %v4987 = vpop.f32.mrb[0].mxu0
        %v4988 = vadd.f32 0.0, %v4987
        %v4989 = vpop.f32.mrb[0].mxu0
        %4990 = vmatprep.mubr.bf16.mxu0 0
        %4991 = vmatmul.mubr.bf16.gmra.mrb[0].mxu0 %v4815
        %v4992 = vpop.f32.mrb[0].mxu0
        %v4993 = vadd.f32 0.0, %v4992
        %v4994 = vpop.f32.mrb[0].mxu0
        %v4995 = vpop.f32.mrb[0].mxu0
        %v4996 = vadd.f32 0.0, %v4995
        %v4997 = vpop.f32.mrb[0].mxu0
        %4998 = vmatprep.mubr.bf16.mxu0 0
        %4999 = vmatmul.mubr.bf16.gmra.mrb[0].mxu0 %v4818
        %v5000 = vpop.f32.mrb[0].mxu0
        %v5001 = vadd.f32 0.0, %v5000
        %v5002 = vpop.f32.mrb[0].mxu0
        %v5003 = vpop.f32.mrb[0].mxu0
        %v5004 = vadd.f32 0.0, %v5003
        %v5005 = vpop.f32.mrb[0].mxu0
        %5006 = vmatprep.mubr.bf16.mxu0 0
        %5007 = vmatmul.mubr.bf16.gmra.mrb[0].mxu0 %v4821
        %v5008 = vpop.f32.mrb[0].mxu0
        %v5009 = vadd.f32 0.0, %v5008
        %v5010 = vpop.f32.mrb[0].mxu0
        %v5011 = vpop.f32.mrb[0].mxu0
        %v5012 = vadd.f32 0.0, %v5011
        %v5013 = vpop.f32.mrb[0].mxu0
        %5014 = vmatprep.mubr.bf16.mxu0 0
        %5015 = vmatmul.mubr.bf16.gmra.mrb[0].mxu0 %v4824
        %v5016 = vpop.f32.mrb[0].mxu0
        %v5017 = vadd.f32 0.0, %v5016
        %v5018 = vpop.f32.mrb[0].mxu0
        %v5019 = vpop.f32.mrb[0].mxu0
        %v5020 = vadd.f32 0.0, %v5019
        %v5021 = vpop.f32.mrb[0].mxu0
        %5022 = vmatprep.mubr.bf16.mxu0 0
        %5023 = vmatmul.mubr.bf16.gmra.mrb[0].mxu0 %v4827
        %v5024 = vpop.f32.mrb[0].mxu0
        %v5025 = vadd.f32 0.0, %v5024
        %v5026 = vpop.f32.mrb[0].mxu0
        %v5027 = vpop.f32.mrb[0].mxu0
        %v5028 = vadd.f32 0.0, %v5027
        %v5029 = vpop.f32.mrb[0].mxu0
        %5030 = vmatprep.mubr.bf16.mxu0 0
        %5031 = vmatmul.mubr.bf16.gmra.mrb[0].mxu0 %v4830
        %v5032 = vpop.f32.mrb[0].mxu0
        %v5033 = vadd.f32 0.0, %v5032
        %v5034 = vpop.f32.mrb[0].mxu0
        %v5035 = vpop.f32.mrb[0].mxu0
        %v5036 = vadd.f32 0.0, %v5035
        %v5037 = vpop.f32.mrb[0].mxu0
        %5038 = vmatprep.mubr.bf16.mxu0 0
        %5039 = vmatmul.mubr.bf16.gmra.mrb[0].mxu0 %v4833
        %v5040 = vpop.f32.mrb[0].mxu0
        %v5041 = vadd.f32 0.0, %v5040
        %v5042 = vpop.f32.mrb[0].mxu0
        %v5043 = vpop.f32.mrb[0].mxu0
        %v5044 = vadd.f32 0.0, %v5043
        %v5045 = vpop.f32.mrb[0].mxu0
        %5046 = vmatprep.mubr.bf16.mxu0 0
        %5047 = vmatmul.mubr.bf16.gmra.mrb[0].mxu0 %v4836
        %v5048 = vpop.f32.mrb[0].mxu0
        %v5049 = vadd.f32 0.0, %v5048
        %v5050 = vpop.f32.mrb[0].mxu0
        %v5051 = vpop.f32.mrb[0].mxu0
        %v5052 = vadd.f32 0.0, %v5051
        %v5053 = vpop.f32.mrb[0].mxu0
        %5054 = vmatprep.mubr.bf16.mxu0 0
        %5055 = vmatmul.mubr.bf16.gmra.mrb[0].mxu0 %v4839
        %v5056 = vpop.f32.mrb[0].mxu0
        %v5057 = vadd.f32 0.0, %v5056
        %v5058 = vpop.f32.mrb[0].mxu0
        %v5059 = vpop.f32.mrb[0].mxu0
        %v5060 = vadd.f32 0.0, %v5059
        %v5061 = vpop.f32.mrb[0].mxu0
        %5062 = vmatprep.mubr.bf16.mxu0 0
        %5063 = vmatmul.mubr.bf16.gmra.mrb[0].mxu0 %v4842
        %v5064 = vpop.f32.mrb[0].mxu0
        %v5065 = vadd.f32 0.0, %v5064
        %v5066 = vpop.f32.mrb[0].mxu0
        %v5067 = vpop.f32.mrb[0].mxu0
        %v5068 = vadd.f32 0.0, %v5067
        %v5069 = vpop.f32.mrb[0].mxu0
        %5070 = vmatprep.mubr.bf16.mxu0 0
        %5071 = vmatmul.mubr.bf16.gmra.mrb[0].mxu0 %v4845
        %v5072 = vpop.f32.mrb[0].mxu0
        %v5073 = vadd.f32 0.0, %v5072
        %v5074 = vpop.f32.mrb[0].mxu0
        %v5075 = vpop.f32.mrb[0].mxu0
        %v5076 = vadd.f32 0.0, %v5075
        %v5077 = vpop.f32.mrb[0].mxu0
        %5078 = vmatprep.mubr.bf16.mxu0 0
        %5079 = vmatmul.mubr.bf16.gmra.mrb[0].mxu0 %v4848
        %v5080 = vpop.f32.mrb[0].mxu0
        %v5081 = vadd.f32 0.0, %v5080
        %v5082 = vpop.f32.mrb[0].mxu0
        %v5083 = vpop.f32.mrb[0].mxu0
        %v5084 = vadd.f32 0.0, %v5083
        %v5085 = vpop.f32.mrb[0].mxu0
        %5086 = vmatprep.mubr.bf16.mxu0 0
        %5087 = vmatmul.mubr.bf16.gmra.mrb[0].mxu0 %v4851
        %v5088 = vpop.f32.mrb[0].mxu0
        %v5089 = vadd.f32 0.0, %v5088
        %v5090 = vpop.f32.mrb[0].mxu0
        %v5091 = vpop.f32.mrb[0].mxu0
        %v5092 = vadd.f32 0.0, %v5091
        %v5093 = vpop.f32.mrb[0].mxu0
        %5094 = vmatprep.mubr.bf16.mxu0 0
        %5095 = vmatmul.mubr.bf16.gmra.mrb[0].mxu0 %v4854
        %v5096 = vpop.f32.mrb[0].mxu0
        %v5097 = vadd.f32 0.0, %v5096
        %v5098 = vpop.f32.mrb[0].mxu0
        %v5099 = vpop.f32.mrb[0].mxu0
        %v5100 = vadd.f32 0.0, %v5099
        %v5101 = vpop.f32.mrb[0].mxu0
        %5102 = vmatprep.mubr.bf16.mxu0 0
        %5103 = vmatmul.mubr.bf16.gmra.mrb[0].mxu0 %v4857
        %v5104 = vpop.f32.mrb[0].mxu0
        %v5105 = vadd.f32 0.0, %v5104
        %v5106 = vpop.f32.mrb[0].mxu0
        %v5107 = vpop.f32.mrb[0].mxu0
        %v5108 = vadd.f32 0.0, %v5107
        %v5109 = vpop.f32.mrb[0].mxu0
        %5110 = vmatprep.mubr.bf16.mxu0 0
        %5111 = vmatmul.mubr.bf16.gmra.mrb[0].mxu0 %v4860
        %v5112 = vpop.f32.mrb[0].mxu0
        %v5113 = vadd.f32 0.0, %v5112
        %v5114 = vpop.f32.mrb[0].mxu0
        %v5115 = vpop.f32.mrb[0].mxu0
        %v5116 = vadd.f32 0.0, %v5115
        %v5117 = vpop.f32.mrb[0].mxu0
        %5118 = vmatprep.mubr.bf16.mxu0 0
        %5119 = vmatmul.mubr.bf16.gmra.mrb[0].mxu0 %v4863
        %v5120 = vpop.f32.mrb[0].mxu0
        %v5121 = vadd.f32 0.0, %v5120
        %v5122 = vpop.f32.mrb[0].mxu0
        %v5123 = vpop.f32.mrb[0].mxu0
        %v5124 = vadd.f32 0.0, %v5123
        %v5125 = vpop.f32.mrb[0].mxu0
        %5126 = vmatprep.mubr.bf16.mxu0 0
        %5127 = vmatmul.mubr.bf16.gmra.mrb[0].mxu0 %v4866
        %v5128 = vpop.f32.mrb[0].mxu0
        %v5129 = vadd.f32 0.0, %v5128
        %v5130 = vpop.f32.mrb[0].mxu0
        %v5131 = vpop.f32.mrb[0].mxu0
        %v5132 = vadd.f32 0.0, %v5131
        %v5133 = vpop.f32.mrb[0].mxu0
        %5134 = vmatprep.mubr.bf16.mxu0 0
        %5135 = vmatmul.mubr.bf16.gmra.mrb[0].mxu0 %v4869
        %v5136 = vpop.f32.mrb[0].mxu0
        %v5137 = vadd.f32 0.0, %v5136
        %v5138 = vpop.f32.mrb[0].mxu0
        %v5139 = vpop.f32.mrb[0].mxu0
        %v5140 = vadd.f32 0.0, %v5139
        %v5141 = vpop.f32.mrb[0].mxu0
        %5142 = vmatprep.mubr.bf16.mxu0 0
        %5143 = vmatmul.mubr.bf16.gmra.mrb[0].mxu0 %v4872
        %v5144 = vpop.f32.mrb[0].mxu0
        %v5145 = vadd.f32 0.0, %v5144
        %v5146 = vpop.f32.mrb[0].mxu0
        %v5147 = vpop.f32.mrb[0].mxu0
        %v5148 = vadd.f32 0.0, %v5147
        %v5149 = vpop.f32.mrb[0].mxu0
        %5150 = vmatprep.mubr.bf16.mxu0 0
        %5151 = vmatmul.mubr.bf16.gmra.mrb[0].mxu0 %v4875
        %v5152 = vpop.f32.mrb[0].mxu0
        %v5153 = vadd.f32 0.0, %v5152
        %v5154 = vpop.f32.mrb[0].mxu0
        %v5155 = vpop.f32.mrb[0].mxu0
        %v5156 = vadd.f32 0.0, %v5155
        %v5157 = vpop.f32.mrb[0].mxu0
        %5158 = vmatprep.mubr.bf16.mxu0 0
        %5159 = vmatmul.mubr.bf16.gmra.mrb[0].mxu0 %v4878
        %v5160 = vpop.f32.mrb[0].mxu0
        %v5161 = vadd.f32 0.0, %v5160
        %v5162 = vpop.f32.mrb[0].mxu0
        %v5163 = vpop.f32.mrb[0].mxu0
        %v5164 = vadd.f32 0.0, %v5163
        %v5165 = vpop.f32.mrb[0].mxu0
        %5166 = vmatprep.mubr.bf16.mxu0 0
        %5167 = vmatmul.mubr.bf16.gmra.mrb[0].mxu0 %v4881
        %v5168 = vpop.f32.mrb[0].mxu0
        %v5169 = vadd.f32 0.0, %v5168
        %v5170 = vpop.f32.mrb[0].mxu0
        %v5171 = vpop.f32.mrb[0].mxu0
        %v5172 = vadd.f32 0.0, %v5171
        %v5173 = vpop.f32.mrb[0].mxu0
        %5174 = vdwg.mxu0
        %v5175 = vadd.f32 %v4655, %v4921
        %v5176 = vadd.f32 %v4656, %v4924
        %v5177 = vadd.f32 %v4657, %v4929
        %v5178 = vadd.f32 %v4658, %v4932
        %v5179 = vadd.f32 %v4659, %v4937
        %v5180 = vadd.f32 %v4660, %v4940
        %v5181 = vadd.f32 %v4661, %v4945
        %v5182 = vadd.f32 %v4662, %v4948
        %v5183 = vadd.f32 %v4663, %v4953
        %v5184 = vadd.f32 %v4664, %v4956
        %v5185 = vadd.f32 %v4665, %v4961
        %v5186 = vadd.f32 %v4666, %v4964
        %v5187 = vadd.f32 %v4667, %v4969
        %v5188 = vadd.f32 %v4668, %v4972
        %v5189 = vadd.f32 %v4669, %v4977
        %v5190 = vadd.f32 %v4670, %v4980
        %v5191 = vadd.f32 %v4671, %v4985
        %v5192 = vadd.f32 %v4672, %v4988
        %v5193 = vadd.f32 %v4673, %v4993
        %v5194 = vadd.f32 %v4674, %v4996
        %v5195 = vadd.f32 %v4675, %v5001
        %v5196 = vadd.f32 %v4676, %v5004
        %v5197 = vadd.f32 %v4677, %v5009
        %v5198 = vadd.f32 %v4678, %v5012
        %v5199 = vadd.f32 %v4679, %v5017
        %v5200 = vadd.f32 %v4680, %v5020
        %v5201 = vadd.f32 %v4681, %v5025
        %v5202 = vadd.f32 %v4682, %v5028
        %v5203 = vadd.f32 %v4683, %v5033
        %v5204 = vadd.f32 %v4684, %v5036
        %v5205 = vadd.f32 %v4685, %v5041
        %v5206 = vadd.f32 %v4686, %v5044
        %v5207 = vadd.f32 %v4687, %v5049
        %v5208 = vadd.f32 %v4688, %v5052
        %v5209 = vadd.f32 %v4689, %v5057
        %v5210 = vadd.f32 %v4690, %v5060
        %v5211 = vadd.f32 %v4691, %v5065
        %v5212 = vadd.f32 %v4692, %v5068
        %v5213 = vadd.f32 %v4693, %v5073
        %v5214 = vadd.f32 %v4694, %v5076
        %v5215 = vadd.f32 %v4695, %v5081
        %v5216 = vadd.f32 %v4696, %v5084
        %v5217 = vadd.f32 %v4697, %v5089
        %v5218 = vadd.f32 %v4698, %v5092
        %v5219 = vadd.f32 %v4699, %v5097
        %v5220 = vadd.f32 %v4700, %v5100
        %v5221 = vadd.f32 %v4701, %v5105
        %v5222 = vadd.f32 %v4702, %v5108
        %v5223 = vadd.f32 %v4703, %v5113
        %v5224 = vadd.f32 %v4704, %v5116
        %v5225 = vadd.f32 %v4705, %v5121
        %v5226 = vadd.f32 %v4706, %v5124
        %v5227 = vadd.f32 %v4707, %v5129
        %v5228 = vadd.f32 %v4708, %v5132
        %v5229 = vadd.f32 %v4709, %v5137
        %v5230 = vadd.f32 %v4710, %v5140
        %v5231 = vadd.f32 %v4711, %v5145
        %v5232 = vadd.f32 %v4712, %v5148
        %v5233 = vadd.f32 %v4713, %v5153
        %v5234 = vadd.f32 %v4714, %v5156
        %v5235 = vadd.f32 %v4715, %v5161
        %v5236 = vadd.f32 %v4716, %v5164
        %v5237 = vadd.f32 %v4717, %v5169
        %v5238 = vadd.f32 %v4718, %v5172
        %v5239 = vld [vmem:[%s4] sm:$0x1]
        %v5241 = vlaneseq
        %v5242 = vshrl.u32 %v5241, 7
        %v5243 = vsub.s32 0, %v5242
        %v5244 = vrot.slane %v5239, %v5243
        %v5246 = vadd.f32 %v5175, %v5244
        %v5247 = vadd.f32 %v5176, %v5244
        %v5248 = vadd.f32 %v5177, %v5244
        %v5249 = vadd.f32 %v5178, %v5244
        %v5250 = vadd.f32 %v5179, %v5244
        %v5251 = vadd.f32 %v5180, %v5244
        %v5252 = vadd.f32 %v5181, %v5244
        %v5253 = vadd.f32 %v5182, %v5244
        %v5254 = vadd.f32 %v5183, %v5244
        %v5255 = vadd.f32 %v5184, %v5244
        %v5256 = vadd.f32 %v5185, %v5244
        %v5257 = vadd.f32 %v5186, %v5244
        %v5258 = vadd.f32 %v5187, %v5244
        %v5259 = vadd.f32 %v5188, %v5244
        %v5260 = vadd.f32 %v5189, %v5244
        %v5261 = vadd.f32 %v5190, %v5244
        %v5262 = vadd.f32 %v5191, %v5244
        %v5263 = vadd.f32 %v5192, %v5244
        %v5264 = vadd.f32 %v5193, %v5244
        %v5265 = vadd.f32 %v5194, %v5244
        %v5266 = vadd.f32 %v5195, %v5244
        %v5267 = vadd.f32 %v5196, %v5244
        %v5268 = vadd.f32 %v5197, %v5244
        %v5269 = vadd.f32 %v5198, %v5244
        %v5270 = vadd.f32 %v5199, %v5244
        %v5271 = vadd.f32 %v5200, %v5244
        %v5272 = vadd.f32 %v5201, %v5244
        %v5273 = vadd.f32 %v5202, %v5244
        %v5274 = vadd.f32 %v5203, %v5244
        %v5275 = vadd.f32 %v5204, %v5244
        %v5276 = vadd.f32 %v5205, %v5244
        %v5277 = vadd.f32 %v5206, %v5244
        %v5278 = vadd.f32 %v5207, %v5244
        %v5279 = vadd.f32 %v5208, %v5244
        %v5280 = vadd.f32 %v5209, %v5244
        %v5281 = vadd.f32 %v5210, %v5244
        %v5282 = vadd.f32 %v5211, %v5244
        %v5283 = vadd.f32 %v5212, %v5244
        %v5284 = vadd.f32 %v5213, %v5244
        %v5285 = vadd.f32 %v5214, %v5244
        %v5286 = vadd.f32 %v5215, %v5244
        %v5287 = vadd.f32 %v5216, %v5244
        %v5288 = vadd.f32 %v5217, %v5244
        %v5289 = vadd.f32 %v5218, %v5244
        %v5290 = vadd.f32 %v5219, %v5244
        %v5291 = vadd.f32 %v5220, %v5244
        %v5292 = vadd.f32 %v5221, %v5244
        %v5293 = vadd.f32 %v5222, %v5244
        %v5294 = vadd.f32 %v5223, %v5244
        %v5295 = vadd.f32 %v5224, %v5244
        %v5296 = vadd.f32 %v5225, %v5244
        %v5297 = vadd.f32 %v5226, %v5244
        %v5298 = vadd.f32 %v5227, %v5244
        %v5299 = vadd.f32 %v5228, %v5244
        %v5300 = vadd.f32 %v5229, %v5244
        %v5301 = vadd.f32 %v5230, %v5244
        %v5302 = vadd.f32 %v5231, %v5244
        %v5303 = vadd.f32 %v5232, %v5244
        %v5304 = vadd.f32 %v5233, %v5244
        %v5305 = vadd.f32 %v5234, %v5244
        %v5306 = vadd.f32 %v5235, %v5244
        %v5307 = vadd.f32 %v5236, %v5244
        %v5308 = vadd.f32 %v5237, %v5244
        %v5309 = vadd.f32 %v5238, %v5244
        %v5310 = vmax.f32 %v5246, 0.0
        %v5311 = vmax.f32 %v5247, 0.0
        %v5312 = vmax.f32 %v5248, 0.0
        %v5313 = vmax.f32 %v5249, 0.0
        %v5314 = vmax.f32 %v5250, 0.0
        %v5315 = vmax.f32 %v5251, 0.0
        %v5316 = vmax.f32 %v5252, 0.0
        %v5317 = vmax.f32 %v5253, 0.0
        %v5318 = vmax.f32 %v5254, 0.0
        %v5319 = vmax.f32 %v5255, 0.0
        %v5320 = vmax.f32 %v5256, 0.0
        %v5321 = vmax.f32 %v5257, 0.0
        %v5322 = vmax.f32 %v5258, 0.0
        %v5323 = vmax.f32 %v5259, 0.0
        %v5324 = vmax.f32 %v5260, 0.0
        %v5325 = vmax.f32 %v5261, 0.0
        %v5326 = vmax.f32 %v5262, 0.0
        %v5327 = vmax.f32 %v5263, 0.0
        %v5328 = vmax.f32 %v5264, 0.0
        %v5329 = vmax.f32 %v5265, 0.0
        %v5330 = vmax.f32 %v5266, 0.0
        %v5331 = vmax.f32 %v5267, 0.0
        %v5332 = vmax.f32 %v5268, 0.0
        %v5333 = vmax.f32 %v5269, 0.0
        %v5334 = vmax.f32 %v5270, 0.0
        %v5335 = vmax.f32 %v5271, 0.0
        %v5336 = vmax.f32 %v5272, 0.0
        %v5337 = vmax.f32 %v5273, 0.0
        %v5338 = vmax.f32 %v5274, 0.0
        %v5339 = vmax.f32 %v5275, 0.0
        %v5340 = vmax.f32 %v5276, 0.0
        %v5341 = vmax.f32 %v5277, 0.0
        %v5342 = vmax.f32 %v5278, 0.0
        %v5343 = vmax.f32 %v5279, 0.0
        %v5344 = vmax.f32 %v5280, 0.0
        %v5345 = vmax.f32 %v5281, 0.0
        %v5346 = vmax.f32 %v5282, 0.0
        %v5347 = vmax.f32 %v5283, 0.0
        %v5348 = vmax.f32 %v5284, 0.0
        %v5349 = vmax.f32 %v5285, 0.0
        %v5350 = vmax.f32 %v5286, 0.0
        %v5351 = vmax.f32 %v5287, 0.0
        %v5352 = vmax.f32 %v5288, 0.0
        %v5353 = vmax.f32 %v5289, 0.0
        %v5354 = vmax.f32 %v5290, 0.0
        %v5355 = vmax.f32 %v5291, 0.0
        %v5356 = vmax.f32 %v5292, 0.0
        %v5357 = vmax.f32 %v5293, 0.0
        %v5358 = vmax.f32 %v5294, 0.0
        %v5359 = vmax.f32 %v5295, 0.0
        %v5360 = vmax.f32 %v5296, 0.0
        %v5361 = vmax.f32 %v5297, 0.0
        %v5362 = vmax.f32 %v5298, 0.0
        %v5363 = vmax.f32 %v5299, 0.0
        %v5364 = vmax.f32 %v5300, 0.0
        %v5365 = vmax.f32 %v5301, 0.0
        %v5366 = vmax.f32 %v5302, 0.0
        %v5367 = vmax.f32 %v5303, 0.0
        %v5368 = vmax.f32 %v5304, 0.0
        %v5369 = vmax.f32 %v5305, 0.0
        %v5370 = vmax.f32 %v5306, 0.0
        %v5371 = vmax.f32 %v5307, 0.0
        %v5372 = vmax.f32 %v5308, 0.0
        %v5373 = vmax.f32 %v5309, 0.0
        %v5374 = vpack.c.bf16 %v5311, %v5310
        %v5375 = vpack.c.bf16 %v5313, %v5312
        %v5376 = vpack.c.bf16 %v5315, %v5314
        %v5377 = vpack.c.bf16 %v5317, %v5316
        %v5378 = vpack.c.bf16 %v5319, %v5318
        %v5379 = vpack.c.bf16 %v5321, %v5320
        %v5380 = vpack.c.bf16 %v5323, %v5322
        %v5381 = vpack.c.bf16 %v5325, %v5324
        %v5382 = vpack.c.bf16 %v5327, %v5326
        %v5383 = vpack.c.bf16 %v5329, %v5328
        %v5384 = vpack.c.bf16 %v5331, %v5330
        %v5385 = vpack.c.bf16 %v5333, %v5332
        %v5386 = vpack.c.bf16 %v5335, %v5334
        %v5387 = vpack.c.bf16 %v5337, %v5336
        %v5388 = vpack.c.bf16 %v5339, %v5338
        %v5389 = vpack.c.bf16 %v5341, %v5340
        %v5390 = vpack.c.bf16 %v5343, %v5342
        %v5391 = vpack.c.bf16 %v5345, %v5344
        %v5392 = vpack.c.bf16 %v5347, %v5346
        %v5393 = vpack.c.bf16 %v5349, %v5348
        %v5394 = vpack.c.bf16 %v5351, %v5350
        %v5395 = vpack.c.bf16 %v5353, %v5352
        %v5396 = vpack.c.bf16 %v5355, %v5354
        %v5397 = vpack.c.bf16 %v5357, %v5356
        %v5398 = vpack.c.bf16 %v5359, %v5358
        %v5399 = vpack.c.bf16 %v5361, %v5360
        %v5400 = vpack.c.bf16 %v5363, %v5362
        %v5401 = vpack.c.bf16 %v5365, %v5364
        %v5402 = vpack.c.bf16 %v5367, %v5366
        %v5403 = vpack.c.bf16 %v5369, %v5368
        %v5404 = vpack.c.bf16 %v5371, %v5370
        %v5405 = vpack.c.bf16 %v5373, %v5372
        %v5438 = vunpack.c.l.b16 %v5374
        %v5439 = vunpack.c.h.b16 %v5374
        %v5440 = vunpack.c.l.b16 %v5375
        %v5441 = vunpack.c.h.b16 %v5375
        %v5442 = vunpack.c.l.b16 %v5376
        %v5443 = vunpack.c.h.b16 %v5376
        %v5444 = vunpack.c.l.b16 %v5377
        %v5445 = vunpack.c.h.b16 %v5377
        %v5446 = vunpack.c.l.b16 %v5378
        %v5447 = vunpack.c.h.b16 %v5378
        %v5448 = vunpack.c.l.b16 %v5379
        %v5449 = vunpack.c.h.b16 %v5379
        %v5450 = vunpack.c.l.b16 %v5380
        %v5451 = vunpack.c.h.b16 %v5380
        %v5452 = vunpack.c.l.b16 %v5381
        %v5453 = vunpack.c.h.b16 %v5381
        %v5454 = vunpack.c.l.b16 %v5382
        %v5455 = vunpack.c.h.b16 %v5382
        %v5456 = vunpack.c.l.b16 %v5383
        %v5457 = vunpack.c.h.b16 %v5383
        %v5458 = vunpack.c.l.b16 %v5384
        %v5459 = vunpack.c.h.b16 %v5384
        %v5460 = vunpack.c.l.b16 %v5385
        %v5461 = vunpack.c.h.b16 %v5385
        %v5462 = vunpack.c.l.b16 %v5386
        %v5463 = vunpack.c.h.b16 %v5386
        %v5464 = vunpack.c.l.b16 %v5387
        %v5465 = vunpack.c.h.b16 %v5387
        %v5466 = vunpack.c.l.b16 %v5388
        %v5467 = vunpack.c.h.b16 %v5388
        %v5468 = vunpack.c.l.b16 %v5389
        %v5469 = vunpack.c.h.b16 %v5389
        %v5470 = vunpack.c.l.b16 %v5390
        %v5471 = vunpack.c.h.b16 %v5390
        %v5472 = vunpack.c.l.b16 %v5391
        %v5473 = vunpack.c.h.b16 %v5391
        %v5474 = vunpack.c.l.b16 %v5392
        %v5475 = vunpack.c.h.b16 %v5392
        %v5476 = vunpack.c.l.b16 %v5393
        %v5477 = vunpack.c.h.b16 %v5393
        %v5478 = vunpack.c.l.b16 %v5394
        %v5479 = vunpack.c.h.b16 %v5394
        %v5480 = vunpack.c.l.b16 %v5395
        %v5481 = vunpack.c.h.b16 %v5395
        %v5482 = vunpack.c.l.b16 %v5396
        %v5483 = vunpack.c.h.b16 %v5396
        %v5484 = vunpack.c.l.b16 %v5397
        %v5485 = vunpack.c.h.b16 %v5397
        %v5486 = vunpack.c.l.b16 %v5398
        %v5487 = vunpack.c.h.b16 %v5398
        %v5488 = vunpack.c.l.b16 %v5399
        %v5489 = vunpack.c.h.b16 %v5399
        %v5490 = vunpack.c.l.b16 %v5400
        %v5491 = vunpack.c.h.b16 %v5400
        %v5492 = vunpack.c.l.b16 %v5401
        %v5493 = vunpack.c.h.b16 %v5401
        %v5494 = vunpack.c.l.b16 %v5402
        %v5495 = vunpack.c.h.b16 %v5402
        %v5496 = vunpack.c.l.b16 %v5403
        %v5497 = vunpack.c.h.b16 %v5403
        %v5498 = vunpack.c.l.b16 %v5404
        %v5499 = vunpack.c.h.b16 %v5404
        %v5500 = vunpack.c.l.b16 %v5405
        %v5501 = vunpack.c.h.b16 %v5405
        %v5502 = vpack.c.b16 %v5438, %v5438
        %v5503 = vpack.c.b16 %v5439, %v5439
        %v5504 = vpack.c.b16 %v5440, %v5440
        %v5505 = vpack.c.b16 %v5441, %v5441
        %v5506 = vpack.c.b16 %v5442, %v5442
        %v5507 = vpack.c.b16 %v5443, %v5443
        %v5508 = vpack.c.b16 %v5444, %v5444
        %v5509 = vpack.c.b16 %v5445, %v5445
        %v5510 = vpack.c.b16 %v5446, %v5446
        %v5511 = vpack.c.b16 %v5447, %v5447
        %v5512 = vpack.c.b16 %v5448, %v5448
        %v5513 = vpack.c.b16 %v5449, %v5449
        %v5514 = vpack.c.b16 %v5450, %v5450
        %v5515 = vpack.c.b16 %v5451, %v5451
        %v5516 = vpack.c.b16 %v5452, %v5452
        %v5517 = vpack.c.b16 %v5453, %v5453
        %v5518 = vpack.c.b16 %v5454, %v5454
        %v5519 = vpack.c.b16 %v5455, %v5455
        %v5520 = vpack.c.b16 %v5456, %v5456
        %v5521 = vpack.c.b16 %v5457, %v5457
        %v5522 = vpack.c.b16 %v5458, %v5458
        %v5523 = vpack.c.b16 %v5459, %v5459
        %v5524 = vpack.c.b16 %v5460, %v5460
        %v5525 = vpack.c.b16 %v5461, %v5461
        %v5526 = vpack.c.b16 %v5462, %v5462
        %v5527 = vpack.c.b16 %v5463, %v5463
        %v5528 = vpack.c.b16 %v5464, %v5464
        %v5529 = vpack.c.b16 %v5465, %v5465
        %v5530 = vpack.c.b16 %v5466, %v5466
        %v5531 = vpack.c.b16 %v5467, %v5467
        %v5532 = vpack.c.b16 %v5468, %v5468
        %v5533 = vpack.c.b16 %v5469, %v5469
        %v5534 = vpack.c.b16 %v5470, %v5470
        %v5535 = vpack.c.b16 %v5471, %v5471
        %v5536 = vpack.c.b16 %v5472, %v5472
        %v5537 = vpack.c.b16 %v5473, %v5473
        %v5538 = vpack.c.b16 %v5474, %v5474
        %v5539 = vpack.c.b16 %v5475, %v5475
        %v5540 = vpack.c.b16 %v5476, %v5476
        %v5541 = vpack.c.b16 %v5477, %v5477
        %v5542 = vpack.c.b16 %v5478, %v5478
        %v5543 = vpack.c.b16 %v5479, %v5479
        %v5544 = vpack.c.b16 %v5480, %v5480
        %v5545 = vpack.c.b16 %v5481, %v5481
        %v5546 = vpack.c.b16 %v5482, %v5482
        %v5547 = vpack.c.b16 %v5483, %v5483
        %v5548 = vpack.c.b16 %v5484, %v5484
        %v5549 = vpack.c.b16 %v5485, %v5485
        %v5550 = vpack.c.b16 %v5486, %v5486
        %v5551 = vpack.c.b16 %v5487, %v5487
        %v5552 = vpack.c.b16 %v5488, %v5488
        %v5553 = vpack.c.b16 %v5489, %v5489
        %v5554 = vpack.c.b16 %v5490, %v5490
        %v5555 = vpack.c.b16 %v5491, %v5491
        %v5556 = vpack.c.b16 %v5492, %v5492
        %v5557 = vpack.c.b16 %v5493, %v5493
        %v5558 = vpack.c.b16 %v5494, %v5494
        %v5559 = vpack.c.b16 %v5495, %v5495
        %v5560 = vpack.c.b16 %v5496, %v5496
        %v5561 = vpack.c.b16 %v5497, %v5497
        %v5562 = vpack.c.b16 %v5498, %v5498
        %v5563 = vpack.c.b16 %v5499, %v5499
        %v5564 = vpack.c.b16 %v5500, %v5500
        %v5565 = vpack.c.b16 %v5501, %v5501
        %vm5630 = vcmask 519168
        %5631 = vst.msk [vmem:[%s315] sm:$0xf] %vm5630, %v5502
        %5632 = vst.msk [vmem:[%s315 + $0x4] sm:$0xf] %vm5630, %v5503
        %5633 = vst.msk [vmem:[%s315 + $0x8] sm:$0xf] %vm5630, %v5504
        %5634 = vst.msk [vmem:[%s315 + $0xc] sm:$0xf] %vm5630, %v5505
        %5635 = vst.msk [vmem:[%s315 + $0x10] sm:$0xf] %vm5630, %v5506
        %5636 = vst.msk [vmem:[%s315 + $0x14] sm:$0xf] %vm5630, %v5507
        %5637 = vst.msk [vmem:[%s315 + $0x18] sm:$0xf] %vm5630, %v5508
        %5638 = vst.msk [vmem:[%s315 + $0x1c] sm:$0xf] %vm5630, %v5509
        %5639 = vst.msk [vmem:[%s315 + $0x20] sm:$0xf] %vm5630, %v5510
        %5640 = vst.msk [vmem:[%s315 + $0x24] sm:$0xf] %vm5630, %v5511
        %5641 = vst.msk [vmem:[%s315 + $0x28] sm:$0xf] %vm5630, %v5512
        %5642 = vst.msk [vmem:[%s315 + $0x2c] sm:$0xf] %vm5630, %v5513
        %5643 = vst.msk [vmem:[%s315 + $0x30] sm:$0xf] %vm5630, %v5514
        %5644 = vst.msk [vmem:[%s315 + $0x34] sm:$0xf] %vm5630, %v5515
        %5645 = vst.msk [vmem:[%s315 + $0x38] sm:$0xf] %vm5630, %v5516
        %5646 = vst.msk [vmem:[%s315 + $0x3c] sm:$0xf] %vm5630, %v5517
        %5647 = vst.msk [vmem:[%s315 + $0x40] sm:$0xf] %vm5630, %v5518
        %5648 = vst.msk [vmem:[%s315 + $0x44] sm:$0xf] %vm5630, %v5519
        %5649 = vst.msk [vmem:[%s315 + $0x48] sm:$0xf] %vm5630, %v5520
        %5650 = vst.msk [vmem:[%s315 + $0x4c] sm:$0xf] %vm5630, %v5521
        %5651 = vst.msk [vmem:[%s315 + $0x50] sm:$0xf] %vm5630, %v5522
        %5652 = vst.msk [vmem:[%s315 + $0x54] sm:$0xf] %vm5630, %v5523
        %5653 = vst.msk [vmem:[%s315 + $0x58] sm:$0xf] %vm5630, %v5524
        %5654 = vst.msk [vmem:[%s315 + $0x5c] sm:$0xf] %vm5630, %v5525
        %5655 = vst.msk [vmem:[%s315 + $0x60] sm:$0xf] %vm5630, %v5526
        %5656 = vst.msk [vmem:[%s315 + $0x64] sm:$0xf] %vm5630, %v5527
        %5657 = vst.msk [vmem:[%s315 + $0x68] sm:$0xf] %vm5630, %v5528
        %5658 = vst.msk [vmem:[%s315 + $0x6c] sm:$0xf] %vm5630, %v5529
        %5659 = vst.msk [vmem:[%s315 + $0x70] sm:$0xf] %vm5630, %v5530
        %5660 = vst.msk [vmem:[%s315 + $0x74] sm:$0xf] %vm5630, %v5531
        %5661 = vst.msk [vmem:[%s315 + $0x78] sm:$0xf] %vm5630, %v5532
        %5662 = vst.msk [vmem:[%s315 + $0x7c] sm:$0xf] %vm5630, %v5533
        %5663 = vst.msk [vmem:[%s315 + $0x80] sm:$0xf] %vm5630, %v5534
        %5664 = vst.msk [vmem:[%s315 + $0x84] sm:$0xf] %vm5630, %v5535
        %5665 = vst.msk [vmem:[%s315 + $0x88] sm:$0xf] %vm5630, %v5536
        %5666 = vst.msk [vmem:[%s315 + $0x8c] sm:$0xf] %vm5630, %v5537
        %5667 = vst.msk [vmem:[%s315 + $0x90] sm:$0xf] %vm5630, %v5538
        %5668 = vst.msk [vmem:[%s315 + $0x94] sm:$0xf] %vm5630, %v5539
        %5669 = vst.msk [vmem:[%s315 + $0x98] sm:$0xf] %vm5630, %v5540
        %5670 = vst.msk [vmem:[%s315 + $0x9c] sm:$0xf] %vm5630, %v5541
        %5671 = vst.msk [vmem:[%s315 + $0xa0] sm:$0xf] %vm5630, %v5542
        %5672 = vst.msk [vmem:[%s315 + $0xa4] sm:$0xf] %vm5630, %v5543
        %5673 = vst.msk [vmem:[%s315 + $0xa8] sm:$0xf] %vm5630, %v5544
        %5674 = vst.msk [vmem:[%s315 + $0xac] sm:$0xf] %vm5630, %v5545
        %5675 = vst.msk [vmem:[%s315 + $0xb0] sm:$0xf] %vm5630, %v5546
        %5676 = vst.msk [vmem:[%s315 + $0xb4] sm:$0xf] %vm5630, %v5547
        %5677 = vst.msk [vmem:[%s315 + $0xb8] sm:$0xf] %vm5630, %v5548
        %5678 = vst.msk [vmem:[%s315 + $0xbc] sm:$0xf] %vm5630, %v5549
        %5679 = vst.msk [vmem:[%s315 + $0xc0] sm:$0xf] %vm5630, %v5550
        %5680 = vst.msk [vmem:[%s315 + $0xc4] sm:$0xf] %vm5630, %v5551
        %5681 = vst.msk [vmem:[%s315 + $0xc8] sm:$0xf] %vm5630, %v5552
        %5682 = vst.msk [vmem:[%s315 + $0xcc] sm:$0xf] %vm5630, %v5553
        %5683 = vst.msk [vmem:[%s315 + $0xd0] sm:$0xf] %vm5630, %v5554
        %5684 = vst.msk [vmem:[%s315 + $0xd4] sm:$0xf] %vm5630, %v5555
        %5685 = vst.msk [vmem:[%s315 + $0xd8] sm:$0xf] %vm5630, %v5556
        %5686 = vst.msk [vmem:[%s315 + $0xdc] sm:$0xf] %vm5630, %v5557
        %5687 = vst.msk [vmem:[%s315 + $0xe0] sm:$0xf] %vm5630, %v5558
        %5688 = vst.msk [vmem:[%s315 + $0xe4] sm:$0xf] %vm5630, %v5559
        %5689 = vst.msk [vmem:[%s315 + $0xe8] sm:$0xf] %vm5630, %v5560
        %5690 = vst.msk [vmem:[%s315 + $0xec] sm:$0xf] %vm5630, %v5561
        %5691 = vst.msk [vmem:[%s315 + $0xf0] sm:$0xf] %vm5630, %v5562
        %5692 = vst.msk [vmem:[%s315 + $0xf4] sm:$0xf] %vm5630, %v5563
        %5693 = vst.msk [vmem:[%s315 + $0xf8] sm:$0xf] %vm5630, %v5564
        %5694 = vst.msk [vmem:[%s315 + $0xfc] sm:$0xf] %vm5630, %v5565
        %v5695 = vld [vmem:[%s315] sm:$0xf]
        %v5696 = vld [vmem:[%s315 + $0x4] sm:$0xf]
        %v5697 = vld [vmem:[%s315 + $0x8] sm:$0xf]
        %v5698 = vld [vmem:[%s315 + $0xc] sm:$0xf]
        %v5699 = vld [vmem:[%s315 + $0x10] sm:$0xf]
        %v5700 = vld [vmem:[%s315 + $0x14] sm:$0xf]
        %v5701 = vld [vmem:[%s315 + $0x18] sm:$0xf]
        %v5702 = vld [vmem:[%s315 + $0x1c] sm:$0xf]
        %v5703 = vld [vmem:[%s315 + $0x20] sm:$0xf]
        %v5704 = vld [vmem:[%s315 + $0x24] sm:$0xf]
        %v5705 = vld [vmem:[%s315 + $0x28] sm:$0xf]
        %v5706 = vld [vmem:[%s315 + $0x2c] sm:$0xf]
        %v5707 = vld [vmem:[%s315 + $0x30] sm:$0xf]
        %v5708 = vld [vmem:[%s315 + $0x34] sm:$0xf]
        %v5709 = vld [vmem:[%s315 + $0x38] sm:$0xf]
        %v5710 = vld [vmem:[%s315 + $0x3c] sm:$0xf]
        %v5711 = vld [vmem:[%s315 + $0x40] sm:$0xf]
        %v5712 = vld [vmem:[%s315 + $0x44] sm:$0xf]
        %v5713 = vld [vmem:[%s315 + $0x48] sm:$0xf]
        %v5714 = vld [vmem:[%s315 + $0x4c] sm:$0xf]
        %v5715 = vld [vmem:[%s315 + $0x50] sm:$0xf]
        %v5716 = vld [vmem:[%s315 + $0x54] sm:$0xf]
        %v5717 = vld [vmem:[%s315 + $0x58] sm:$0xf]
        %v5718 = vld [vmem:[%s315 + $0x5c] sm:$0xf]
        %v5719 = vld [vmem:[%s315 + $0x60] sm:$0xf]
        %v5720 = vld [vmem:[%s315 + $0x64] sm:$0xf]
        %v5721 = vld [vmem:[%s315 + $0x68] sm:$0xf]
        %v5722 = vld [vmem:[%s315 + $0x6c] sm:$0xf]
        %v5723 = vld [vmem:[%s315 + $0x70] sm:$0xf]
        %v5724 = vld [vmem:[%s315 + $0x74] sm:$0xf]
        %v5725 = vld [vmem:[%s315 + $0x78] sm:$0xf]
        %v5726 = vld [vmem:[%s315 + $0x7c] sm:$0xf]
        %v5727 = vld [vmem:[%s315 + $0x80] sm:$0xf]
        %v5728 = vld [vmem:[%s315 + $0x84] sm:$0xf]
        %v5729 = vld [vmem:[%s315 + $0x88] sm:$0xf]
        %v5730 = vld [vmem:[%s315 + $0x8c] sm:$0xf]
        %v5731 = vld [vmem:[%s315 + $0x90] sm:$0xf]
        %v5732 = vld [vmem:[%s315 + $0x94] sm:$0xf]
        %v5733 = vld [vmem:[%s315 + $0x98] sm:$0xf]
        %v5734 = vld [vmem:[%s315 + $0x9c] sm:$0xf]
        %v5735 = vld [vmem:[%s315 + $0xa0] sm:$0xf]
        %v5736 = vld [vmem:[%s315 + $0xa4] sm:$0xf]
        %v5737 = vld [vmem:[%s315 + $0xa8] sm:$0xf]
        %v5738 = vld [vmem:[%s315 + $0xac] sm:$0xf]
        %v5739 = vld [vmem:[%s315 + $0xb0] sm:$0xf]
        %v5740 = vld [vmem:[%s315 + $0xb4] sm:$0xf]
        %v5741 = vld [vmem:[%s315 + $0xb8] sm:$0xf]
        %v5742 = vld [vmem:[%s315 + $0xbc] sm:$0xf]
        %v5743 = vld [vmem:[%s315 + $0xc0] sm:$0xf]
        %v5744 = vld [vmem:[%s315 + $0xc4] sm:$0xf]
        %v5745 = vld [vmem:[%s315 + $0xc8] sm:$0xf]
        %v5746 = vld [vmem:[%s315 + $0xcc] sm:$0xf]
        %v5747 = vld [vmem:[%s315 + $0xd0] sm:$0xf]
        %v5748 = vld [vmem:[%s315 + $0xd4] sm:$0xf]
        %v5749 = vld [vmem:[%s315 + $0xd8] sm:$0xf]
        %v5750 = vld [vmem:[%s315 + $0xdc] sm:$0xf]
        %v5751 = vld [vmem:[%s315 + $0xe0] sm:$0xf]
        %v5752 = vld [vmem:[%s315 + $0xe4] sm:$0xf]
        %v5753 = vld [vmem:[%s315 + $0xe8] sm:$0xf]
        %v5754 = vld [vmem:[%s315 + $0xec] sm:$0xf]
        %v5755 = vld [vmem:[%s315 + $0xf0] sm:$0xf]
        %v5756 = vld [vmem:[%s315 + $0xf4] sm:$0xf]
        %v5757 = vld [vmem:[%s315 + $0xf8] sm:$0xf]
        %v5758 = vld [vmem:[%s315 + $0xfc] sm:$0xf]
        %v5759 = vunpack.c.l.bf16 %v5695
        %v5760 = vunpack.c.l.bf16 %v5696
        %v5761 = vunpack.c.l.bf16 %v5697
        %v5762 = vunpack.c.l.bf16 %v5698
        %v5763 = vunpack.c.l.bf16 %v5699
        %v5764 = vunpack.c.l.bf16 %v5700
        %v5765 = vunpack.c.l.bf16 %v5701
        %v5766 = vunpack.c.l.bf16 %v5702
        %v5767 = vunpack.c.l.bf16 %v5703
        %v5768 = vunpack.c.l.bf16 %v5704
        %v5769 = vunpack.c.l.bf16 %v5705
        %v5770 = vunpack.c.l.bf16 %v5706
        %v5771 = vunpack.c.l.bf16 %v5707
        %v5772 = vunpack.c.l.bf16 %v5708
        %v5773 = vunpack.c.l.bf16 %v5709
        %v5774 = vunpack.c.l.bf16 %v5710
        %v5775 = vunpack.c.l.bf16 %v5711
        %v5776 = vunpack.c.l.bf16 %v5712
        %v5777 = vunpack.c.l.bf16 %v5713
        %v5778 = vunpack.c.l.bf16 %v5714
        %v5779 = vunpack.c.l.bf16 %v5715
        %v5780 = vunpack.c.l.bf16 %v5716
        %v5781 = vunpack.c.l.bf16 %v5717
        %v5782 = vunpack.c.l.bf16 %v5718
        %v5783 = vunpack.c.l.bf16 %v5719
        %v5784 = vunpack.c.l.bf16 %v5720
        %v5785 = vunpack.c.l.bf16 %v5721
        %v5786 = vunpack.c.l.bf16 %v5722
        %v5787 = vunpack.c.l.bf16 %v5723
        %v5788 = vunpack.c.l.bf16 %v5724
        %v5789 = vunpack.c.l.bf16 %v5725
        %v5790 = vunpack.c.l.bf16 %v5726
        %v5791 = vunpack.c.l.bf16 %v5727
        %v5792 = vunpack.c.l.bf16 %v5728
        %v5793 = vunpack.c.l.bf16 %v5729
        %v5794 = vunpack.c.l.bf16 %v5730
        %v5795 = vunpack.c.l.bf16 %v5731
        %v5796 = vunpack.c.l.bf16 %v5732
        %v5797 = vunpack.c.l.bf16 %v5733
        %v5798 = vunpack.c.l.bf16 %v5734
        %v5799 = vunpack.c.l.bf16 %v5735
        %v5800 = vunpack.c.l.bf16 %v5736
        %v5801 = vunpack.c.l.bf16 %v5737
        %v5802 = vunpack.c.l.bf16 %v5738
        %v5803 = vunpack.c.l.bf16 %v5739
        %v5804 = vunpack.c.l.bf16 %v5740
        %v5805 = vunpack.c.l.bf16 %v5741
        %v5806 = vunpack.c.l.bf16 %v5742
        %v5807 = vunpack.c.l.bf16 %v5743
        %v5808 = vunpack.c.l.bf16 %v5744
        %v5809 = vunpack.c.l.bf16 %v5745
        %v5810 = vunpack.c.l.bf16 %v5746
        %v5811 = vunpack.c.l.bf16 %v5747
        %v5812 = vunpack.c.l.bf16 %v5748
        %v5813 = vunpack.c.l.bf16 %v5749
        %v5814 = vunpack.c.l.bf16 %v5750
        %v5815 = vunpack.c.l.bf16 %v5751
        %v5816 = vunpack.c.l.bf16 %v5752
        %v5817 = vunpack.c.l.bf16 %v5753
        %v5818 = vunpack.c.l.bf16 %v5754
        %v5819 = vunpack.c.l.bf16 %v5755
        %v5820 = vunpack.c.l.bf16 %v5756
        %v5821 = vunpack.c.l.bf16 %v5757
        %v5822 = vunpack.c.l.bf16 %v5758
        %v5823 = vld [vmem:[%s309] sm:$0xff]
        %v5824 = vld [vmem:[%s309 + $0x8] sm:$0xff]
        %v5825 = vld [vmem:[%s309 + $0x10] sm:$0xff]
        %v5826 = vld [vmem:[%s309 + $0x18] sm:$0xff]
        %v5827 = vld [vmem:[%s309 + $0x20] sm:$0xff]
        %v5828 = vld [vmem:[%s309 + $0x28] sm:$0xff]
        %v5829 = vld [vmem:[%s309 + $0x30] sm:$0xff]
        %v5830 = vld [vmem:[%s309 + $0x38] sm:$0xff]
        %v5831 = vld [vmem:[%s309 + $0x40] sm:$0xff]
        %v5832 = vld [vmem:[%s309 + $0x48] sm:$0xff]
        %v5833 = vld [vmem:[%s309 + $0x50] sm:$0xff]
        %v5834 = vld [vmem:[%s309 + $0x58] sm:$0xff]
        %v5835 = vld [vmem:[%s309 + $0x60] sm:$0xff]
        %v5836 = vld [vmem:[%s309 + $0x68] sm:$0xff]
        %v5837 = vld [vmem:[%s309 + $0x70] sm:$0xff]
        %v5838 = vld [vmem:[%s309 + $0x78] sm:$0xff]
        %v5839 = vld [vmem:[%s309 + $0x80] sm:$0xff]
        %v5840 = vld [vmem:[%s309 + $0x88] sm:$0xff]
        %v5841 = vld [vmem:[%s309 + $0x90] sm:$0xff]
        %v5842 = vld [vmem:[%s309 + $0x98] sm:$0xff]
        %v5843 = vld [vmem:[%s309 + $0xa0] sm:$0xff]
        %v5844 = vld [vmem:[%s309 + $0xa8] sm:$0xff]
        %v5845 = vld [vmem:[%s309 + $0xb0] sm:$0xff]
        %v5846 = vld [vmem:[%s309 + $0xb8] sm:$0xff]
        %v5847 = vld [vmem:[%s309 + $0xc0] sm:$0xff]
        %v5848 = vld [vmem:[%s309 + $0xc8] sm:$0xff]
        %v5849 = vld [vmem:[%s309 + $0xd0] sm:$0xff]
        %v5850 = vld [vmem:[%s309 + $0xd8] sm:$0xff]
        %v5851 = vld [vmem:[%s309 + $0xe0] sm:$0xff]
        %v5852 = vld [vmem:[%s309 + $0xe8] sm:$0xff]
        %v5853 = vld [vmem:[%s309 + $0xf0] sm:$0xff]
        %v5854 = vld [vmem:[%s309 + $0xf8] sm:$0xff]
        %v5855 = vld [vmem:[%s309 + $0x100] sm:$0xff]
        %v5856 = vld [vmem:[%s309 + $0x108] sm:$0xff]
        %v5857 = vld [vmem:[%s309 + $0x110] sm:$0xff]
        %v5858 = vld [vmem:[%s309 + $0x118] sm:$0xff]
        %v5859 = vld [vmem:[%s309 + $0x120] sm:$0xff]
        %v5860 = vld [vmem:[%s309 + $0x128] sm:$0xff]
        %v5861 = vld [vmem:[%s309 + $0x130] sm:$0xff]
        %v5862 = vld [vmem:[%s309 + $0x138] sm:$0xff]
        %v5863 = vld [vmem:[%s309 + $0x140] sm:$0xff]
        %v5864 = vld [vmem:[%s309 + $0x148] sm:$0xff]
        %v5865 = vld [vmem:[%s309 + $0x150] sm:$0xff]
        %v5866 = vld [vmem:[%s309 + $0x158] sm:$0xff]
        %v5867 = vld [vmem:[%s309 + $0x160] sm:$0xff]
        %v5868 = vld [vmem:[%s309 + $0x168] sm:$0xff]
        %v5869 = vld [vmem:[%s309 + $0x170] sm:$0xff]
        %v5870 = vld [vmem:[%s309 + $0x178] sm:$0xff]
        %v5871 = vld [vmem:[%s309 + $0x180] sm:$0xff]
        %v5872 = vld [vmem:[%s309 + $0x188] sm:$0xff]
        %v5873 = vld [vmem:[%s309 + $0x190] sm:$0xff]
        %v5874 = vld [vmem:[%s309 + $0x198] sm:$0xff]
        %v5875 = vld [vmem:[%s309 + $0x1a0] sm:$0xff]
        %v5876 = vld [vmem:[%s309 + $0x1a8] sm:$0xff]
        %v5877 = vld [vmem:[%s309 + $0x1b0] sm:$0xff]
        %v5878 = vld [vmem:[%s309 + $0x1b8] sm:$0xff]
        %v5879 = vld [vmem:[%s309 + $0x1c0] sm:$0xff]
        %v5880 = vld [vmem:[%s309 + $0x1c8] sm:$0xff]
        %v5881 = vld [vmem:[%s309 + $0x1d0] sm:$0xff]
        %v5882 = vld [vmem:[%s309 + $0x1d8] sm:$0xff]
        %v5883 = vld [vmem:[%s309 + $0x1e0] sm:$0xff]
        %v5884 = vld [vmem:[%s309 + $0x1e8] sm:$0xff]
        %v5885 = vld [vmem:[%s309 + $0x1f0] sm:$0xff]
        %v5886 = vld [vmem:[%s309 + $0x1f8] sm:$0xff]
        %5888 = vset.pattern.permute.xlu0 0
        %5889 = vperm.xlu0 %5888, %v5823
        %v5890 = vpop.permute.xlu0 %5889
        %5893 = vset.pattern.permute.xlu0 0
        %5894 = vperm.xlu0 %5893, %v5824
        %v5895 = vpop.permute.xlu0 %5894
        %5898 = vset.pattern.permute.xlu0 0
        %5899 = vperm.xlu0 %5898, %v5825
        %v5900 = vpop.permute.xlu0 %5899
        %5903 = vset.pattern.permute.xlu0 0
        %5904 = vperm.xlu0 %5903, %v5826
        %v5905 = vpop.permute.xlu0 %5904
        %5908 = vset.pattern.permute.xlu0 0
        %5909 = vperm.xlu0 %5908, %v5827
        %v5910 = vpop.permute.xlu0 %5909
        %5913 = vset.pattern.permute.xlu0 0
        %5914 = vperm.xlu0 %5913, %v5828
        %v5915 = vpop.permute.xlu0 %5914
        %5918 = vset.pattern.permute.xlu0 0
        %5919 = vperm.xlu0 %5918, %v5829
        %v5920 = vpop.permute.xlu0 %5919
        %5923 = vset.pattern.permute.xlu0 0
        %5924 = vperm.xlu0 %5923, %v5830
        %v5925 = vpop.permute.xlu0 %5924
        %5928 = vset.pattern.permute.xlu0 0
        %5929 = vperm.xlu0 %5928, %v5831
        %v5930 = vpop.permute.xlu0 %5929
        %5933 = vset.pattern.permute.xlu0 0
        %5934 = vperm.xlu0 %5933, %v5832
        %v5935 = vpop.permute.xlu0 %5934
        %5938 = vset.pattern.permute.xlu0 0
        %5939 = vperm.xlu0 %5938, %v5833
        %v5940 = vpop.permute.xlu0 %5939
        %5943 = vset.pattern.permute.xlu0 0
        %5944 = vperm.xlu0 %5943, %v5834
        %v5945 = vpop.permute.xlu0 %5944
        %5948 = vset.pattern.permute.xlu0 0
        %5949 = vperm.xlu0 %5948, %v5835
        %v5950 = vpop.permute.xlu0 %5949
        %5953 = vset.pattern.permute.xlu0 0
        %5954 = vperm.xlu0 %5953, %v5836
        %v5955 = vpop.permute.xlu0 %5954
        %5958 = vset.pattern.permute.xlu0 0
        %5959 = vperm.xlu0 %5958, %v5837
        %v5960 = vpop.permute.xlu0 %5959
        %5963 = vset.pattern.permute.xlu0 0
        %5964 = vperm.xlu0 %5963, %v5838
        %v5965 = vpop.permute.xlu0 %5964
        %5968 = vset.pattern.permute.xlu0 0
        %5969 = vperm.xlu0 %5968, %v5839
        %v5970 = vpop.permute.xlu0 %5969
        %5973 = vset.pattern.permute.xlu0 0
        %5974 = vperm.xlu0 %5973, %v5840
        %v5975 = vpop.permute.xlu0 %5974
        %5978 = vset.pattern.permute.xlu0 0
        %5979 = vperm.xlu0 %5978, %v5841
        %v5980 = vpop.permute.xlu0 %5979
        %5983 = vset.pattern.permute.xlu0 0
        %5984 = vperm.xlu0 %5983, %v5842
        %v5985 = vpop.permute.xlu0 %5984
        %5988 = vset.pattern.permute.xlu0 0
        %5989 = vperm.xlu0 %5988, %v5843
        %v5990 = vpop.permute.xlu0 %5989
        %5993 = vset.pattern.permute.xlu0 0
        %5994 = vperm.xlu0 %5993, %v5844
        %v5995 = vpop.permute.xlu0 %5994
        %5998 = vset.pattern.permute.xlu0 0
        %5999 = vperm.xlu0 %5998, %v5845
        %v6000 = vpop.permute.xlu0 %5999
        %6003 = vset.pattern.permute.xlu0 0
        %6004 = vperm.xlu0 %6003, %v5846
        %v6005 = vpop.permute.xlu0 %6004
        %6008 = vset.pattern.permute.xlu0 0
        %6009 = vperm.xlu0 %6008, %v5847
        %v6010 = vpop.permute.xlu0 %6009
        %6013 = vset.pattern.permute.xlu0 0
        %6014 = vperm.xlu0 %6013, %v5848
        %v6015 = vpop.permute.xlu0 %6014
        %6018 = vset.pattern.permute.xlu0 0
        %6019 = vperm.xlu0 %6018, %v5849
        %v6020 = vpop.permute.xlu0 %6019
        %6023 = vset.pattern.permute.xlu0 0
        %6024 = vperm.xlu0 %6023, %v5850
        %v6025 = vpop.permute.xlu0 %6024
        %6028 = vset.pattern.permute.xlu0 0
        %6029 = vperm.xlu0 %6028, %v5851
        %v6030 = vpop.permute.xlu0 %6029
        %6033 = vset.pattern.permute.xlu0 0
        %6034 = vperm.xlu0 %6033, %v5852
        %v6035 = vpop.permute.xlu0 %6034
        %6038 = vset.pattern.permute.xlu0 0
        %6039 = vperm.xlu0 %6038, %v5853
        %v6040 = vpop.permute.xlu0 %6039
        %6043 = vset.pattern.permute.xlu0 0
        %6044 = vperm.xlu0 %6043, %v5854
        %v6045 = vpop.permute.xlu0 %6044
        %6048 = vset.pattern.permute.xlu0 0
        %6049 = vperm.xlu0 %6048, %v5855
        %v6050 = vpop.permute.xlu0 %6049
        %6053 = vset.pattern.permute.xlu0 0
        %6054 = vperm.xlu0 %6053, %v5856
        %v6055 = vpop.permute.xlu0 %6054
        %6058 = vset.pattern.permute.xlu0 0
        %6059 = vperm.xlu0 %6058, %v5857
        %v6060 = vpop.permute.xlu0 %6059
        %6063 = vset.pattern.permute.xlu0 0
        %6064 = vperm.xlu0 %6063, %v5858
        %v6065 = vpop.permute.xlu0 %6064
        %6068 = vset.pattern.permute.xlu0 0
        %6069 = vperm.xlu0 %6068, %v5859
        %v6070 = vpop.permute.xlu0 %6069
        %6073 = vset.pattern.permute.xlu0 0
        %6074 = vperm.xlu0 %6073, %v5860
        %v6075 = vpop.permute.xlu0 %6074
        %6078 = vset.pattern.permute.xlu0 0
        %6079 = vperm.xlu0 %6078, %v5861
        %v6080 = vpop.permute.xlu0 %6079
        %6083 = vset.pattern.permute.xlu0 0
        %6084 = vperm.xlu0 %6083, %v5862
        %v6085 = vpop.permute.xlu0 %6084
        %6088 = vset.pattern.permute.xlu0 0
        %6089 = vperm.xlu0 %6088, %v5863
        %v6090 = vpop.permute.xlu0 %6089
        %6093 = vset.pattern.permute.xlu0 0
        %6094 = vperm.xlu0 %6093, %v5864
        %v6095 = vpop.permute.xlu0 %6094
        %6098 = vset.pattern.permute.xlu0 0
        %6099 = vperm.xlu0 %6098, %v5865
        %v6100 = vpop.permute.xlu0 %6099
        %6103 = vset.pattern.permute.xlu0 0
        %6104 = vperm.xlu0 %6103, %v5866
        %v6105 = vpop.permute.xlu0 %6104
        %6108 = vset.pattern.permute.xlu0 0
        %6109 = vperm.xlu0 %6108, %v5867
        %v6110 = vpop.permute.xlu0 %6109
        %6113 = vset.pattern.permute.xlu0 0
        %6114 = vperm.xlu0 %6113, %v5868
        %v6115 = vpop.permute.xlu0 %6114
        %6118 = vset.pattern.permute.xlu0 0
        %6119 = vperm.xlu0 %6118, %v5869
        %v6120 = vpop.permute.xlu0 %6119
        %6123 = vset.pattern.permute.xlu0 0
        %6124 = vperm.xlu0 %6123, %v5870
        %v6125 = vpop.permute.xlu0 %6124
        %6128 = vset.pattern.permute.xlu0 0
        %6129 = vperm.xlu0 %6128, %v5871
        %v6130 = vpop.permute.xlu0 %6129
        %6133 = vset.pattern.permute.xlu0 0
        %6134 = vperm.xlu0 %6133, %v5872
        %v6135 = vpop.permute.xlu0 %6134
        %6138 = vset.pattern.permute.xlu0 0
        %6139 = vperm.xlu0 %6138, %v5873
        %v6140 = vpop.permute.xlu0 %6139
        %6143 = vset.pattern.permute.xlu0 0
        %6144 = vperm.xlu0 %6143, %v5874
        %v6145 = vpop.permute.xlu0 %6144
        %6148 = vset.pattern.permute.xlu0 0
        %6149 = vperm.xlu0 %6148, %v5875
        %v6150 = vpop.permute.xlu0 %6149
        %6153 = vset.pattern.permute.xlu0 0
        %6154 = vperm.xlu0 %6153, %v5876
        %v6155 = vpop.permute.xlu0 %6154
        %6158 = vset.pattern.permute.xlu0 0
        %6159 = vperm.xlu0 %6158, %v5877
        %v6160 = vpop.permute.xlu0 %6159
        %6163 = vset.pattern.permute.xlu0 0
        %6164 = vperm.xlu0 %6163, %v5878
        %v6165 = vpop.permute.xlu0 %6164
        %6168 = vset.pattern.permute.xlu0 0
        %6169 = vperm.xlu0 %6168, %v5879
        %v6170 = vpop.permute.xlu0 %6169
        %6173 = vset.pattern.permute.xlu0 0
        %6174 = vperm.xlu0 %6173, %v5880
        %v6175 = vpop.permute.xlu0 %6174
        %6178 = vset.pattern.permute.xlu0 0
        %6179 = vperm.xlu0 %6178, %v5881
        %v6180 = vpop.permute.xlu0 %6179
        %6183 = vset.pattern.permute.xlu0 0
        %6184 = vperm.xlu0 %6183, %v5882
        %v6185 = vpop.permute.xlu0 %6184
        %6188 = vset.pattern.permute.xlu0 0
        %6189 = vperm.xlu0 %6188, %v5883
        %v6190 = vpop.permute.xlu0 %6189
        %6193 = vset.pattern.permute.xlu0 0
        %6194 = vperm.xlu0 %6193, %v5884
        %v6195 = vpop.permute.xlu0 %6194
        %6198 = vset.pattern.permute.xlu0 0
        %6199 = vperm.xlu0 %6198, %v5885
        %v6200 = vpop.permute.xlu0 %6199
        %6203 = vset.pattern.permute.xlu0 0
        %6204 = vperm.xlu0 %6203, %v5886
        %v6205 = vpop.permute.xlu0 %6204
        %v6207 = vmul.f32 %v5759, %v5890
        %v6208 = vmul.f32 %v5760, %v5895
        %v6209 = vmul.f32 %v5761, %v5900
        %v6210 = vmul.f32 %v5762, %v5905
        %v6211 = vmul.f32 %v5763, %v5910
        %v6212 = vmul.f32 %v5764, %v5915
        %v6213 = vmul.f32 %v5765, %v5920
        %v6214 = vmul.f32 %v5766, %v5925
        %v6215 = vmul.f32 %v5767, %v5930
        %v6216 = vmul.f32 %v5768, %v5935
        %v6217 = vmul.f32 %v5769, %v5940
        %v6218 = vmul.f32 %v5770, %v5945
        %v6219 = vmul.f32 %v5771, %v5950
        %v6220 = vmul.f32 %v5772, %v5955
        %v6221 = vmul.f32 %v5773, %v5960
        %v6222 = vmul.f32 %v5774, %v5965
        %v6223 = vmul.f32 %v5775, %v5970
        %v6224 = vmul.f32 %v5776, %v5975
        %v6225 = vmul.f32 %v5777, %v5980
        %v6226 = vmul.f32 %v5778, %v5985
        %v6227 = vmul.f32 %v5779, %v5990
        %v6228 = vmul.f32 %v5780, %v5995
        %v6229 = vmul.f32 %v5781, %v6000
        %v6230 = vmul.f32 %v5782, %v6005
        %v6231 = vmul.f32 %v5783, %v6010
        %v6232 = vmul.f32 %v5784, %v6015
        %v6233 = vmul.f32 %v5785, %v6020
        %v6234 = vmul.f32 %v5786, %v6025
        %v6235 = vmul.f32 %v5787, %v6030
        %v6236 = vmul.f32 %v5788, %v6035
        %v6237 = vmul.f32 %v5789, %v6040
        %v6238 = vmul.f32 %v5790, %v6045
        %v6239 = vmul.f32 %v5791, %v6050
        %v6240 = vmul.f32 %v5792, %v6055
        %v6241 = vmul.f32 %v5793, %v6060
        %v6242 = vmul.f32 %v5794, %v6065
        %v6243 = vmul.f32 %v5795, %v6070
        %v6244 = vmul.f32 %v5796, %v6075
        %v6245 = vmul.f32 %v5797, %v6080
        %v6246 = vmul.f32 %v5798, %v6085
        %v6247 = vmul.f32 %v5799, %v6090
        %v6248 = vmul.f32 %v5800, %v6095
        %v6249 = vmul.f32 %v5801, %v6100
        %v6250 = vmul.f32 %v5802, %v6105
        %v6251 = vmul.f32 %v5803, %v6110
        %v6252 = vmul.f32 %v5804, %v6115
        %v6253 = vmul.f32 %v5805, %v6120
        %v6254 = vmul.f32 %v5806, %v6125
        %v6255 = vmul.f32 %v5807, %v6130
        %v6256 = vmul.f32 %v5808, %v6135
        %v6257 = vmul.f32 %v5809, %v6140
        %v6258 = vmul.f32 %v5810, %v6145
        %v6259 = vmul.f32 %v5811, %v6150
        %v6260 = vmul.f32 %v5812, %v6155
        %v6261 = vmul.f32 %v5813, %v6160
        %v6262 = vmul.f32 %v5814, %v6165
        %v6263 = vmul.f32 %v5815, %v6170
        %v6264 = vmul.f32 %v5816, %v6175
        %v6265 = vmul.f32 %v5817, %v6180
        %v6266 = vmul.f32 %v5818, %v6185
        %v6267 = vmul.f32 %v5819, %v6190
        %v6268 = vmul.f32 %v5820, %v6195
        %v6269 = vmul.f32 %v5821, %v6200
        %v6270 = vmul.f32 %v5822, %v6205
        %vm6271 = vcmask 523264
        %v6272 = vsel %vm6271, %v6207, 0.0
        %v6273 = vsel %vm6271, %v6208, 0.0
        %v6274 = vadd.f32 %v6272, %v6273
        %v6275 = vsel %vm6271, %v6209, 0.0
        %v6276 = vadd.f32 %v6274, %v6275
        %v6277 = vsel %vm6271, %v6210, 0.0
        %v6278 = vadd.f32 %v6276, %v6277
        %v6279 = vsel %vm6271, %v6211, 0.0
        %v6280 = vadd.f32 %v6278, %v6279
        %v6281 = vsel %vm6271, %v6212, 0.0
        %v6282 = vadd.f32 %v6280, %v6281
        %v6283 = vsel %vm6271, %v6213, 0.0
        %v6284 = vadd.f32 %v6282, %v6283
        %v6285 = vsel %vm6271, %v6214, 0.0
        %v6286 = vadd.f32 %v6284, %v6285
        %v6287 = vsel %vm6271, %v6215, 0.0
        %v6288 = vadd.f32 %v6286, %v6287
        %v6289 = vsel %vm6271, %v6216, 0.0
        %v6290 = vadd.f32 %v6288, %v6289
        %v6291 = vsel %vm6271, %v6217, 0.0
        %v6292 = vadd.f32 %v6290, %v6291
        %v6293 = vsel %vm6271, %v6218, 0.0
        %v6294 = vadd.f32 %v6292, %v6293
        %v6295 = vsel %vm6271, %v6219, 0.0
        %v6296 = vadd.f32 %v6294, %v6295
        %v6297 = vsel %vm6271, %v6220, 0.0
        %v6298 = vadd.f32 %v6296, %v6297
        %v6299 = vsel %vm6271, %v6221, 0.0
        %v6300 = vadd.f32 %v6298, %v6299
        %v6301 = vsel %vm6271, %v6222, 0.0
        %v6302 = vadd.f32 %v6300, %v6301
        %v6303 = vsel %vm6271, %v6223, 0.0
        %v6304 = vadd.f32 %v6302, %v6303
        %v6305 = vsel %vm6271, %v6224, 0.0
        %v6306 = vadd.f32 %v6304, %v6305
        %v6307 = vsel %vm6271, %v6225, 0.0
        %v6308 = vadd.f32 %v6306, %v6307
        %v6309 = vsel %vm6271, %v6226, 0.0
        %v6310 = vadd.f32 %v6308, %v6309
        %v6311 = vsel %vm6271, %v6227, 0.0
        %v6312 = vadd.f32 %v6310, %v6311
        %v6313 = vsel %vm6271, %v6228, 0.0
        %v6314 = vadd.f32 %v6312, %v6313
        %v6315 = vsel %vm6271, %v6229, 0.0
        %v6316 = vadd.f32 %v6314, %v6315
        %v6317 = vsel %vm6271, %v6230, 0.0
        %v6318 = vadd.f32 %v6316, %v6317
        %v6319 = vsel %vm6271, %v6231, 0.0
        %v6320 = vadd.f32 %v6318, %v6319
        %v6321 = vsel %vm6271, %v6232, 0.0
        %v6322 = vadd.f32 %v6320, %v6321
        %v6323 = vsel %vm6271, %v6233, 0.0
        %v6324 = vadd.f32 %v6322, %v6323
        %v6325 = vsel %vm6271, %v6234, 0.0
        %v6326 = vadd.f32 %v6324, %v6325
        %v6327 = vsel %vm6271, %v6235, 0.0
        %v6328 = vadd.f32 %v6326, %v6327
        %v6329 = vsel %vm6271, %v6236, 0.0
        %v6330 = vadd.f32 %v6328, %v6329
        %v6331 = vsel %vm6271, %v6237, 0.0
        %v6332 = vadd.f32 %v6330, %v6331
        %v6333 = vsel %vm6271, %v6238, 0.0
        %v6334 = vadd.f32 %v6332, %v6333
        %v6335 = vsel %vm6271, %v6239, 0.0
        %v6336 = vadd.f32 %v6334, %v6335
        %v6337 = vsel %vm6271, %v6240, 0.0
        %v6338 = vadd.f32 %v6336, %v6337
        %v6339 = vsel %vm6271, %v6241, 0.0
        %v6340 = vadd.f32 %v6338, %v6339
        %v6341 = vsel %vm6271, %v6242, 0.0
        %v6342 = vadd.f32 %v6340, %v6341
        %v6343 = vsel %vm6271, %v6243, 0.0
        %v6344 = vadd.f32 %v6342, %v6343
        %v6345 = vsel %vm6271, %v6244, 0.0
        %v6346 = vadd.f32 %v6344, %v6345
        %v6347 = vsel %vm6271, %v6245, 0.0
        %v6348 = vadd.f32 %v6346, %v6347
        %v6349 = vsel %vm6271, %v6246, 0.0
        %v6350 = vadd.f32 %v6348, %v6349
        %v6351 = vsel %vm6271, %v6247, 0.0
        %v6352 = vadd.f32 %v6350, %v6351
        %v6353 = vsel %vm6271, %v6248, 0.0
        %v6354 = vadd.f32 %v6352, %v6353
        %v6355 = vsel %vm6271, %v6249, 0.0
        %v6356 = vadd.f32 %v6354, %v6355
        %v6357 = vsel %vm6271, %v6250, 0.0
        %v6358 = vadd.f32 %v6356, %v6357
        %v6359 = vsel %vm6271, %v6251, 0.0
        %v6360 = vadd.f32 %v6358, %v6359
        %v6361 = vsel %vm6271, %v6252, 0.0
        %v6362 = vadd.f32 %v6360, %v6361
        %v6363 = vsel %vm6271, %v6253, 0.0
        %v6364 = vadd.f32 %v6362, %v6363
        %v6365 = vsel %vm6271, %v6254, 0.0
        %v6366 = vadd.f32 %v6364, %v6365
        %v6367 = vsel %vm6271, %v6255, 0.0
        %v6368 = vadd.f32 %v6366, %v6367
        %v6369 = vsel %vm6271, %v6256, 0.0
        %v6370 = vadd.f32 %v6368, %v6369
        %v6371 = vsel %vm6271, %v6257, 0.0
        %v6372 = vadd.f32 %v6370, %v6371
        %v6373 = vsel %vm6271, %v6258, 0.0
        %v6374 = vadd.f32 %v6372, %v6373
        %v6375 = vsel %vm6271, %v6259, 0.0
        %v6376 = vadd.f32 %v6374, %v6375
        %v6377 = vsel %vm6271, %v6260, 0.0
        %v6378 = vadd.f32 %v6376, %v6377
        %v6379 = vsel %vm6271, %v6261, 0.0
        %v6380 = vadd.f32 %v6378, %v6379
        %v6381 = vsel %vm6271, %v6262, 0.0
        %v6382 = vadd.f32 %v6380, %v6381
        %v6383 = vsel %vm6271, %v6263, 0.0
        %v6384 = vadd.f32 %v6382, %v6383
        %v6385 = vsel %vm6271, %v6264, 0.0
        %v6386 = vadd.f32 %v6384, %v6385
        %v6387 = vsel %vm6271, %v6265, 0.0
        %v6388 = vadd.f32 %v6386, %v6387
        %v6389 = vsel %vm6271, %v6266, 0.0
        %v6390 = vadd.f32 %v6388, %v6389
        %v6391 = vsel %vm6271, %v6267, 0.0
        %v6392 = vadd.f32 %v6390, %v6391
        %v6393 = vsel %vm6271, %v6268, 0.0
        %v6394 = vadd.f32 %v6392, %v6393
        %v6395 = vsel %vm6271, %v6269, 0.0
        %v6396 = vadd.f32 %v6394, %v6395
        %v6397 = vsel %vm6271, %v6270, 0.0
        %v6398 = vadd.f32 %v6396, %v6397
        %v6399 = vrot.slane %v6398, 4
        %v6400 = vadd.f32 %v6398, %v6399
        %v6401 = vrot.slane %v6400, 2
        %v6402 = vadd.f32 %v6400, %v6401
        %v6403 = vrot.slane %v6402, 1
        %v6404 = vadd.f32 %v6402, %v6403
        %vm6405 = vcmask 516096
        %6406 = vst.msk [vmem:[%s290] sm:$0x1] %vm6405, %v6404
        %v6407 = vmul.f32 %v6207, %v6207
        %v6408 = vmul.f32 %v6208, %v6208
        %v6409 = vmul.f32 %v6209, %v6209
        %v6410 = vmul.f32 %v6210, %v6210
        %v6411 = vmul.f32 %v6211, %v6211
        %v6412 = vmul.f32 %v6212, %v6212
        %v6413 = vmul.f32 %v6213, %v6213
        %v6414 = vmul.f32 %v6214, %v6214
        %v6415 = vmul.f32 %v6215, %v6215
        %v6416 = vmul.f32 %v6216, %v6216
        %v6417 = vmul.f32 %v6217, %v6217
        %v6418 = vmul.f32 %v6218, %v6218
        %v6419 = vmul.f32 %v6219, %v6219
        %v6420 = vmul.f32 %v6220, %v6220
        %v6421 = vmul.f32 %v6221, %v6221
        %v6422 = vmul.f32 %v6222, %v6222
        %v6423 = vmul.f32 %v6223, %v6223
        %v6424 = vmul.f32 %v6224, %v6224
        %v6425 = vmul.f32 %v6225, %v6225
        %v6426 = vmul.f32 %v6226, %v6226
        %v6427 = vmul.f32 %v6227, %v6227
        %v6428 = vmul.f32 %v6228, %v6228
        %v6429 = vmul.f32 %v6229, %v6229
        %v6430 = vmul.f32 %v6230, %v6230
        %v6431 = vmul.f32 %v6231, %v6231
        %v6432 = vmul.f32 %v6232, %v6232
        %v6433 = vmul.f32 %v6233, %v6233
        %v6434 = vmul.f32 %v6234, %v6234
        %v6435 = vmul.f32 %v6235, %v6235
        %v6436 = vmul.f32 %v6236, %v6236
        %v6437 = vmul.f32 %v6237, %v6237
        %v6438 = vmul.f32 %v6238, %v6238
        %v6439 = vmul.f32 %v6239, %v6239
        %v6440 = vmul.f32 %v6240, %v6240
        %v6441 = vmul.f32 %v6241, %v6241
        %v6442 = vmul.f32 %v6242, %v6242
        %v6443 = vmul.f32 %v6243, %v6243
        %v6444 = vmul.f32 %v6244, %v6244
        %v6445 = vmul.f32 %v6245, %v6245
        %v6446 = vmul.f32 %v6246, %v6246
        %v6447 = vmul.f32 %v6247, %v6247
        %v6448 = vmul.f32 %v6248, %v6248
        %v6449 = vmul.f32 %v6249, %v6249
        %v6450 = vmul.f32 %v6250, %v6250
        %v6451 = vmul.f32 %v6251, %v6251
        %v6452 = vmul.f32 %v6252, %v6252
        %v6453 = vmul.f32 %v6253, %v6253
        %v6454 = vmul.f32 %v6254, %v6254
        %v6455 = vmul.f32 %v6255, %v6255
        %v6456 = vmul.f32 %v6256, %v6256
        %v6457 = vmul.f32 %v6257, %v6257
        %v6458 = vmul.f32 %v6258, %v6258
        %v6459 = vmul.f32 %v6259, %v6259
        %v6460 = vmul.f32 %v6260, %v6260
        %v6461 = vmul.f32 %v6261, %v6261
        %v6462 = vmul.f32 %v6262, %v6262
        %v6463 = vmul.f32 %v6263, %v6263
        %v6464 = vmul.f32 %v6264, %v6264
        %v6465 = vmul.f32 %v6265, %v6265
        %v6466 = vmul.f32 %v6266, %v6266
        %v6467 = vmul.f32 %v6267, %v6267
        %v6468 = vmul.f32 %v6268, %v6268
        %v6469 = vmul.f32 %v6269, %v6269
        %v6470 = vmul.f32 %v6270, %v6270
        %v6471 = vsel %vm6271, %v6407, 0.0
        %v6472 = vsel %vm6271, %v6408, 0.0
        %v6473 = vadd.f32 %v6471, %v6472
        %v6474 = vsel %vm6271, %v6409, 0.0
        %v6475 = vadd.f32 %v6473, %v6474
        %v6476 = vsel %vm6271, %v6410, 0.0
        %v6477 = vadd.f32 %v6475, %v6476
        %v6478 = vsel %vm6271, %v6411, 0.0
        %v6479 = vadd.f32 %v6477, %v6478
        %v6480 = vsel %vm6271, %v6412, 0.0
        %v6481 = vadd.f32 %v6479, %v6480
        %v6482 = vsel %vm6271, %v6413, 0.0
        %v6483 = vadd.f32 %v6481, %v6482
        %v6484 = vsel %vm6271, %v6414, 0.0
        %v6485 = vadd.f32 %v6483, %v6484
        %v6486 = vsel %vm6271, %v6415, 0.0
        %v6487 = vadd.f32 %v6485, %v6486
        %v6488 = vsel %vm6271, %v6416, 0.0
        %v6489 = vadd.f32 %v6487, %v6488
        %v6490 = vsel %vm6271, %v6417, 0.0
        %v6491 = vadd.f32 %v6489, %v6490
        %v6492 = vsel %vm6271, %v6418, 0.0
        %v6493 = vadd.f32 %v6491, %v6492
        %v6494 = vsel %vm6271, %v6419, 0.0
        %v6495 = vadd.f32 %v6493, %v6494
        %v6496 = vsel %vm6271, %v6420, 0.0
        %v6497 = vadd.f32 %v6495, %v6496
        %v6498 = vsel %vm6271, %v6421, 0.0
        %v6499 = vadd.f32 %v6497, %v6498
        %v6500 = vsel %vm6271, %v6422, 0.0
        %v6501 = vadd.f32 %v6499, %v6500
        %v6502 = vsel %vm6271, %v6423, 0.0
        %v6503 = vadd.f32 %v6501, %v6502
        %v6504 = vsel %vm6271, %v6424, 0.0
        %v6505 = vadd.f32 %v6503, %v6504
        %v6506 = vsel %vm6271, %v6425, 0.0
        %v6507 = vadd.f32 %v6505, %v6506
        %v6508 = vsel %vm6271, %v6426, 0.0
        %v6509 = vadd.f32 %v6507, %v6508
        %v6510 = vsel %vm6271, %v6427, 0.0
        %v6511 = vadd.f32 %v6509, %v6510
        %v6512 = vsel %vm6271, %v6428, 0.0
        %v6513 = vadd.f32 %v6511, %v6512
        %v6514 = vsel %vm6271, %v6429, 0.0
        %v6515 = vadd.f32 %v6513, %v6514
        %v6516 = vsel %vm6271, %v6430, 0.0
        %v6517 = vadd.f32 %v6515, %v6516
        %v6518 = vsel %vm6271, %v6431, 0.0
        %v6519 = vadd.f32 %v6517, %v6518
        %v6520 = vsel %vm6271, %v6432, 0.0
        %v6521 = vadd.f32 %v6519, %v6520
        %v6522 = vsel %vm6271, %v6433, 0.0
        %v6523 = vadd.f32 %v6521, %v6522
        %v6524 = vsel %vm6271, %v6434, 0.0
        %v6525 = vadd.f32 %v6523, %v6524
        %v6526 = vsel %vm6271, %v6435, 0.0
        %v6527 = vadd.f32 %v6525, %v6526
        %v6528 = vsel %vm6271, %v6436, 0.0
        %v6529 = vadd.f32 %v6527, %v6528
        %v6530 = vsel %vm6271, %v6437, 0.0
        %v6531 = vadd.f32 %v6529, %v6530
        %v6532 = vsel %vm6271, %v6438, 0.0
        %v6533 = vadd.f32 %v6531, %v6532
        %v6534 = vsel %vm6271, %v6439, 0.0
        %v6535 = vadd.f32 %v6533, %v6534
        %v6536 = vsel %vm6271, %v6440, 0.0
        %v6537 = vadd.f32 %v6535, %v6536
        %v6538 = vsel %vm6271, %v6441, 0.0
        %v6539 = vadd.f32 %v6537, %v6538
        %v6540 = vsel %vm6271, %v6442, 0.0
        %v6541 = vadd.f32 %v6539, %v6540
        %v6542 = vsel %vm6271, %v6443, 0.0
        %v6543 = vadd.f32 %v6541, %v6542
        %v6544 = vsel %vm6271, %v6444, 0.0
        %v6545 = vadd.f32 %v6543, %v6544
        %v6546 = vsel %vm6271, %v6445, 0.0
        %v6547 = vadd.f32 %v6545, %v6546
        %v6548 = vsel %vm6271, %v6446, 0.0
        %v6549 = vadd.f32 %v6547, %v6548
        %v6550 = vsel %vm6271, %v6447, 0.0
        %v6551 = vadd.f32 %v6549, %v6550
        %v6552 = vsel %vm6271, %v6448, 0.0
        %v6553 = vadd.f32 %v6551, %v6552
        %v6554 = vsel %vm6271, %v6449, 0.0
        %v6555 = vadd.f32 %v6553, %v6554
        %v6556 = vsel %vm6271, %v6450, 0.0
        %v6557 = vadd.f32 %v6555, %v6556
        %v6558 = vsel %vm6271, %v6451, 0.0
        %v6559 = vadd.f32 %v6557, %v6558
        %v6560 = vsel %vm6271, %v6452, 0.0
        %v6561 = vadd.f32 %v6559, %v6560
        %v6562 = vsel %vm6271, %v6453, 0.0
        %v6563 = vadd.f32 %v6561, %v6562
        %v6564 = vsel %vm6271, %v6454, 0.0
        %v6565 = vadd.f32 %v6563, %v6564
        %v6566 = vsel %vm6271, %v6455, 0.0
        %v6567 = vadd.f32 %v6565, %v6566
        %v6568 = vsel %vm6271, %v6456, 0.0
        %v6569 = vadd.f32 %v6567, %v6568
        %v6570 = vsel %vm6271, %v6457, 0.0
        %v6571 = vadd.f32 %v6569, %v6570
        %v6572 = vsel %vm6271, %v6458, 0.0
        %v6573 = vadd.f32 %v6571, %v6572
        %v6574 = vsel %vm6271, %v6459, 0.0
        %v6575 = vadd.f32 %v6573, %v6574
        %v6576 = vsel %vm6271, %v6460, 0.0
        %v6577 = vadd.f32 %v6575, %v6576
        %v6578 = vsel %vm6271, %v6461, 0.0
        %v6579 = vadd.f32 %v6577, %v6578
        %v6580 = vsel %vm6271, %v6462, 0.0
        %v6581 = vadd.f32 %v6579, %v6580
        %v6582 = vsel %vm6271, %v6463, 0.0
        %v6583 = vadd.f32 %v6581, %v6582
        %v6584 = vsel %vm6271, %v6464, 0.0
        %v6585 = vadd.f32 %v6583, %v6584
        %v6586 = vsel %vm6271, %v6465, 0.0
        %v6587 = vadd.f32 %v6585, %v6586
        %v6588 = vsel %vm6271, %v6466, 0.0
        %v6589 = vadd.f32 %v6587, %v6588
        %v6590 = vsel %vm6271, %v6467, 0.0
        %v6591 = vadd.f32 %v6589, %v6590
        %v6592 = vsel %vm6271, %v6468, 0.0
        %v6593 = vadd.f32 %v6591, %v6592
        %v6594 = vsel %vm6271, %v6469, 0.0
        %v6595 = vadd.f32 %v6593, %v6594
        %v6596 = vsel %vm6271, %v6470, 0.0
        %v6597 = vadd.f32 %v6595, %v6596
        %v6598 = vrot.slane %v6597, 4
        %v6599 = vadd.f32 %v6597, %v6598
        %v6600 = vrot.slane %v6599, 2
        %v6601 = vadd.f32 %v6599, %v6600
        %v6602 = vrot.slane %v6601, 1
        %v6603 = vadd.f32 %v6601, %v6602
        %6604 = vst.msk [vmem:[%s290 + $0x1] sm:$0x1] %vm6405, %v6603
        %s6605 = smul.u32 64, %s21
        %p6606 = scmp.lt.s32.totalorder %s6605, 127
        %s6607 = scalar_select %p6606, %s6605, 127
        %s6608 = smul.addr %s6607, 4
        %s6609 = scalar_lea.vmem %s5, %s6608
        %s6610 = sand.u32 %s177, 1
        %s6611 = scalar_lea.sflag [#allocation3], %s6610
        %s6612 = sand.u32 %s177, 1
        %s6613 = smul.addr %s6612, 2
        %s6614 = scalar_lea.vmem [#allocation2], %s6613
        // Predicated region
        $region41: #{tpu_custom_call.1} parent=39 // pred_check
          %p6615 = pneg %p161
        $region42: #{tpu_custom_call.1} parent=39 // pred_check_branch
          %6617 = sbr.rel (%p6615) target = $region44
        $region43: #{tpu_custom_call.1} parent=39 // pred_region
          %s6618 = smul.u32 64, %s21
        $region44: #{tpu_custom_call.1} parent=39 // pred_fallthru
          _
        // Predicated region
        $region45: #{tpu_custom_call.1} parent=39 // pred_check
          %p6619 = pneg %p187
        $region46: #{tpu_custom_call.1} parent=39 // pred_check_branch
          %6621 = sbr.rel (%p6619) target = $region48
        $region47: #{tpu_custom_call.1} parent=39 // pred_region
          %s6623 = ssub.s32 32, 32
          %6624 = vsyncadd %s6611, %s6623
          %s6625 = smul.addr %s21, 32
          %s6626 = scalar_lea.hbm %s6, %s6625
          %s6628 = sshll.u32 %s6614, 4
          %s6629 = int_to_ptr.vmem [resolvable:$true] %s6628
          %6631 = dma.vmem_to_hbm [thread:$0]  %s6629, 32, %s6626, %s6611
        $region48: #{tpu_custom_call.1} parent=39 // pred_fallthru
          _
      $region40: #{tpu_custom_call.1} parent=5 // pred_fallthru
        _
      %p6632 = scmp.le.s32.totalorder 2, %s16
      // Predicated region
      $region49: #{tpu_custom_call.1} parent=5 // pred_check
        %p6633 = pneg %p6632
      $region50: #{tpu_custom_call.1} parent=5 // pred_check_branch
        %6635 = sbr.rel (%p6633) target = $region52
      $region51: #{tpu_custom_call.1} parent=5 // pred_region
        %s6636 = ssub.s32 %s16, 2
        // Predicated region
        $region53: #{tpu_custom_call.1} parent=51 // pred_check
          %p6637 = pneg %p167
        $region54: #{tpu_custom_call.1} parent=51 // pred_check_branch
          %6639 = sbr.rel (%p6637) target = $region56
        $region55: #{tpu_custom_call.1} parent=51 // pred_region
          %s6640 = smul.u32 64, %s22
          %p6641 = scmp.lt.s32.totalorder %s6640, 127
          %s6642 = scalar_select %p6641, %s6640, 127
          %s6643 = smul.addr %s6642, 4
          %s6644 = scalar_lea.vmem %s5, %s6643
        $region56: #{tpu_custom_call.1} parent=51 // pred_fallthru
          _
        // Predicated region
        $region57: #{tpu_custom_call.1} parent=51 // pred_check
          %p6645 = pneg %p193
        $region58: #{tpu_custom_call.1} parent=51 // pred_check_branch
          %6647 = sbr.rel (%p6645) target = $region60
        $region59: #{tpu_custom_call.1} parent=51 // pred_region
          %s6648 = sand.u32 %s178, 1
          %s6649 = scalar_lea.sflag [#allocation3], %s6648
          %s6650 = sand.u32 %s178, 1
          %s6651 = smul.addr %s6650, 2
          %s6652 = scalar_lea.vmem [#allocation2], %s6651
          %6653 = dma.done %s6649, 32
        $region60: #{tpu_custom_call.1} parent=51 // pred_fallthru
          _
      $region52: #{tpu_custom_call.1} parent=5 // pred_fallthru
        _
    $region6: #{tpu_custom_call.1} parent=1 // loop_footer
      %s20 = sadd.s32 1, %s16
    $region7: #{tpu_custom_call.1} parent=1 // loop_footer_branch
      %15 = sbr.rel target = $region3
    $region8: #{tpu_custom_call.1} parent=1 // loop_exit
      _
    %6654 = vsyncpa [#allocation3], 1
    %s6655 = scalar_lea.sflag [#allocation3], 1
    %6656 = vsyncpa %s6655, 1

</llo_original>
